<compile_context>
chip_gen: v7x
topology: tpu7x:2x2x1
jax: 0.10.0
libtpu: 0.0.40
codegen_flags: <defaults>
</compile_context>

<pallas_src>
import functools

import numpy as np
import jax
import jax.numpy as jnp
from jax.experimental import pallas as pl
from jax.experimental.pallas import tpu as pltpu


# ------------------------------ fused kernel -------------------------------

def _upblock_kernel(x_ref, temb_ref, g1_ref, be1_ref, gm1_ref, gm1t_ref, w1_ref,
                    g2_ref, be2_ref, gm2_ref, gm2t_ref, w2_ref, b2s_ref, ws_ref,
                    wp_ref, bp_ref, wo_ref, bo_ref,
                    o_ref, pad1_ref, pad2_ref,
                    *, B, H, W, Ct, Cout, cs1, cs2, eps, d_k, scale, has_attn):
    S = H * W
    M = B * S
    f32 = jnp.float32
    bf16 = jnp.bfloat16

    def gn_swish(h, gamma, beta, gm, gmt, cs):
        # GroupNorm (per sample, per group over cs channels x S pixels) + Swish.
        # Group reduce / broadcast are exact matmuls with one-hot channel<->group
        # matrices that were precomputed in the wrapper (hoisted out of kernel).
        cnt = float(S * cs)
        sum_c = jnp.sum(h, axis=1)            # [B, C]
        sumsq_c = jnp.sum(h * h, axis=1)      # [B, C]
        mean_g = jnp.dot(sum_c, gm, preferred_element_type=f32) / cnt    # [B, G]
        ex2_g = jnp.dot(sumsq_c, gm, preferred_element_type=f32) / cnt
        var_g = ex2_g - mean_g * mean_g
        rstd_g = jax.lax.rsqrt(var_g + eps)
        mean_c = jnp.dot(mean_g, gmt, preferred_element_type=f32)        # [B, C]
        rstd_c = jnp.dot(rstd_g, gmt, preferred_element_type=f32)        # [B, C]
        y = (h - mean_c[:, None, :]) * rstd_c[:, None, :] * gamma + beta
        return y * jax.nn.sigmoid(y)

    def conv3x3(h, pad_ref, w_ref, Cin):
        # 3x3 conv (padding=1) as one im2col bf16 matmul [M, 9*Cin] x [9*Cin, Co].
        pad_ref[...] = jnp.zeros_like(pad_ref)
        pad_ref[:, 1:H + 1, 1:W + 1, :] = h.reshape(B, H, W, Cin)
        patches = [
            pad_ref[:, di:di + H, dj:dj + W, :].reshape(M, Cin).astype(bf16)
            for di in range(3) for dj in range(3)
        ]
        col = jnp.concatenate(patches, axis=-1)                       # [M, 9*Cin]
        out = jnp.dot(col, w_ref[...], preferred_element_type=f32)    # [M, Co]
        return out.reshape(B, S, w_ref.shape[1])

    x = x_ref[...]                                                    # [B, S, Ct]

    # ---- ResidualBlock ----
    h = gn_swish(x, g1_ref[...], be1_ref[...], gm1_ref[...], gm1t_ref[...], cs1)
    h = conv3x3(h, pad1_ref, w1_ref, Ct) + temb_ref[...][:, None, :]  # +conv1_b+temb
    h = gn_swish(h, g2_ref[...], be2_ref[...], gm2_ref[...], gm2t_ref[...], cs2)
    h = conv3x3(h, pad2_ref, w2_ref, Cout)
    shortcut = jnp.dot(x.reshape(M, Ct).astype(bf16), ws_ref[...],
                       preferred_element_type=f32).reshape(B, S, Cout)
    res = h + shortcut + b2s_ref[...]                                 # [B, S, Cout]

    # ---- AttentionBlock (single head) ----
    if has_attn:
        r2 = res.reshape(M, Cout).astype(bf16)
        qkv = jnp.dot(r2, wp_ref[...], preferred_element_type=f32) + bp_ref[...]
        qkv = qkv.reshape(B, S, 3 * d_k)
        q = qkv[:, :, 0 * d_k:1 * d_k].astype(bf16)
        k = qkv[:, :, 1 * d_k:2 * d_k].astype(bf16)
        v = qkv[:, :, 2 * d_k:3 * d_k].astype(bf16)
        scores = jnp.einsum('bid,bjd->bij', q, k,
                            preferred_element_type=f32) * scale       # [B, S, S]
        # The reference PyTorch code softmaxes over dim=1 (the *query* axis).
        # Reproduced exactly.
        # TODO(synk): add a KV-tiled (flash-style) variant before reusing this
        # at large feature maps, where the S x S score matrix would blow VMEM.
        scores = scores - jnp.max(scores, axis=1, keepdims=True)
        p = jnp.exp(scores)
        p = p * pl.reciprocal(jnp.sum(p, axis=1, keepdims=True), approx=True)
        attn = jnp.einsum('bij,bjd->bid', p.astype(bf16), v,
                          preferred_element_type=f32)                 # [B, S, d_k]
        proj = jnp.dot(attn.reshape(M, d_k).astype(bf16), wo_ref[...],
                       preferred_element_type=f32) + bo_ref[...]
        res = proj.reshape(B, S, Cout) + res

    o_ref[...] = res


# ------------------------------- wrapper ------------------------------------

def _fs(shape):
    nd = len(shape)
    return pl.BlockSpec(tuple(shape), lambda i, _nd=nd: (0,) * _nd)


def _group_onehot(C, n_groups):
    cs = C // n_groups
    m = (np.arange(C)[:, None] // cs == np.arange(n_groups)[None, :]).astype(np.float32)
    return jnp.asarray(m), jnp.asarray(m.T), cs


def upblock_pallas(x_nchw, t, p, n_groups=32, has_attn=True):
    """x_nchw: [B, in_ch+out_ch, H, W] (NCHW, like PyTorch); t: [B, time_ch]."""
    B, Ct, H, W = x_nchw.shape
    Cout = p["conv1_w"].shape[0]
    d_k = Cout
    S = H * W

    # NCHW -> channels-last [B, S, C] so channels map onto the 128-lane axis.
    x = jnp.transpose(x_nchw, (0, 2, 3, 1)).astype(jnp.float32).reshape(B, S, Ct)

    # Hoisted prep (tiny GEMV + constant layout work, done once in XLA).
    temb = (t @ p["time_w"].T + p["time_b"] + p["conv1_b"]).astype(jnp.float32)
    gm1, gm1t, cs1 = _group_onehot(Ct, n_groups)
    gm2, gm2t, cs2 = _group_onehot(Cout, n_groups)
    w1 = jnp.transpose(p["conv1_w"], (2, 3, 1, 0)).reshape(9 * Ct, Cout).astype(jnp.bfloat16)
    w2 = jnp.transpose(p["conv2_w"], (2, 3, 1, 0)).reshape(9 * Cout, Cout).astype(jnp.bfloat16)
    ws = p["short_w"][:, :, 0, 0].T.astype(jnp.bfloat16)
    b2s = (p["conv2_b"] + p["short_b"]).reshape(1, Cout).astype(jnp.float32)
    wp = p["proj_w"].T.astype(jnp.bfloat16)
    wo = p["out_w"].T.astype(jnp.bfloat16)

    kern = functools.partial(
        _upblock_kernel, B=B, H=H, W=W, Ct=Ct, Cout=Cout, cs1=cs1, cs2=cs2,
        eps=1e-5, d_k=d_k, scale=float(d_k) ** -0.5, has_attn=has_attn)

    in_specs = [
        _fs((B, S, Ct)),                              # x (channels-last)
        _fs((B, Cout)),                               # temb + conv1_b
        _fs((1, Ct)), _fs((1, Ct)),                   # GN1 gamma / beta
        _fs((Ct, n_groups)), _fs((n_groups, Ct)),     # GN1 group matrices
        _fs((9 * Ct, Cout)),                          # conv1 weight (im2col, bf16)
        _fs((1, Cout)), _fs((1, Cout)),               # GN2 gamma / beta
        _fs((Cout, n_groups)), _fs((n_groups, Cout)), # GN2 group matrices
        _fs((9 * Cout, Cout)),                        # conv2 weight (im2col, bf16)
        _fs((1, Cout)),                               # conv2_b + short_b
        _fs((Ct, Cout)),                              # shortcut 1x1 weight (bf16)
        _fs((Cout, 3 * d_k)), _fs((1, 3 * d_k)),      # attn projection W / b
        _fs((d_k, Cout)), _fs((1, Cout)),             # attn output W / b
    ]

    out_flat = pl.pallas_call(
        kern,
        out_shape=jax.ShapeDtypeStruct((B, S, Cout), jnp.float32),
        grid=(1,),
        in_specs=in_specs,
        out_specs=_fs((B, S, Cout)),
        scratch_shapes=[
            pltpu.VMEM((B, H + 2, W + 2, Ct), jnp.float32),    # conv1 halo buffer
            pltpu.VMEM((B, H + 2, W + 2, Cout), jnp.float32),  # conv2 halo buffer
        ],
        compiler_params=pltpu.CompilerParams(dimension_semantics=("arbitrary",)),
    )(x, temb,
      p["norm1_g"].reshape(1, Ct).astype(jnp.float32),
      p["norm1_b"].reshape(1, Ct).astype(jnp.float32),
      gm1, gm1t, w1,
      p["norm2_g"].reshape(1, Cout).astype(jnp.float32),
      p["norm2_b"].reshape(1, Cout).astype(jnp.float32),
      gm2, gm2t, w2, b2s, ws,
      wp, p["proj_b"].reshape(1, 3 * d_k).astype(jnp.float32),
      wo, p["out_b"].reshape(1, Cout).astype(jnp.float32))

    out = out_flat.reshape(B, H, W, Cout)
    return jnp.transpose(out, (0, 3, 1, 2))                    # back to NCHW


# ------------------------------- parameters --------------------------------

def init_params(key, in_ch, out_ch, time_ch):
    cin_total = in_ch + out_ch
    keys = jax.random.split(key, 16)

    def nrm(k, shape, scale):
        return (scale * jax.random.normal(k, shape)).astype(jnp.float32)

    d_k = out_ch
    return {
        "norm1_g": 1.0 + nrm(keys[0], (cin_total,), 0.1),
        "norm1_b": nrm(keys[1], (cin_total,), 0.1),
        "conv1_w": nrm(keys[2], (out_ch, cin_total, 3, 3), 1.0 / np.sqrt(cin_total * 9)),
        "conv1_b": nrm(keys[3], (out_ch,), 0.1),
        "time_w": nrm(keys[4], (out_ch, time_ch), 1.0 / np.sqrt(time_ch)),
        "time_b": nrm(keys[5], (out_ch,), 0.1),
        "norm2_g": 1.0 + nrm(keys[6], (out_ch,), 0.1),
        "norm2_b": nrm(keys[7], (out_ch,), 0.1),
        "conv2_w": nrm(keys[8], (out_ch, out_ch, 3, 3), 1.0 / np.sqrt(out_ch * 9)),
        "conv2_b": nrm(keys[9], (out_ch,), 0.1),
        "short_w": nrm(keys[10], (out_ch, cin_total, 1, 1), 1.0 / np.sqrt(cin_total)),
        "short_b": nrm(keys[11], (out_ch,), 0.1),
        "proj_w": nrm(keys[12], (3 * d_k, out_ch), 1.0 / np.sqrt(out_ch)),
        "proj_b": nrm(keys[13], (3 * d_k,), 0.1),
        "out_w": nrm(keys[14], (out_ch, d_k), 1.0 / np.sqrt(d_k)),
        "out_b": nrm(keys[15], (out_ch,), 0.1),
    }


# ------------------------------- pure-JAX reference ------------------------

def _group_norm_ref(x, gamma, beta, n_groups, eps=1e-5):
    B, C, H, W = x.shape
    cs = C // n_groups
    xg = x.reshape(B, n_groups, cs, H, W)
    mean = xg.mean(axis=(2, 3, 4), keepdims=True)
    var = ((xg - mean) ** 2).mean(axis=(2, 3, 4), keepdims=True)
    xn = ((xg - mean) / jnp.sqrt(var + eps)).reshape(B, C, H, W)
    return xn * gamma[None, :, None, None] + beta[None, :, None, None]


def _swish(x):
    return x * jax.nn.sigmoid(x)


def _conv_ref(x, w, b, pad):
    y = jax.lax.conv_general_dilated(x, w, (1, 1), ((pad, pad), (pad, pad)),
                                     dimension_numbers=("NCHW", "OIHW", "NCHW"))
    return y + b[None, :, None, None]


def upblock_ref(x, t, p, n_groups=32, has_attn=True):
    h = _conv_ref(_swish(_group_norm_ref(x, p["norm1_g"], p["norm1_b"], n_groups)),
                  p["conv1_w"], p["conv1_b"], 1)
    h = h + (t @ p["time_w"].T + p["time_b"])[:, :, None, None]
    h = _conv_ref(_swish(_group_norm_ref(h, p["norm2_g"], p["norm2_b"], n_groups)),
                  p["conv2_w"], p["conv2_b"], 1)
    h = h + _conv_ref(x, p["short_w"], p["short_b"], 0)
    if not has_attn:
        return h
    B, C, H, W = h.shape
    scale = C ** -0.5
    xa = h.reshape(B, C, H * W).transpose(0, 2, 1)
    qkv = xa @ p["proj_w"].T + p["proj_b"]
    q, k, v = jnp.split(qkv, 3, axis=-1)
    attn = jnp.einsum("bid,bjd->bij", q, k) * scale
    attn = jax.nn.softmax(attn, axis=1)          # dim=1 (query axis), like PyTorch code
    res = jnp.einsum("bij,bjd->bid", attn, v)
    res = res @ p["out_w"].T + p["out_b"]
    res = res + xa
    return res.transpose(0, 2, 1).reshape(B, C, H, W)


# ----------------------------------- main -----------------------------------

if __name__ == "__main__":
    # UpBlock(in_channels=32, out_channels=32, time_channels=64, has_attn=True)
    # -> its input x is the skip-concatenated tensor with in+out = 64 channels.
    B, in_ch, out_ch, time_ch, H, W = 2, 32, 32, 64, 8, 8
    has_attn = True

    key = jax.random.PRNGKey(0)
    kx, kt, kp = jax.random.split(key, 3)
    x = jax.random.normal(kx, (B, in_ch + out_ch, H, W), jnp.float32)
    t = jax.random.normal(kt, (B, time_ch), jnp.float32)
    params = init_params(kp, in_ch, out_ch, time_ch)

    fwd = jax.jit(functools.partial(upblock_pallas, has_attn=has_attn))
    out = jax.block_until_ready(fwd(x, t, params))

    ref = upblock_ref(x, t, params, has_attn=has_attn)
    # bf16 MXU operands (f32 accumulation) => slightly looser tolerance than pure f32.
    np.testing.assert_allclose(np.asarray(out), np.asarray(ref), rtol=2e-2, atol=2e-2)
    assert out.shape == (B, out_ch, H, W) and out.dtype == jnp.float32
    print("KERNEL_OK")
</pallas_src>

<mosaic_0001>
module attributes {stable_mosaic.version = 11 : i64} {
  func.func @_upblock_kernel(%arg0: i32, %arg1: memref<2x64x64xf32, #tpu.memory_space<vmem>>, %arg2: memref<2x32xf32, #tpu.memory_space<vmem>>, %arg3: memref<1x64xf32, #tpu.memory_space<vmem>>, %arg4: memref<1x64xf32, #tpu.memory_space<vmem>>, %arg5: memref<64x32xf32, #tpu.memory_space<vmem>>, %arg6: memref<32x64xf32, #tpu.memory_space<vmem>>, %arg7: memref<576x32xbf16, #tpu.memory_space<vmem>>, %arg8: memref<1x32xf32, #tpu.memory_space<vmem>>, %arg9: memref<1x32xf32, #tpu.memory_space<vmem>>, %arg10: memref<32x32xf32, #tpu.memory_space<vmem>>, %arg11: memref<32x32xf32, #tpu.memory_space<vmem>>, %arg12: memref<288x32xbf16, #tpu.memory_space<vmem>>, %arg13: memref<1x32xf32, #tpu.memory_space<vmem>>, %arg14: memref<64x32xbf16, #tpu.memory_space<vmem>>, %arg15: memref<32x96xbf16, #tpu.memory_space<vmem>>, %arg16: memref<1x96xf32, #tpu.memory_space<vmem>>, %arg17: memref<32x32xbf16, #tpu.memory_space<vmem>>, %arg18: memref<1x32xf32, #tpu.memory_space<vmem>>, %arg19: memref<2x64x32xf32, #tpu.memory_space<vmem>>, %arg20: memref<2x10x10x64xf32, #tpu.memory_space<vmem>>, %arg21: memref<2x10x10x32xf32, #tpu.memory_space<vmem>>) attributes {dimension_semantics = [#tpu.dimension_semantics<arbitrary>], iteration_bounds = array<i64: 1>, scalar_prefetch = 0 : i64, scratch_operands = 2 : i64, tpu.core_type = #tpu.core_type<tc>, window_params = [{pipeline_mode = #tpu.pipeline_mode<synchronous>, transform_indices = @transform_0, window_bounds = array<i64: 2, 64, 64>}, {pipeline_mode = #tpu.pipeline_mode<synchronous>, transform_indices = @transform_1, window_bounds = array<i64: 2, 32>}, {pipeline_mode = #tpu.pipeline_mode<synchronous>, transform_indices = @transform_2, window_bounds = array<i64: 1, 64>}, {pipeline_mode = #tpu.pipeline_mode<synchronous>, transform_indices = @transform_3, window_bounds = array<i64: 1, 64>}, {pipeline_mode = #tpu.pipeline_mode<synchronous>, transform_indices = @transform_4, window_bounds = array<i64: 64, 32>}, {pipeline_mode = #tpu.pipeline_mode<synchronous>, transform_indices = @transform_5, window_bounds = array<i64: 32, 64>}, {pipeline_mode = #tpu.pipeline_mode<synchronous>, transform_indices = @transform_6, window_bounds = array<i64: 576, 32>}, {pipeline_mode = #tpu.pipeline_mode<synchronous>, transform_indices = @transform_7, window_bounds = array<i64: 1, 32>}, {pipeline_mode = #tpu.pipeline_mode<synchronous>, transform_indices = @transform_8, window_bounds = array<i64: 1, 32>}, {pipeline_mode = #tpu.pipeline_mode<synchronous>, transform_indices = @transform_9, window_bounds = array<i64: 32, 32>}, {pipeline_mode = #tpu.pipeline_mode<synchronous>, transform_indices = @transform_10, window_bounds = array<i64: 32, 32>}, {pipeline_mode = #tpu.pipeline_mode<synchronous>, transform_indices = @transform_11, window_bounds = array<i64: 288, 32>}, {pipeline_mode = #tpu.pipeline_mode<synchronous>, transform_indices = @transform_12, window_bounds = array<i64: 1, 32>}, {pipeline_mode = #tpu.pipeline_mode<synchronous>, transform_indices = @transform_13, window_bounds = array<i64: 64, 32>}, {pipeline_mode = #tpu.pipeline_mode<synchronous>, transform_indices = @transform_14, window_bounds = array<i64: 32, 96>}, {pipeline_mode = #tpu.pipeline_mode<synchronous>, transform_indices = @transform_15, window_bounds = array<i64: 1, 96>}, {pipeline_mode = #tpu.pipeline_mode<synchronous>, transform_indices = @transform_16, window_bounds = array<i64: 32, 32>}, {pipeline_mode = #tpu.pipeline_mode<synchronous>, transform_indices = @transform_17, window_bounds = array<i64: 1, 32>}, {pipeline_mode = #tpu.pipeline_mode<synchronous>, transform_indices = @transform_18, window_bounds = array<i64: 2, 64, 32>}]} {
    %c0 = arith.constant 0 : index
    %c0_0 = arith.constant 0 : index
    %c0_1 = arith.constant 0 : index
    %0 = vector.load %arg1[%c0, %c0_0, %c0_1] : memref<2x64x64xf32, #tpu.memory_space<vmem>>, vector<2x64x64xf32>
    %c0_2 = arith.constant 0 : index
    %c0_3 = arith.constant 0 : index
    %1 = vector.load %arg3[%c0_2, %c0_3] : memref<1x64xf32, #tpu.memory_space<vmem>>, vector<1x64xf32>
    %c0_4 = arith.constant 0 : index
    %c0_5 = arith.constant 0 : index
    %2 = vector.load %arg4[%c0_4, %c0_5] : memref<1x64xf32, #tpu.memory_space<vmem>>, vector<1x64xf32>
    %c0_6 = arith.constant 0 : index
    %c0_7 = arith.constant 0 : index
    %3 = vector.load %arg5[%c0_6, %c0_7] : memref<64x32xf32, #tpu.memory_space<vmem>>, vector<64x32xf32>
    %c0_8 = arith.constant 0 : index
    %c0_9 = arith.constant 0 : index
    %4 = vector.load %arg6[%c0_8, %c0_9] : memref<32x64xf32, #tpu.memory_space<vmem>>, vector<32x64xf32>
    %cst = arith.constant dense<0.000000e+00> : vector<2x64xf32>
    %5 = vector.multi_reduction <add>, %0, %cst [1] : vector<2x64x64xf32> to vector<2x64xf32>
    %6 = arith.mulf %0, %0 : vector<2x64x64xf32>
    %cst_10 = arith.constant dense<0.000000e+00> : vector<2x64xf32>
    %7 = vector.multi_reduction <add>, %6, %cst_10 [1] : vector<2x64x64xf32> to vector<2x64xf32>
    %cst_11 = arith.constant dense<0.000000e+00> : vector<2x32xf32>
    %8 = tpu.matmul %5, %3, %cst_11 {dimension_numbers = #tpu.dot_dimension_numbers<[1], [0], [0], [1], [0, 0, 1, 1], [], []>} : vector<2x64xf32>, vector<64x32xf32>, vector<2x32xf32> -> vector<2x32xf32>
    %cst_12 = arith.constant 1.280000e+02 : f32
    %9 = vector.broadcast %cst_12 : f32 to vector<2x32xf32>
    %10 = arith.divf %8, %9 : vector<2x32xf32>
    %cst_13 = arith.constant dense<0.000000e+00> : vector<2x32xf32>
    %11 = tpu.matmul %7, %3, %cst_13 {dimension_numbers = #tpu.dot_dimension_numbers<[1], [0], [0], [1], [0, 0, 1, 1], [], []>} : vector<2x64xf32>, vector<64x32xf32>, vector<2x32xf32> -> vector<2x32xf32>
    %cst_14 = arith.constant 1.280000e+02 : f32
    %12 = vector.broadcast %cst_14 : f32 to vector<2x32xf32>
    %13 = arith.divf %11, %12 : vector<2x32xf32>
    %14 = arith.mulf %10, %10 : vector<2x32xf32>
    %15 = arith.subf %13, %14 : vector<2x32xf32>
    %cst_15 = arith.constant 9.99999974E-6 : f32
    %16 = vector.broadcast %cst_15 : f32 to vector<2x32xf32>
    %17 = arith.addf %15, %16 : vector<2x32xf32>
    %18 = math.rsqrt %17 : vector<2x32xf32>
    %cst_16 = arith.constant dense<0.000000e+00> : vector<2x64xf32>
    %19 = tpu.matmul %10, %4, %cst_16 {dimension_numbers = #tpu.dot_dimension_numbers<[1], [0], [0], [1], [0, 0, 1, 1], [], []>} : vector<2x32xf32>, vector<32x64xf32>, vector<2x64xf32> -> vector<2x64xf32>
    %cst_17 = arith.constant dense<0.000000e+00> : vector<2x64xf32>
    %20 = tpu.matmul %18, %4, %cst_17 {dimension_numbers = #tpu.dot_dimension_numbers<[1], [0], [0], [1], [0, 0, 1, 1], [], []>} : vector<2x32xf32>, vector<32x64xf32>, vector<2x64xf32> -> vector<2x64xf32>
    %21 = vector.shape_cast %19 : vector<2x64xf32> to vector<2x1x64xf32>
    %22 = vector.broadcast %21 : vector<2x1x64xf32> to vector<2x64x64xf32>
    %23 = arith.subf %0, %22 : vector<2x64x64xf32>
    %24 = vector.shape_cast %20 : vector<2x64xf32> to vector<2x1x64xf32>
    %25 = vector.broadcast %24 : vector<2x1x64xf32> to vector<2x64x64xf32>
    %26 = arith.mulf %23, %25 : vector<2x64x64xf32>
    %27 = vector.shape_cast %1 : vector<1x64xf32> to vector<1x1x64xf32>
    %28 = vector.broadcast %27 : vector<1x1x64xf32> to vector<2x64x64xf32>
    %29 = arith.mulf %26, %28 : vector<2x64x64xf32>
    %30 = vector.shape_cast %2 : vector<1x64xf32> to vector<1x1x64xf32>
    %31 = vector.broadcast %30 : vector<1x1x64xf32> to vector<2x64x64xf32>
    %32 = arith.addf %29, %31 : vector<2x64x64xf32>
    %33 = arith.negf %32 : vector<2x64x64xf32>
    %34 = math.exp %33 : vector<2x64x64xf32>
    %cst_18 = arith.constant 1.000000e+00 : f32
    %35 = vector.broadcast %cst_18 : f32 to vector<2x64x64xf32>
    %36 = arith.addf %35, %34 : vector<2x64x64xf32>
    %37 = arith.divf %35, %36 : vector<2x64x64xf32>
    %38 = arith.mulf %32, %37 : vector<2x64x64xf32>
    %cst_19 = arith.constant 0.000000e+00 : f32
    %39 = vector.broadcast %cst_19 : f32 to vector<2x10x10x64xf32>
    %c0_20 = arith.constant 0 : index
    %c0_21 = arith.constant 0 : index
    %c0_22 = arith.constant 0 : index
    %c0_23 = arith.constant 0 : index
    %40 = vector.load %arg20[%c0_20, %c0_21, %c0_22, %c0_23] : memref<2x10x10x64xf32, #tpu.memory_space<vmem>>, vector<2x10x10x64xf32>
    tpu.vector_store %arg20[%c0_20, %c0_21, %c0_22, %c0_23], %39 {strides = array<i32>} : memref<2x10x10x64xf32, #tpu.memory_space<vmem>>, vector<2x10x10x64xf32>,
    %41 = vector.shape_cast %38 : vector<2x64x64xf32> to vector<2x8x8x64xf32>
    %c0_24 = arith.constant 0 : index
    %c1 = arith.constant 1 : index
    %c1_25 = arith.constant 1 : index
    %c0_26 = arith.constant 0 : index
    %42 = vector.load %arg20[%c0_24, %c1, %c1_25, %c0_26] : memref<2x10x10x64xf32, #tpu.memory_space<vmem>>, vector<2x8x8x64xf32>
    tpu.vector_store %arg20[%c0_24, %c1, %c1_25, %c0_26], %41 {strides = array<i32>} : memref<2x10x10x64xf32, #tpu.memory_space<vmem>>, vector<2x8x8x64xf32>,
    %c0_27 = arith.constant 0 : index
    %c0_28 = arith.constant 0 : index
    %c0_29 = arith.constant 0 : index
    %c0_30 = arith.constant 0 : index
    %43 = vector.load %arg20[%c0_27, %c0_28, %c0_29, %c0_30] : memref<2x10x10x64xf32, #tpu.memory_space<vmem>>, vector<2x8x8x64xf32>
    %44 = vector.shape_cast %43 : vector<2x8x8x64xf32> to vector<128x64xf32>
    %45 = arith.truncf %44 : vector<128x64xf32> to vector<128x64xbf16>
    %c0_31 = arith.constant 0 : index
    %c0_32 = arith.constant 0 : index
    %c1_33 = arith.constant 1 : index
    %c0_34 = arith.constant 0 : index
    %46 = vector.load %arg20[%c0_31, %c0_32, %c1_33, %c0_34] : memref<2x10x10x64xf32, #tpu.memory_space<vmem>>, vector<2x8x8x64xf32>
    %47 = vector.shape_cast %46 : vector<2x8x8x64xf32> to vector<128x64xf32>
    %48 = arith.truncf %47 : vector<128x64xf32> to vector<128x64xbf16>
    %c0_35 = arith.constant 0 : index
    %c0_36 = arith.constant 0 : index
    %c2 = arith.constant 2 : index
    %c0_37 = arith.constant 0 : index
    %49 = vector.load %arg20[%c0_35, %c0_36, %c2, %c0_37] : memref<2x10x10x64xf32, #tpu.memory_space<vmem>>, vector<2x8x8x64xf32>
    %50 = vector.shape_cast %49 : vector<2x8x8x64xf32> to vector<128x64xf32>
    %51 = arith.truncf %50 : vector<128x64xf32> to vector<128x64xbf16>
    %c0_38 = arith.constant 0 : index
    %c1_39 = arith.constant 1 : index
    %c0_40 = arith.constant 0 : index
    %c0_41 = arith.constant 0 : index
    %52 = vector.load %arg20[%c0_38, %c1_39, %c0_40, %c0_41] : memref<2x10x10x64xf32, #tpu.memory_space<vmem>>, vector<2x8x8x64xf32>
    %53 = vector.shape_cast %52 : vector<2x8x8x64xf32> to vector<128x64xf32>
    %54 = arith.truncf %53 : vector<128x64xf32> to vector<128x64xbf16>
    %c0_42 = arith.constant 0 : index
    %c1_43 = arith.constant 1 : index
    %c1_44 = arith.constant 1 : index
    %c0_45 = arith.constant 0 : index
    %55 = vector.load %arg20[%c0_42, %c1_43, %c1_44, %c0_45] : memref<2x10x10x64xf32, #tpu.memory_space<vmem>>, vector<2x8x8x64xf32>
    %56 = vector.shape_cast %55 : vector<2x8x8x64xf32> to vector<128x64xf32>
    %57 = arith.truncf %56 : vector<128x64xf32> to vector<128x64xbf16>
    %c0_46 = arith.constant 0 : index
    %c1_47 = arith.constant 1 : index
    %c2_48 = arith.constant 2 : index
    %c0_49 = arith.constant 0 : index
    %58 = vector.load %arg20[%c0_46, %c1_47, %c2_48, %c0_49] : memref<2x10x10x64xf32, #tpu.memory_space<vmem>>, vector<2x8x8x64xf32>
    %59 = vector.shape_cast %58 : vector<2x8x8x64xf32> to vector<128x64xf32>
    %60 = arith.truncf %59 : vector<128x64xf32> to vector<128x64xbf16>
    %c0_50 = arith.constant 0 : index
    %c2_51 = arith.constant 2 : index
    %c0_52 = arith.constant 0 : index
    %c0_53 = arith.constant 0 : index
    %61 = vector.load %arg20[%c0_50, %c2_51, %c0_52, %c0_53] : memref<2x10x10x64xf32, #tpu.memory_space<vmem>>, vector<2x8x8x64xf32>
    %62 = vector.shape_cast %61 : vector<2x8x8x64xf32> to vector<128x64xf32>
    %63 = arith.truncf %62 : vector<128x64xf32> to vector<128x64xbf16>
    %c0_54 = arith.constant 0 : index
    %c2_55 = arith.constant 2 : index
    %c1_56 = arith.constant 1 : index
    %c0_57 = arith.constant 0 : index
    %64 = vector.load %arg20[%c0_54, %c2_55, %c1_56, %c0_57] : memref<2x10x10x64xf32, #tpu.memory_space<vmem>>, vector<2x8x8x64xf32>
    %65 = vector.shape_cast %64 : vector<2x8x8x64xf32> to vector<128x64xf32>
    %66 = arith.truncf %65 : vector<128x64xf32> to vector<128x64xbf16>
    %c0_58 = arith.constant 0 : index
    %c2_59 = arith.constant 2 : index
    %c2_60 = arith.constant 2 : index
    %c0_61 = arith.constant 0 : index
    %67 = vector.load %arg20[%c0_58, %c2_59, %c2_60, %c0_61] : memref<2x10x10x64xf32, #tpu.memory_space<vmem>>, vector<2x8x8x64xf32>
    %68 = vector.shape_cast %67 : vector<2x8x8x64xf32> to vector<128x64xf32>
    %69 = arith.truncf %68 : vector<128x64xf32> to vector<128x64xbf16>
    %70 = tpu.concatenate %45, %48, %51, %54, %57, %60, %63, %66, %69 in 1 : vector<128x64xbf16>, vector<128x64xbf16>, vector<128x64xbf16>, vector<128x64xbf16>, vector<128x64xbf16>, vector<128x64xbf16>, vector<128x64xbf16>, vector<128x64xbf16>, vector<128x64xbf16> -> vector<128x576xbf16>
    %c0_62 = arith.constant 0 : index
    %c0_63 = arith.constant 0 : index
    %71 = vector.load %arg7[%c0_62, %c0_63] : memref<576x32xbf16, #tpu.memory_space<vmem>>, vector<576x32xbf16>
    %cst_64 = arith.constant dense<0.000000e+00> : vector<128x32xf32>
    %72 = tpu.matmul %70, %71, %cst_64 {dimension_numbers = #tpu.dot_dimension_numbers<[1], [0], [0], [1], [0, 0, 1, 1], [], []>} : vector<128x576xbf16>, vector<576x32xbf16>, vector<128x32xf32> -> vector<128x32xf32>
    %73 = vector.shape_cast %72 : vector<128x32xf32> to vector<2x64x32xf32>
    %c0_65 = arith.constant 0 : index
    %c0_66 = arith.constant 0 : index
    %74 = vector.load %arg2[%c0_65, %c0_66] : memref<2x32xf32, #tpu.memory_space<vmem>>, vector<2x32xf32>
    %75 = vector.shape_cast %74 : vector<2x32xf32> to vector<2x1x32xf32>
    %76 = vector.broadcast %75 : vector<2x1x32xf32> to vector<2x64x32xf32>
    %77 = arith.addf %73, %76 : vector<2x64x32xf32>
    %c0_67 = arith.constant 0 : index
    %c0_68 = arith.constant 0 : index
    %78 = vector.load %arg8[%c0_67, %c0_68] : memref<1x32xf32, #tpu.memory_space<vmem>>, vector<1x32xf32>
    %c0_69 = arith.constant 0 : index
    %c0_70 = arith.constant 0 : index
    %79 = vector.load %arg9[%c0_69, %c0_70] : memref<1x32xf32, #tpu.memory_space<vmem>>, vector<1x32xf32>
    %c0_71 = arith.constant 0 : index
    %c0_72 = arith.constant 0 : index
    %80 = vector.load %arg10[%c0_71, %c0_72] : memref<32x32xf32, #tpu.memory_space<vmem>>, vector<32x32xf32>
    %c0_73 = arith.constant 0 : index
    %c0_74 = arith.constant 0 : index
    %81 = vector.load %arg11[%c0_73, %c0_74] : memref<32x32xf32, #tpu.memory_space<vmem>>, vector<32x32xf32>
    %cst_75 = arith.constant dense<0.000000e+00> : vector<2x32xf32>
    %82 = vector.multi_reduction <add>, %77, %cst_75 [1] : vector<2x64x32xf32> to vector<2x32xf32>
    %83 = arith.mulf %77, %77 : vector<2x64x32xf32>
    %cst_76 = arith.constant dense<0.000000e+00> : vector<2x32xf32>
    %84 = vector.multi_reduction <add>, %83, %cst_76 [1] : vector<2x64x32xf32> to vector<2x32xf32>
    %cst_77 = arith.constant dense<0.000000e+00> : vector<2x32xf32>
    %85 = tpu.matmul %82, %80, %cst_77 {dimension_numbers = #tpu.dot_dimension_numbers<[1], [0], [0], [1], [0, 0, 1, 1], [], []>} : vector<2x32xf32>, vector<32x32xf32>, vector<2x32xf32> -> vector<2x32xf32>
    %cst_78 = arith.constant 6.400000e+01 : f32
    %86 = vector.broadcast %cst_78 : f32 to vector<2x32xf32>
    %87 = arith.divf %85, %86 : vector<2x32xf32>
    %cst_79 = arith.constant dense<0.000000e+00> : vector<2x32xf32>
    %88 = tpu.matmul %84, %80, %cst_79 {dimension_numbers = #tpu.dot_dimension_numbers<[1], [0], [0], [1], [0, 0, 1, 1], [], []>} : vector<2x32xf32>, vector<32x32xf32>, vector<2x32xf32> -> vector<2x32xf32>
    %cst_80 = arith.constant 6.400000e+01 : f32
    %89 = vector.broadcast %cst_80 : f32 to vector<2x32xf32>
    %90 = arith.divf %88, %89 : vector<2x32xf32>
    %91 = arith.mulf %87, %87 : vector<2x32xf32>
    %92 = arith.subf %90, %91 : vector<2x32xf32>
    %cst_81 = arith.constant 9.99999974E-6 : f32
    %93 = vector.broadcast %cst_81 : f32 to vector<2x32xf32>
    %94 = arith.addf %92, %93 : vector<2x32xf32>
    %95 = math.rsqrt %94 : vector<2x32xf32>
    %cst_82 = arith.constant dense<0.000000e+00> : vector<2x32xf32>
    %96 = tpu.matmul %87, %81, %cst_82 {dimension_numbers = #tpu.dot_dimension_numbers<[1], [0], [0], [1], [0, 0, 1, 1], [], []>} : vector<2x32xf32>, vector<32x32xf32>, vector<2x32xf32> -> vector<2x32xf32>
    %cst_83 = arith.constant dense<0.000000e+00> : vector<2x32xf32>
    %97 = tpu.matmul %95, %81, %cst_83 {dimension_numbers = #tpu.dot_dimension_numbers<[1], [0], [0], [1], [0, 0, 1, 1], [], []>} : vector<2x32xf32>, vector<32x32xf32>, vector<2x32xf32> -> vector<2x32xf32>
    %98 = vector.shape_cast %96 : vector<2x32xf32> to vector<2x1x32xf32>
    %99 = vector.broadcast %98 : vector<2x1x32xf32> to vector<2x64x32xf32>
    %100 = arith.subf %77, %99 : vector<2x64x32xf32>
    %101 = vector.shape_cast %97 : vector<2x32xf32> to vector<2x1x32xf32>
    %102 = vector.broadcast %101 : vector<2x1x32xf32> to vector<2x64x32xf32>
    %103 = arith.mulf %100, %102 : vector<2x64x32xf32>
    %104 = vector.shape_cast %78 : vector<1x32xf32> to vector<1x1x32xf32>
    %105 = vector.broadcast %104 : vector<1x1x32xf32> to vector<2x64x32xf32>
    %106 = arith.mulf %103, %105 : vector<2x64x32xf32>
    %107 = vector.shape_cast %79 : vector<1x32xf32> to vector<1x1x32xf32>
    %108 = vector.broadcast %107 : vector<1x1x32xf32> to vector<2x64x32xf32>
    %109 = arith.addf %106, %108 : vector<2x64x32xf32>
    %110 = arith.negf %109 : vector<2x64x32xf32>
    %111 = math.exp %110 : vector<2x64x32xf32>
    %cst_84 = arith.constant 1.000000e+00 : f32
    %112 = vector.broadcast %cst_84 : f32 to vector<2x64x32xf32>
    %113 = arith.addf %112, %111 : vector<2x64x32xf32>
    %114 = arith.divf %112, %113 : vector<2x64x32xf32>
    %115 = arith.mulf %109, %114 : vector<2x64x32xf32>
    %cst_85 = arith.constant 0.000000e+00 : f32
    %116 = vector.broadcast %cst_85 : f32 to vector<2x10x10x32xf32>
    %c0_86 = arith.constant 0 : index
    %c0_87 = arith.constant 0 : index
    %c0_88 = arith.constant 0 : index
    %c0_89 = arith.constant 0 : index
    %117 = vector.load %arg21[%c0_86, %c0_87, %c0_88, %c0_89] : memref<2x10x10x32xf32, #tpu.memory_space<vmem>>, vector<2x10x10x32xf32>
    tpu.vector_store %arg21[%c0_86, %c0_87, %c0_88, %c0_89], %116 {strides = array<i32>} : memref<2x10x10x32xf32, #tpu.memory_space<vmem>>, vector<2x10x10x32xf32>,
    %118 = vector.shape_cast %115 : vector<2x64x32xf32> to vector<2x8x8x32xf32>
    %c0_90 = arith.constant 0 : index
    %c1_91 = arith.constant 1 : index
    %c1_92 = arith.constant 1 : index
    %c0_93 = arith.constant 0 : index
    %119 = vector.load %arg21[%c0_90, %c1_91, %c1_92, %c0_93] : memref<2x10x10x32xf32, #tpu.memory_space<vmem>>, vector<2x8x8x32xf32>
    tpu.vector_store %arg21[%c0_90, %c1_91, %c1_92, %c0_93], %118 {strides = array<i32>} : memref<2x10x10x32xf32, #tpu.memory_space<vmem>>, vector<2x8x8x32xf32>,
    %c0_94 = arith.constant 0 : index
    %c0_95 = arith.constant 0 : index
    %c0_96 = arith.constant 0 : index
    %c0_97 = arith.constant 0 : index
    %120 = vector.load %arg21[%c0_94, %c0_95, %c0_96, %c0_97] : memref<2x10x10x32xf32, #tpu.memory_space<vmem>>, vector<2x8x8x32xf32>
    %121 = vector.shape_cast %120 : vector<2x8x8x32xf32> to vector<128x32xf32>
    %122 = arith.truncf %121 : vector<128x32xf32> to vector<128x32xbf16>
    %c0_98 = arith.constant 0 : index
    %c0_99 = arith.constant 0 : index
    %c1_100 = arith.constant 1 : index
    %c0_101 = arith.constant 0 : index
    %123 = vector.load %arg21[%c0_98, %c0_99, %c1_100, %c0_101] : memref<2x10x10x32xf32, #tpu.memory_space<vmem>>, vector<2x8x8x32xf32>
    %124 = vector.shape_cast %123 : vector<2x8x8x32xf32> to vector<128x32xf32>
    %125 = arith.truncf %124 : vector<128x32xf32> to vector<128x32xbf16>
    %c0_102 = arith.constant 0 : index
    %c0_103 = arith.constant 0 : index
    %c2_104 = arith.constant 2 : index
    %c0_105 = arith.constant 0 : index
    %126 = vector.load %arg21[%c0_102, %c0_103, %c2_104, %c0_105] : memref<2x10x10x32xf32, #tpu.memory_space<vmem>>, vector<2x8x8x32xf32>
    %127 = vector.shape_cast %126 : vector<2x8x8x32xf32> to vector<128x32xf32>
    %128 = arith.truncf %127 : vector<128x32xf32> to vector<128x32xbf16>
    %c0_106 = arith.constant 0 : index
    %c1_107 = arith.constant 1 : index
    %c0_108 = arith.constant 0 : index
    %c0_109 = arith.constant 0 : index
    %129 = vector.load %arg21[%c0_106, %c1_107, %c0_108, %c0_109] : memref<2x10x10x32xf32, #tpu.memory_space<vmem>>, vector<2x8x8x32xf32>
    %130 = vector.shape_cast %129 : vector<2x8x8x32xf32> to vector<128x32xf32>
    %131 = arith.truncf %130 : vector<128x32xf32> to vector<128x32xbf16>
    %c0_110 = arith.constant 0 : index
    %c1_111 = arith.constant 1 : index
    %c1_112 = arith.constant 1 : index
    %c0_113 = arith.constant 0 : index
    %132 = vector.load %arg21[%c0_110, %c1_111, %c1_112, %c0_113] : memref<2x10x10x32xf32, #tpu.memory_space<vmem>>, vector<2x8x8x32xf32>
    %133 = vector.shape_cast %132 : vector<2x8x8x32xf32> to vector<128x32xf32>
    %134 = arith.truncf %133 : vector<128x32xf32> to vector<128x32xbf16>
    %c0_114 = arith.constant 0 : index
    %c1_115 = arith.constant 1 : index
    %c2_116 = arith.constant 2 : index
    %c0_117 = arith.constant 0 : index
    %135 = vector.load %arg21[%c0_114, %c1_115, %c2_116, %c0_117] : memref<2x10x10x32xf32, #tpu.memory_space<vmem>>, vector<2x8x8x32xf32>
    %136 = vector.shape_cast %135 : vector<2x8x8x32xf32> to vector<128x32xf32>
    %137 = arith.truncf %136 : vector<128x32xf32> to vector<128x32xbf16>
    %c0_118 = arith.constant 0 : index
    %c2_119 = arith.constant 2 : index
    %c0_120 = arith.constant 0 : index
    %c0_121 = arith.constant 0 : index
    %138 = vector.load %arg21[%c0_118, %c2_119, %c0_120, %c0_121] : memref<2x10x10x32xf32, #tpu.memory_space<vmem>>, vector<2x8x8x32xf32>
    %139 = vector.shape_cast %138 : vector<2x8x8x32xf32> to vector<128x32xf32>
    %140 = arith.truncf %139 : vector<128x32xf32> to vector<128x32xbf16>
    %c0_122 = arith.constant 0 : index
    %c2_123 = arith.constant 2 : index
    %c1_124 = arith.constant 1 : index
    %c0_125 = arith.constant 0 : index
    %141 = vector.load %arg21[%c0_122, %c2_123, %c1_124, %c0_125] : memref<2x10x10x32xf32, #tpu.memory_space<vmem>>, vector<2x8x8x32xf32>
    %142 = vector.shape_cast %141 : vector<2x8x8x32xf32> to vector<128x32xf32>
    %143 = arith.truncf %142 : vector<128x32xf32> to vector<128x32xbf16>
    %c0_126 = arith.constant 0 : index
    %c2_127 = arith.constant 2 : index
    %c2_128 = arith.constant 2 : index
    %c0_129 = arith.constant 0 : index
    %144 = vector.load %arg21[%c0_126, %c2_127, %c2_128, %c0_129] : memref<2x10x10x32xf32, #tpu.memory_space<vmem>>, vector<2x8x8x32xf32>
    %145 = vector.shape_cast %144 : vector<2x8x8x32xf32> to vector<128x32xf32>
    %146 = arith.truncf %145 : vector<128x32xf32> to vector<128x32xbf16>
    %147 = tpu.concatenate %122, %125, %128, %131, %134, %137, %140, %143, %146 in 1 : vector<128x32xbf16>, vector<128x32xbf16>, vector<128x32xbf16>, vector<128x32xbf16>, vector<128x32xbf16>, vector<128x32xbf16>, vector<128x32xbf16>, vector<128x32xbf16>, vector<128x32xbf16> -> vector<128x288xbf16>
    %c0_130 = arith.constant 0 : index
    %c0_131 = arith.constant 0 : index
    %148 = vector.load %arg12[%c0_130, %c0_131] : memref<288x32xbf16, #tpu.memory_space<vmem>>, vector<288x32xbf16>
    %cst_132 = arith.constant dense<0.000000e+00> : vector<128x32xf32>
    %149 = tpu.matmul %147, %148, %cst_132 {dimension_numbers = #tpu.dot_dimension_numbers<[1], [0], [0], [1], [0, 0, 1, 1], [], []>} : vector<128x288xbf16>, vector<288x32xbf16>, vector<128x32xf32> -> vector<128x32xf32>
    %150 = vector.shape_cast %149 : vector<128x32xf32> to vector<2x64x32xf32>
    %151 = vector.shape_cast %0 : vector<2x64x64xf32> to vector<128x64xf32>
    %152 = arith.truncf %151 : vector<128x64xf32> to vector<128x64xbf16>
    %c0_133 = arith.constant 0 : index
    %c0_134 = arith.constant 0 : index
    %153 = vector.load %arg14[%c0_133, %c0_134] : memref<64x32xbf16, #tpu.memory_space<vmem>>, vector<64x32xbf16>
    %cst_135 = arith.constant dense<0.000000e+00> : vector<128x32xf32>
    %154 = tpu.matmul %152, %153, %cst_135 {dimension_numbers = #tpu.dot_dimension_numbers<[1], [0], [0], [1], [0, 0, 1, 1], [], []>} : vector<128x64xbf16>, vector<64x32xbf16>, vector<128x32xf32> -> vector<128x32xf32>
    %155 = vector.shape_cast %154 : vector<128x32xf32> to vector<2x64x32xf32>
    %156 = arith.addf %150, %155 : vector<2x64x32xf32>
    %c0_136 = arith.constant 0 : index
    %c0_137 = arith.constant 0 : index
    %157 = vector.load %arg13[%c0_136, %c0_137] : memref<1x32xf32, #tpu.memory_space<vmem>>, vector<1x32xf32>
    %158 = vector.shape_cast %157 : vector<1x32xf32> to vector<1x1x32xf32>
    %159 = vector.broadcast %158 : vector<1x1x32xf32> to vector<2x64x32xf32>
    %160 = arith.addf %156, %159 : vector<2x64x32xf32>
    %161 = vector.shape_cast %160 : vector<2x64x32xf32> to vector<128x32xf32>
    %162 = arith.truncf %161 : vector<128x32xf32> to vector<128x32xbf16>
    %c0_138 = arith.constant 0 : index
    %c0_139 = arith.constant 0 : index
    %163 = vector.load %arg15[%c0_138, %c0_139] : memref<32x96xbf16, #tpu.memory_space<vmem>>, vector<32x96xbf16>
    %cst_140 = arith.constant dense<0.000000e+00> : vector<128x96xf32>
    %164 = tpu.matmul %162, %163, %cst_140 {dimension_numbers = #tpu.dot_dimension_numbers<[1], [0], [0], [1], [0, 0, 1, 1], [], []>} : vector<128x32xbf16>, vector<32x96xbf16>, vector<128x96xf32> -> vector<128x96xf32>
    %c0_141 = arith.constant 0 : index
    %c0_142 = arith.constant 0 : index
    %165 = vector.load %arg16[%c0_141, %c0_142] : memref<1x96xf32, #tpu.memory_space<vmem>>, vector<1x96xf32>
    %166 = vector.broadcast %165 : vector<1x96xf32> to vector<128x96xf32>
    %167 = arith.addf %164, %166 : vector<128x96xf32>
    %168 = vector.shape_cast %167 : vector<128x96xf32> to vector<2x64x96xf32>
    %169 = vector.extract_strided_slice %168 {offsets = [0, 0, 0], sizes = [2, 64, 32], strides = [1, 1, 1]} : vector<2x64x96xf32> to vector<2x64x32xf32>
    %170 = arith.truncf %169 : vector<2x64x32xf32> to vector<2x64x32xbf16>
    %171 = vector.extract_strided_slice %168 {offsets = [0, 0, 32], sizes = [2, 64, 32], strides = [1, 1, 1]} : vector<2x64x96xf32> to vector<2x64x32xf32>
    %172 = arith.truncf %171 : vector<2x64x32xf32> to vector<2x64x32xbf16>
    %173 = vector.extract_strided_slice %168 {offsets = [0, 0, 64], sizes = [2, 64, 32], strides = [1, 1, 1]} : vector<2x64x96xf32> to vector<2x64x32xf32>
    %174 = arith.truncf %173 : vector<2x64x32xf32> to vector<2x64x32xbf16>
    "tpu.trace_start"() <{level = 10 : i32, message = "bid,bjd->bij"}> : () -> ()
    %cst_143 = arith.constant dense<0.000000e+00> : vector<2x64x64xf32>
    %175 = tpu.matmul %170, %172, %cst_143 {dimension_numbers = #tpu.dot_dimension_numbers<[2], [2], [1], [1], [0, 0, 0, 1, 1, 1], [0], [0]>} : vector<2x64x32xbf16>, vector<2x64x32xbf16>, vector<2x64x64xf32> -> vector<2x64x64xf32>
    "tpu.trace_stop"() : () -> ()
    %cst_144 = arith.constant 0.176776692 : f32
    %176 = vector.broadcast %cst_144 : f32 to vector<2x64x64xf32>
    %177 = arith.mulf %175, %176 : vector<2x64x64xf32>
    %cst_145 = arith.constant dense<0xFF800000> : vector<2x64xf32>
    %178 = vector.multi_reduction <maximumf>, %177, %cst_145 [1] : vector<2x64x64xf32> to vector<2x64xf32>
    %179 = vector.shape_cast %178 : vector<2x64xf32> to vector<2x1x64xf32>
    %180 = vector.broadcast %179 : vector<2x1x64xf32> to vector<2x64x64xf32>
    %181 = arith.subf %177, %180 : vector<2x64x64xf32>
    %182 = math.exp %181 : vector<2x64x64xf32>
    %cst_146 = arith.constant dense<0.000000e+00> : vector<2x64xf32>
    %183 = vector.multi_reduction <add>, %182, %cst_146 [1] : vector<2x64x64xf32> to vector<2x64xf32>
    %184 = vector.shape_cast %183 : vector<2x64xf32> to vector<2x1x64xf32>
    %185 = tpu.reciprocal %184 {approx = true} : vector<2x1x64xf32> -> vector<2x1x64xf32>
    %186 = vector.broadcast %185 : vector<2x1x64xf32> to vector<2x64x64xf32>
    %187 = arith.mulf %182, %186 : vector<2x64x64xf32>
    %188 = arith.truncf %187 : vector<2x64x64xf32> to vector<2x64x64xbf16>
    "tpu.trace_start"() <{level = 10 : i32, message = "bij,bjd->bid"}> : () -> ()
    %cst_147 = arith.constant dense<0.000000e+00> : vector<2x64x32xf32>
    %189 = tpu.matmul %188, %174, %cst_147 {dimension_numbers = #tpu.dot_dimension_numbers<[2], [1], [1], [2], [0, 0, 0, 1, 1, 2], [0], [0]>} : vector<2x64x64xbf16>, vector<2x64x32xbf16>, vector<2x64x32xf32> -> vector<2x64x32xf32>
    "tpu.trace_stop"() : () -> ()
    %190 = vector.shape_cast %189 : vector<2x64x32xf32> to vector<128x32xf32>
    %191 = arith.truncf %190 : vector<128x32xf32> to vector<128x32xbf16>
    %c0_148 = arith.constant 0 : index
    %c0_149 = arith.constant 0 : index
    %192 = vector.load %arg17[%c0_148, %c0_149] : memref<32x32xbf16, #tpu.memory_space<vmem>>, vector<32x32xbf16>
    %cst_150 = arith.constant dense<0.000000e+00> : vector<128x32xf32>
    %193 = tpu.matmul %191, %192, %cst_150 {dimension_numbers = #tpu.dot_dimension_numbers<[1], [0], [0], [1], [0, 0, 1, 1], [], []>} : vector<128x32xbf16>, vector<32x32xbf16>, vector<128x32xf32> -> vector<128x32xf32>
    %c0_151 = arith.constant 0 : index
    %c0_152 = arith.constant 0 : index
    %194 = vector.load %arg18[%c0_151, %c0_152] : memref<1x32xf32, #tpu.memory_space<vmem>>, vector<1x32xf32>
    %195 = vector.broadcast %194 : vector<1x32xf32> to vector<128x32xf32>
    %196 = arith.addf %193, %195 : vector<128x32xf32>
    %197 = vector.shape_cast %196 : vector<128x32xf32> to vector<2x64x32xf32>
    %198 = arith.addf %197, %160 : vector<2x64x32xf32>
    %c0_153 = arith.constant 0 : index
    %c0_154 = arith.constant 0 : index
    %c0_155 = arith.constant 0 : index
    %199 = vector.load %arg19[%c0_153, %c0_154, %c0_155] : memref<2x64x32xf32, #tpu.memory_space<vmem>>, vector<2x64x32xf32>
    tpu.vector_store %arg19[%c0_153, %c0_154, %c0_155], %198 {strides = array<i32>} : memref<2x64x32xf32, #tpu.memory_space<vmem>>, vector<2x64x32xf32>,
    return
  }
  func.func @transform_0(%arg0: i32) -> (i32, i32, i32) {
    %c0_i32 = arith.constant 0 : i32
    %c0_i32_0 = arith.constant 0 : i32
    %c0_i32_1 = arith.constant 0 : i32
    %c0_i32_2 = arith.constant 0 : i32
    return %c0_i32, %c0_i32_0, %c0_i32_1 : i32, i32, i32
  }
  func.func @transform_1(%arg0: i32) -> (i32, i32) {
    %c0_i32 = arith.constant 0 : i32
    %c0_i32_0 = arith.constant 0 : i32
    %c0_i32_1 = arith.constant 0 : i32
    return %c0_i32, %c0_i32_0 : i32, i32
  }
  func.func @transform_2(%arg0: i32) -> (i32, i32) {
    %c0_i32 = arith.constant 0 : i32
    %c0_i32_0 = arith.constant 0 : i32
    %c0_i32_1 = arith.constant 0 : i32
    return %c0_i32, %c0_i32_0 : i32, i32
  }
  func.func @transform_3(%arg0: i32) -> (i32, i32) {
    %c0_i32 = arith.constant 0 : i32
    %c0_i32_0 = arith.constant 0 : i32
    %c0_i32_1 = arith.constant 0 : i32
    return %c0_i32, %c0_i32_0 : i32, i32
  }
  func.func @transform_4(%arg0: i32) -> (i32, i32) {
    %c0_i32 = arith.constant 0 : i32
    %c0_i32_0 = arith.constant 0 : i32
    %c0_i32_1 = arith.constant 0 : i32
    return %c0_i32, %c0_i32_0 : i32, i32
  }
  func.func @transform_5(%arg0: i32) -> (i32, i32) {
    %c0_i32 = arith.constant 0 : i32
    %c0_i32_0 = arith.constant 0 : i32
    %c0_i32_1 = arith.constant 0 : i32
    return %c0_i32, %c0_i32_0 : i32, i32
  }
  func.func @transform_6(%arg0: i32) -> (i32, i32) {
    %c0_i32 = arith.constant 0 : i32
    %c0_i32_0 = arith.constant 0 : i32
    %c0_i32_1 = arith.constant 0 : i32
    return %c0_i32, %c0_i32_0 : i32, i32
  }
  func.func @transform_7(%arg0: i32) -> (i32, i32) {
    %c0_i32 = arith.constant 0 : i32
    %c0_i32_0 = arith.constant 0 : i32
    %c0_i32_1 = arith.constant 0 : i32
    return %c0_i32, %c0_i32_0 : i32, i32
  }
  func.func @transform_8(%arg0: i32) -> (i32, i32) {
    %c0_i32 = arith.constant 0 : i32
    %c0_i32_0 = arith.constant 0 : i32
    %c0_i32_1 = arith.constant 0 : i32
    return %c0_i32, %c0_i32_0 : i32, i32
  }
  func.func @transform_9(%arg0: i32) -> (i32, i32) {
    %c0_i32 = arith.constant 0 : i32
    %c0_i32_0 = arith.constant 0 : i32
    %c0_i32_1 = arith.constant 0 : i32
    return %c0_i32, %c0_i32_0 : i32, i32
  }
  func.func @transform_10(%arg0: i32) -> (i32, i32) {
    %c0_i32 = arith.constant 0 : i32
    %c0_i32_0 = arith.constant 0 : i32
    %c0_i32_1 = arith.constant 0 : i32
    return %c0_i32, %c0_i32_0 : i32, i32
  }
  func.func @transform_11(%arg0: i32) -> (i32, i32) {
    %c0_i32 = arith.constant 0 : i32
    %c0_i32_0 = arith.constant 0 : i32
    %c0_i32_1 = arith.constant 0 : i32
    return %c0_i32, %c0_i32_0 : i32, i32
  }
  func.func @transform_12(%arg0: i32) -> (i32, i32) {
    %c0_i32 = arith.constant 0 : i32
    %c0_i32_0 = arith.constant 0 : i32
    %c0_i32_1 = arith.constant 0 : i32
    return %c0_i32, %c0_i32_0 : i32, i32
  }
  func.func @transform_13(%arg0: i32) -> (i32, i32) {
    %c0_i32 = arith.constant 0 : i32
    %c0_i32_0 = arith.constant 0 : i32
    %c0_i32_1 = arith.constant 0 : i32
    return %c0_i32, %c0_i32_0 : i32, i32
  }
  func.func @transform_14(%arg0: i32) -> (i32, i32) {
    %c0_i32 = arith.constant 0 : i32
    %c0_i32_0 = arith.constant 0 : i32
    %c0_i32_1 = arith.constant 0 : i32
    return %c0_i32, %c0_i32_0 : i32, i32
  }
  func.func @transform_15(%arg0: i32) -> (i32, i32) {
    %c0_i32 = arith.constant 0 : i32
    %c0_i32_0 = arith.constant 0 : i32
    %c0_i32_1 = arith.constant 0 : i32
    return %c0_i32, %c0_i32_0 : i32, i32
  }
  func.func @transform_16(%arg0: i32) -> (i32, i32) {
    %c0_i32 = arith.constant 0 : i32
    %c0_i32_0 = arith.constant 0 : i32
    %c0_i32_1 = arith.constant 0 : i32
    return %c0_i32, %c0_i32_0 : i32, i32
  }
  func.func @transform_17(%arg0: i32) -> (i32, i32) {
    %c0_i32 = arith.constant 0 : i32
    %c0_i32_0 = arith.constant 0 : i32
    %c0_i32_1 = arith.constant 0 : i32
    return %c0_i32, %c0_i32_0 : i32, i32
  }
  func.func @transform_18(%arg0: i32) -> (i32, i32, i32) {
    %c0_i32 = arith.constant 0 : i32
    %c0_i32_0 = arith.constant 0 : i32
    %c0_i32_1 = arith.constant 0 : i32
    %c0_i32_2 = arith.constant 0 : i32
    return %c0_i32, %c0_i32_0, %c0_i32_1 : i32, i32, i32
  }
}

</mosaic_0001>

<llo_original>
// kernel: upblock_pallas.1
$region0: #{upblock_pallas.1}
  #allocation0 [shape = 'u32[]', space=smem, size = 0x4, offset = 0x4, fixed_abs, tag = 'smem constant byte address 0x4 - core index']
  #allocation1 [shape = 'u32[144,128]{1,0:T(1,128)}', space=vmem, size = 0x12000, scoped, tag = 'internal scratch']
  #allocation2 [shape = 'f32[2,10,10,64]{3,2,1,0:T(8,128)}', space=vmem, size = 0x28000, scoped, tag = 'scratch operand']
  #allocation3 [shape = 'f32[2,10,10,32]{3,2,1,0:T(8,128)}', space=vmem, size = 0x28000, scoped, tag = 'scratch operand']
  %s0 = inlined_call_operand.vmem [shape: f32[2,64,64], index: 0, kind: input, shape index: {}]
  %s1 = inlined_call_operand.vmem [shape: f32[2,32], index: 1, kind: input, shape index: {}]
  %s2 = inlined_call_operand.vmem [shape: f32[1,64], index: 2, kind: input, shape index: {}]
  %s3 = inlined_call_operand.vmem [shape: f32[1,64], index: 3, kind: input, shape index: {}]
  %s4 = inlined_call_operand.vmem [shape: f32[64,32], index: 4, kind: input, shape index: {}]
  %s5 = inlined_call_operand.vmem [shape: f32[32,64], index: 5, kind: input, shape index: {}]
  %s6 = inlined_call_operand.vmem [shape: bf16[576,32], index: 6, kind: input, shape index: {}]
  %s7 = inlined_call_operand.vmem [shape: f32[1,32], index: 7, kind: input, shape index: {}]
  %s8 = inlined_call_operand.vmem [shape: f32[1,32], index: 8, kind: input, shape index: {}]
  %s9 = inlined_call_operand.vmem [shape: f32[32,32], index: 9, kind: input, shape index: {}, may-alias: {9,10}]
  %s10 = inlined_call_operand.vmem [shape: f32[32,32], index: 10, kind: input, shape index: {}, may-alias: {9,10}]
  %s11 = inlined_call_operand.vmem [shape: bf16[288,32], index: 11, kind: input, shape index: {}]
  %s12 = inlined_call_operand.vmem [shape: f32[1,32], index: 12, kind: input, shape index: {}]
  %s13 = inlined_call_operand.vmem [shape: bf16[64,32], index: 13, kind: input, shape index: {}]
  %s14 = inlined_call_operand.vmem [shape: bf16[32,96], index: 14, kind: input, shape index: {}]
  %s15 = inlined_call_operand.vmem [shape: f32[1,96], index: 15, kind: input, shape index: {}]
  %s16 = inlined_call_operand.vmem [shape: bf16[32,32], index: 16, kind: input, shape index: {}]
  %s17 = inlined_call_operand.vmem [shape: f32[1,32], index: 17, kind: input, shape index: {}]
  %s18 = inlined_call_operand.hbm [shape: f32[2,64,32], index: 18, kind: output, shape index: {}]
  %s19 = sld [smem:[#allocation0]]
  $region82: #{upblock_pallas.1} parent=0
    _
  %s21 = ssub.s32 1, %s19
  %s22 = scalar_select 0, %s21, %s19
  $region1: #{upblock_pallas.1} parent=0
    #allocation4 [shape = 'u8[65536]{0}', space=vmem, size = 0x10000, scoped, tag = 'output window, operand 0, single buffered']
    #allocation5 [shape = 's32[1]{0}', space=sflag, size = 0x4, scoped, tag = 'scoped memory for upblock_pallas.1']
    %23 = vsyncpa [#allocation5], 0
    // Predicated region
    $region2: #{upblock_pallas.1} parent=1 // pred_check
      _
    $region3: #{upblock_pallas.1} parent=1 // pred_check_branch
      %25 = sbr.rel (0) target = $region5
    $region4: #{upblock_pallas.1} parent=1 // pred_region
      _
    $region5: #{upblock_pallas.1} parent=1 // pred_fallthru
      _
    // Predicated region
    $region6: #{upblock_pallas.1} parent=1 // pred_check
      _
    $region7: #{upblock_pallas.1} parent=1 // pred_check_branch
      %27 = sbr.rel (0) target = $region9
    $region8: #{upblock_pallas.1} parent=1 // pred_region
      _
    $region9: #{upblock_pallas.1} parent=1 // pred_fallthru
      _
    // Predicated region
    $region10: #{upblock_pallas.1} parent=1 // pred_check
      _
    $region11: #{upblock_pallas.1} parent=1 // pred_check_branch
      %29 = sbr.rel (0) target = $region13
    $region12: #{upblock_pallas.1} parent=1 // pred_region
      _
    $region13: #{upblock_pallas.1} parent=1 // pred_fallthru
      _
    // Predicated region
    $region14: #{upblock_pallas.1} parent=1 // pred_check
      _
    $region15: #{upblock_pallas.1} parent=1 // pred_check_branch
      %31 = sbr.rel (0) target = $region17
    $region16: #{upblock_pallas.1} parent=1 // pred_region
      _
    $region17: #{upblock_pallas.1} parent=1 // pred_fallthru
      _
    // Predicated region
    $region18: #{upblock_pallas.1} parent=1 // pred_check
      _
    $region19: #{upblock_pallas.1} parent=1 // pred_check_branch
      %33 = sbr.rel (0) target = $region21
    $region20: #{upblock_pallas.1} parent=1 // pred_region
      _
    $region21: #{upblock_pallas.1} parent=1 // pred_fallthru
      _
    // Predicated region
    $region22: #{upblock_pallas.1} parent=1 // pred_check
      _
    $region23: #{upblock_pallas.1} parent=1 // pred_check_branch
      %35 = sbr.rel (0) target = $region25
    $region24: #{upblock_pallas.1} parent=1 // pred_region
      _
    $region25: #{upblock_pallas.1} parent=1 // pred_fallthru
      _
    // Predicated region
    $region26: #{upblock_pallas.1} parent=1 // pred_check
      _
    $region27: #{upblock_pallas.1} parent=1 // pred_check_branch
      %37 = sbr.rel (0) target = $region29
    $region28: #{upblock_pallas.1} parent=1 // pred_region
      _
    $region29: #{upblock_pallas.1} parent=1 // pred_fallthru
      _
    // Predicated region
    $region30: #{upblock_pallas.1} parent=1 // pred_check
      _
    $region31: #{upblock_pallas.1} parent=1 // pred_check_branch
      %39 = sbr.rel (0) target = $region33
    $region32: #{upblock_pallas.1} parent=1 // pred_region
      _
    $region33: #{upblock_pallas.1} parent=1 // pred_fallthru
      _
    // Predicated region
    $region34: #{upblock_pallas.1} parent=1 // pred_check
      _
    $region35: #{upblock_pallas.1} parent=1 // pred_check_branch
      %41 = sbr.rel (0) target = $region37
    $region36: #{upblock_pallas.1} parent=1 // pred_region
      _
    $region37: #{upblock_pallas.1} parent=1 // pred_fallthru
      _
    // Predicated region
    $region38: #{upblock_pallas.1} parent=1 // pred_check
      _
    $region39: #{upblock_pallas.1} parent=1 // pred_check_branch
      %43 = sbr.rel (0) target = $region41
    $region40: #{upblock_pallas.1} parent=1 // pred_region
      _
    $region41: #{upblock_pallas.1} parent=1 // pred_fallthru
      _
    // Predicated region
    $region42: #{upblock_pallas.1} parent=1 // pred_check
      _
    $region43: #{upblock_pallas.1} parent=1 // pred_check_branch
      %45 = sbr.rel (0) target = $region45
    $region44: #{upblock_pallas.1} parent=1 // pred_region
      _
    $region45: #{upblock_pallas.1} parent=1 // pred_fallthru
      _
    // Predicated region
    $region46: #{upblock_pallas.1} parent=1 // pred_check
      _
    $region47: #{upblock_pallas.1} parent=1 // pred_check_branch
      %47 = sbr.rel (0) target = $region49
    $region48: #{upblock_pallas.1} parent=1 // pred_region
      _
    $region49: #{upblock_pallas.1} parent=1 // pred_fallthru
      _
    // Predicated region
    $region50: #{upblock_pallas.1} parent=1 // pred_check
      _
    $region51: #{upblock_pallas.1} parent=1 // pred_check_branch
      %49 = sbr.rel (0) target = $region53
    $region52: #{upblock_pallas.1} parent=1 // pred_region
      _
    $region53: #{upblock_pallas.1} parent=1 // pred_fallthru
      _
    // Predicated region
    $region54: #{upblock_pallas.1} parent=1 // pred_check
      _
    $region55: #{upblock_pallas.1} parent=1 // pred_check_branch
      %51 = sbr.rel (0) target = $region57
    $region56: #{upblock_pallas.1} parent=1 // pred_region
      _
    $region57: #{upblock_pallas.1} parent=1 // pred_fallthru
      _
    // Predicated region
    $region58: #{upblock_pallas.1} parent=1 // pred_check
      _
    $region59: #{upblock_pallas.1} parent=1 // pred_check_branch
      %53 = sbr.rel (0) target = $region61
    $region60: #{upblock_pallas.1} parent=1 // pred_region
      _
    $region61: #{upblock_pallas.1} parent=1 // pred_fallthru
      _
    // Predicated region
    $region62: #{upblock_pallas.1} parent=1 // pred_check
      _
    $region63: #{upblock_pallas.1} parent=1 // pred_check_branch
      %55 = sbr.rel (0) target = $region65
    $region64: #{upblock_pallas.1} parent=1 // pred_region
      _
    $region65: #{upblock_pallas.1} parent=1 // pred_fallthru
      _
    // Predicated region
    $region66: #{upblock_pallas.1} parent=1 // pred_check
      _
    $region67: #{upblock_pallas.1} parent=1 // pred_check_branch
      %57 = sbr.rel (0) target = $region69
    $region68: #{upblock_pallas.1} parent=1 // pred_region
      _
    $region69: #{upblock_pallas.1} parent=1 // pred_fallthru
      _
    // Predicated region
    $region70: #{upblock_pallas.1} parent=1 // pred_check
      _
    $region71: #{upblock_pallas.1} parent=1 // pred_check_branch
      %59 = sbr.rel (0) target = $region73
    $region72: #{upblock_pallas.1} parent=1 // pred_region
      _
    $region73: #{upblock_pallas.1} parent=1 // pred_fallthru
      _
    %v61 = vld [vmem:[%s0] sm:$0xff]
    %v62 = vld [vmem:[%s0 + $0x8] sm:$0xff]
    %v63 = vld [vmem:[%s0 + $0x10] sm:$0xff]
    %v64 = vld [vmem:[%s0 + $0x18] sm:$0xff]
    %v65 = vld [vmem:[%s0 + $0x20] sm:$0xff]
    %v66 = vld [vmem:[%s0 + $0x28] sm:$0xff]
    %v67 = vld [vmem:[%s0 + $0x30] sm:$0xff]
    %v68 = vld [vmem:[%s0 + $0x38] sm:$0xff]
    %v69 = vld [vmem:[%s0 + $0x40] sm:$0xff]
    %v70 = vld [vmem:[%s0 + $0x48] sm:$0xff]
    %v71 = vld [vmem:[%s0 + $0x50] sm:$0xff]
    %v72 = vld [vmem:[%s0 + $0x58] sm:$0xff]
    %v73 = vld [vmem:[%s0 + $0x60] sm:$0xff]
    %v74 = vld [vmem:[%s0 + $0x68] sm:$0xff]
    %v75 = vld [vmem:[%s0 + $0x70] sm:$0xff]
    %v76 = vld [vmem:[%s0 + $0x78] sm:$0xff]
    %v77 = vld [vmem:[%s2] sm:$0x1]
    %v78 = vld [vmem:[%s3] sm:$0x1]
    %v79 = vld [vmem:[%s4] sm:$0xff]
    %v80 = vld [vmem:[%s4 + $0x8] sm:$0xff]
    %v81 = vld [vmem:[%s4 + $0x10] sm:$0xff]
    %v82 = vld [vmem:[%s4 + $0x18] sm:$0xff]
    %v83 = vld [vmem:[%s4 + $0x20] sm:$0xff]
    %v84 = vld [vmem:[%s4 + $0x28] sm:$0xff]
    %v85 = vld [vmem:[%s4 + $0x30] sm:$0xff]
    %v86 = vld [vmem:[%s4 + $0x38] sm:$0xff]
    %v87 = vld [vmem:[%s5] sm:$0xff]
    %v88 = vld [vmem:[%s5 + $0x8] sm:$0xff]
    %v89 = vld [vmem:[%s5 + $0x10] sm:$0xff]
    %v90 = vld [vmem:[%s5 + $0x18] sm:$0xff]
    %vm91 = vcmask 523264
    %v92 = vsel %vm91, %v61, 0.0
    %v93 = vsel %vm91, %v62, 0.0
    %v94 = vadd.f32 %v92, %v93
    %v95 = vsel %vm91, %v63, 0.0
    %v96 = vadd.f32 %v94, %v95
    %v97 = vsel %vm91, %v64, 0.0
    %v98 = vadd.f32 %v96, %v97
    %v99 = vsel %vm91, %v65, 0.0
    %v100 = vadd.f32 %v98, %v99
    %v101 = vsel %vm91, %v66, 0.0
    %v102 = vadd.f32 %v100, %v101
    %v103 = vsel %vm91, %v67, 0.0
    %v104 = vadd.f32 %v102, %v103
    %v105 = vsel %vm91, %v68, 0.0
    %v106 = vadd.f32 %v104, %v105
    %v107 = vrot.slane %v106, 4
    %v108 = vadd.f32 %v106, %v107
    %v109 = vrot.slane %v108, 2
    %v110 = vadd.f32 %v108, %v109
    %v111 = vrot.slane %v110, 1
    %v112 = vadd.f32 %v110, %v111
    %v113 = vsel %vm91, %v69, 0.0
    %v114 = vsel %vm91, %v70, 0.0
    %v115 = vadd.f32 %v113, %v114
    %v116 = vsel %vm91, %v71, 0.0
    %v117 = vadd.f32 %v115, %v116
    %v118 = vsel %vm91, %v72, 0.0
    %v119 = vadd.f32 %v117, %v118
    %v120 = vsel %vm91, %v73, 0.0
    %v121 = vadd.f32 %v119, %v120
    %v122 = vsel %vm91, %v74, 0.0
    %v123 = vadd.f32 %v121, %v122
    %v124 = vsel %vm91, %v75, 0.0
    %v125 = vadd.f32 %v123, %v124
    %v126 = vsel %vm91, %v76, 0.0
    %v127 = vadd.f32 %v125, %v126
    %v128 = vrot.slane %v127, 4
    %v129 = vadd.f32 %v127, %v128
    %v130 = vrot.slane %v129, 2
    %v131 = vadd.f32 %v129, %v130
    %v132 = vrot.slane %v131, 1
    %v133 = vadd.f32 %v131, %v132
    %v134 = vmul.f32 %v61, %v61
    %v135 = vmul.f32 %v62, %v62
    %v136 = vmul.f32 %v63, %v63
    %v137 = vmul.f32 %v64, %v64
    %v138 = vmul.f32 %v65, %v65
    %v139 = vmul.f32 %v66, %v66
    %v140 = vmul.f32 %v67, %v67
    %v141 = vmul.f32 %v68, %v68
    %v142 = vmul.f32 %v69, %v69
    %v143 = vmul.f32 %v70, %v70
    %v144 = vmul.f32 %v71, %v71
    %v145 = vmul.f32 %v72, %v72
    %v146 = vmul.f32 %v73, %v73
    %v147 = vmul.f32 %v74, %v74
    %v148 = vmul.f32 %v75, %v75
    %v149 = vmul.f32 %v76, %v76
    %v150 = vsel %vm91, %v134, 0.0
    %v151 = vsel %vm91, %v135, 0.0
    %v152 = vadd.f32 %v150, %v151
    %v153 = vsel %vm91, %v136, 0.0
    %v154 = vadd.f32 %v152, %v153
    %v155 = vsel %vm91, %v137, 0.0
    %v156 = vadd.f32 %v154, %v155
    %v157 = vsel %vm91, %v138, 0.0
    %v158 = vadd.f32 %v156, %v157
    %v159 = vsel %vm91, %v139, 0.0
    %v160 = vadd.f32 %v158, %v159
    %v161 = vsel %vm91, %v140, 0.0
    %v162 = vadd.f32 %v160, %v161
    %v163 = vsel %vm91, %v141, 0.0
    %v164 = vadd.f32 %v162, %v163
    %v165 = vrot.slane %v164, 4
    %v166 = vadd.f32 %v164, %v165
    %v167 = vrot.slane %v166, 2
    %v168 = vadd.f32 %v166, %v167
    %v169 = vrot.slane %v168, 1
    %v170 = vadd.f32 %v168, %v169
    %v171 = vsel %vm91, %v142, 0.0
    %v172 = vsel %vm91, %v143, 0.0
    %v173 = vadd.f32 %v171, %v172
    %v174 = vsel %vm91, %v144, 0.0
    %v175 = vadd.f32 %v173, %v174
    %v176 = vsel %vm91, %v145, 0.0
    %v177 = vadd.f32 %v175, %v176
    %v178 = vsel %vm91, %v146, 0.0
    %v179 = vadd.f32 %v177, %v178
    %v180 = vsel %vm91, %v147, 0.0
    %v181 = vadd.f32 %v179, %v180
    %v182 = vsel %vm91, %v148, 0.0
    %v183 = vadd.f32 %v181, %v182
    %v184 = vsel %vm91, %v149, 0.0
    %v185 = vadd.f32 %v183, %v184
    %v186 = vrot.slane %v185, 4
    %v187 = vadd.f32 %v185, %v186
    %v188 = vrot.slane %v187, 2
    %v189 = vadd.f32 %v187, %v188
    %v190 = vrot.slane %v189, 1
    %v191 = vadd.f32 %v189, %v190
    %vm194 = vcmask 1041409
    %v195 = vsel %vm194, %v133, %v112
    %v196 = vsel %vm91, %v195, 0
    %198 = vmatprep.subr.mxu0 0.0
    %199 = vmatpush1.msra.mxu0 %v79
    %200 = vmatprep.subr.mxu0 0.0
    %201 = vmatpush1.msra.mxu0 %v80
    %202 = vmatprep.subr.mxu0 0.0
    %203 = vmatpush1.msra.mxu0 %v81
    %204 = vmatprep.subr.mxu0 0.0
    %205 = vmatpush1.msra.mxu0 %v82
    %206 = vmatprep.subr.mxu0 0.0
    %207 = vmatpush1.msra.mxu0 %v83
    %208 = vmatprep.subr.mxu0 0.0
    %209 = vmatpush1.msra.mxu0 %v84
    %210 = vmatprep.subr.mxu0 0.0
    %211 = vmatpush1.msra.mxu0 %v85
    %212 = vmatprep.subr.mxu0 0.0
    %213 = vmatpush1.msra.mxu0 %v86
    %214 = vmatprep.subr.mxu0 0.0
    %215 = vmatpush1.msra.mxu0 0.0
    %216 = vmatprep.subr.mxu0 0.0
    %217 = vmatpush1.msra.mxu0 0.0
    %218 = vmatprep.subr.mxu0 0.0
    %219 = vmatpush1.msra.mxu0 0.0
    %220 = vmatprep.subr.mxu0 0.0
    %221 = vmatpush1.msra.mxu0 0.0
    %222 = vmatprep.subr.mxu0 0.0
    %223 = vmatpush1.msra.mxu0 0.0
    %224 = vmatprep.subr.mxu0 0.0
    %225 = vmatpush1.msra.mxu0 0.0
    %226 = vmatprep.subr.mxu0 0.0
    %227 = vmatpush1.msra.mxu0 0.0
    %228 = vmatprep.subr.mxu0 0.0
    %229 = vmatpush1.msra.mxu0 0.0
    %230 = vmatprep.subr.mxu0 0.0
    %231 = vmatpush1.msra.mxu0 0.0
    %232 = vmatprep.subr.mxu0 0.0
    %233 = vmatpush1.msra.mxu0 0.0
    %234 = vmatprep.subr.mxu0 0.0
    %235 = vmatpush1.msra.mxu0 0.0
    %236 = vmatprep.subr.mxu0 0.0
    %237 = vmatpush1.msra.mxu0 0.0
    %238 = vmatprep.subr.mxu0 0.0
    %239 = vmatpush1.msra.mxu0 0.0
    %240 = vmatprep.subr.mxu0 0.0
    %241 = vmatpush1.msra.mxu0 0.0
    %242 = vmatprep.subr.mxu0 0.0
    %243 = vmatpush1.msra.mxu0 0.0
    %244 = vmatprep.subr.mxu0 0.0
    %245 = vmatpush1.msra.mxu0 0.0
    %246 = vmatprep.subr.mxu0 0.0
    %247 = vmatpush1.msra.mxu0 0.0
    %248 = vmatprep.subr.mxu0 0.0
    %249 = vmatpush1.msra.mxu0 0.0
    %250 = vmatprep.subr.mxu0 0.0
    %251 = vmatpush1.msra.mxu0 0.0
    %252 = vmatprep.subr.mxu0 0.0
    %253 = vmatpush1.msra.mxu0 0.0
    %254 = vmatprep.subr.mxu0 0.0
    %255 = vmatpush1.msra.mxu0 0.0
    %256 = vmatprep.subr.mxu0 0.0
    %257 = vmatpush1.msra.mxu0 0.0
    %258 = vmatprep.subr.mxu0 0.0
    %259 = vmatpush1.msra.mxu0 0.0
    %260 = vmatprep.subr.mxu0 0.0
    %261 = vmatpush1.msra.mxu0 0.0
    %262 = vmatprep.mubr.f32.mxu0 0.0
    %263 = vmatmul.mubr.f32.gmra.mrb[0].mxu0 %v196
    %v264 = vpop.f32.mrb[0].mxu0
    %v265 = vadd.f32 0.0, %v264
    %v266 = vpop.f32.mrb[0].mxu0
    %267 = vdwg.mxu0
    %v268 = vrcp.pop 128.0
    %v269 = vmul.f32 %v265, %v268
    %v272 = vsel %vm194, %v191, %v170
    %v273 = vsel %vm91, %v272, 0
    %275 = vmatprep.subr.mxu0 0.0
    %276 = vmatpush1.msra.mxu0 %v79
    %277 = vmatprep.subr.mxu0 0.0
    %278 = vmatpush1.msra.mxu0 %v80
    %279 = vmatprep.subr.mxu0 0.0
    %280 = vmatpush1.msra.mxu0 %v81
    %281 = vmatprep.subr.mxu0 0.0
    %282 = vmatpush1.msra.mxu0 %v82
    %283 = vmatprep.subr.mxu0 0.0
    %284 = vmatpush1.msra.mxu0 %v83
    %285 = vmatprep.subr.mxu0 0.0
    %286 = vmatpush1.msra.mxu0 %v84
    %287 = vmatprep.subr.mxu0 0.0
    %288 = vmatpush1.msra.mxu0 %v85
    %289 = vmatprep.subr.mxu0 0.0
    %290 = vmatpush1.msra.mxu0 %v86
    %291 = vmatprep.subr.mxu0 0.0
    %292 = vmatpush1.msra.mxu0 0.0
    %293 = vmatprep.subr.mxu0 0.0
    %294 = vmatpush1.msra.mxu0 0.0
    %295 = vmatprep.subr.mxu0 0.0
    %296 = vmatpush1.msra.mxu0 0.0
    %297 = vmatprep.subr.mxu0 0.0
    %298 = vmatpush1.msra.mxu0 0.0
    %299 = vmatprep.subr.mxu0 0.0
    %300 = vmatpush1.msra.mxu0 0.0
    %301 = vmatprep.subr.mxu0 0.0
    %302 = vmatpush1.msra.mxu0 0.0
    %303 = vmatprep.subr.mxu0 0.0
    %304 = vmatpush1.msra.mxu0 0.0
    %305 = vmatprep.subr.mxu0 0.0
    %306 = vmatpush1.msra.mxu0 0.0
    %307 = vmatprep.subr.mxu0 0.0
    %308 = vmatpush1.msra.mxu0 0.0
    %309 = vmatprep.subr.mxu0 0.0
    %310 = vmatpush1.msra.mxu0 0.0
    %311 = vmatprep.subr.mxu0 0.0
    %312 = vmatpush1.msra.mxu0 0.0
    %313 = vmatprep.subr.mxu0 0.0
    %314 = vmatpush1.msra.mxu0 0.0
    %315 = vmatprep.subr.mxu0 0.0
    %316 = vmatpush1.msra.mxu0 0.0
    %317 = vmatprep.subr.mxu0 0.0
    %318 = vmatpush1.msra.mxu0 0.0
    %319 = vmatprep.subr.mxu0 0.0
    %320 = vmatpush1.msra.mxu0 0.0
    %321 = vmatprep.subr.mxu0 0.0
    %322 = vmatpush1.msra.mxu0 0.0
    %323 = vmatprep.subr.mxu0 0.0
    %324 = vmatpush1.msra.mxu0 0.0
    %325 = vmatprep.subr.mxu0 0.0
    %326 = vmatpush1.msra.mxu0 0.0
    %327 = vmatprep.subr.mxu0 0.0
    %328 = vmatpush1.msra.mxu0 0.0
    %329 = vmatprep.subr.mxu0 0.0
    %330 = vmatpush1.msra.mxu0 0.0
    %331 = vmatprep.subr.mxu0 0.0
    %332 = vmatpush1.msra.mxu0 0.0
    %333 = vmatprep.subr.mxu0 0.0
    %334 = vmatpush1.msra.mxu0 0.0
    %335 = vmatprep.subr.mxu0 0.0
    %336 = vmatpush1.msra.mxu0 0.0
    %337 = vmatprep.subr.mxu0 0.0
    %338 = vmatpush1.msra.mxu0 0.0
    %339 = vmatprep.mubr.f32.mxu0 0.0
    %340 = vmatmul.mubr.f32.gmra.mrb[0].mxu0 %v273
    %v341 = vpop.f32.mrb[0].mxu0
    %v342 = vadd.f32 0.0, %v341
    %v343 = vpop.f32.mrb[0].mxu0
    %344 = vdwg.mxu0
    %v345 = vmul.f32 %v342, %v268
    %v346 = vmul.f32 %v269, %v269
    %v347 = vsub.f32 %v345, %v346
    %v348 = vadd.f32 %v347, 1e-05
    %v349 = vrsqrt.pop %v348
    %vm350 = vcmask 261120
    %v352 = vsel %vm350, %v269, 0
    %354 = vmatprep.subr.mxu0 0.0
    %355 = vmatpush1.msra.mxu0 %v87
    %356 = vmatprep.subr.mxu0 0.0
    %357 = vmatpush1.msra.mxu0 %v88
    %358 = vmatprep.subr.mxu0 0.0
    %359 = vmatpush1.msra.mxu0 %v89
    %360 = vmatprep.subr.mxu0 0.0
    %361 = vmatpush1.msra.mxu0 %v90
    %362 = vmatprep.subr.mxu0 0.0
    %363 = vmatpush1.msra.mxu0 0.0
    %364 = vmatprep.subr.mxu0 0.0
    %365 = vmatpush1.msra.mxu0 0.0
    %366 = vmatprep.subr.mxu0 0.0
    %367 = vmatpush1.msra.mxu0 0.0
    %368 = vmatprep.subr.mxu0 0.0
    %369 = vmatpush1.msra.mxu0 0.0
    %370 = vmatprep.subr.mxu0 0.0
    %371 = vmatpush1.msra.mxu0 0.0
    %372 = vmatprep.subr.mxu0 0.0
    %373 = vmatpush1.msra.mxu0 0.0
    %374 = vmatprep.subr.mxu0 0.0
    %375 = vmatpush1.msra.mxu0 0.0
    %376 = vmatprep.subr.mxu0 0.0
    %377 = vmatpush1.msra.mxu0 0.0
    %378 = vmatprep.subr.mxu0 0.0
    %379 = vmatpush1.msra.mxu0 0.0
    %380 = vmatprep.subr.mxu0 0.0
    %381 = vmatpush1.msra.mxu0 0.0
    %382 = vmatprep.subr.mxu0 0.0
    %383 = vmatpush1.msra.mxu0 0.0
    %384 = vmatprep.subr.mxu0 0.0
    %385 = vmatpush1.msra.mxu0 0.0
    %386 = vmatprep.subr.mxu0 0.0
    %387 = vmatpush1.msra.mxu0 0.0
    %388 = vmatprep.subr.mxu0 0.0
    %389 = vmatpush1.msra.mxu0 0.0
    %390 = vmatprep.subr.mxu0 0.0
    %391 = vmatpush1.msra.mxu0 0.0
    %392 = vmatprep.subr.mxu0 0.0
    %393 = vmatpush1.msra.mxu0 0.0
    %394 = vmatprep.subr.mxu0 0.0
    %395 = vmatpush1.msra.mxu0 0.0
    %396 = vmatprep.subr.mxu0 0.0
    %397 = vmatpush1.msra.mxu0 0.0
    %398 = vmatprep.subr.mxu0 0.0
    %399 = vmatpush1.msra.mxu0 0.0
    %400 = vmatprep.subr.mxu0 0.0
    %401 = vmatpush1.msra.mxu0 0.0
    %402 = vmatprep.subr.mxu0 0.0
    %403 = vmatpush1.msra.mxu0 0.0
    %404 = vmatprep.subr.mxu0 0.0
    %405 = vmatpush1.msra.mxu0 0.0
    %406 = vmatprep.subr.mxu0 0.0
    %407 = vmatpush1.msra.mxu0 0.0
    %408 = vmatprep.subr.mxu0 0.0
    %409 = vmatpush1.msra.mxu0 0.0
    %410 = vmatprep.subr.mxu0 0.0
    %411 = vmatpush1.msra.mxu0 0.0
    %412 = vmatprep.subr.mxu0 0.0
    %413 = vmatpush1.msra.mxu0 0.0
    %414 = vmatprep.subr.mxu0 0.0
    %415 = vmatpush1.msra.mxu0 0.0
    %416 = vmatprep.subr.mxu0 0.0
    %417 = vmatpush1.msra.mxu0 0.0
    %418 = vmatprep.mubr.f32.mxu0 0.0
    %419 = vmatmul.mubr.f32.gmra.mrb[0].mxu0 %v352
    %v420 = vpop.f32.mrb[0].mxu0
    %v421 = vadd.f32 0.0, %v420
    %v422 = vpop.f32.mrb[0].mxu0
    %423 = vdwg.mxu0
    %v425 = vsel %vm350, %v349, 0
    %427 = vmatprep.subr.mxu0 0.0
    %428 = vmatpush1.msra.mxu0 %v87
    %429 = vmatprep.subr.mxu0 0.0
    %430 = vmatpush1.msra.mxu0 %v88
    %431 = vmatprep.subr.mxu0 0.0
    %432 = vmatpush1.msra.mxu0 %v89
    %433 = vmatprep.subr.mxu0 0.0
    %434 = vmatpush1.msra.mxu0 %v90
    %435 = vmatprep.subr.mxu0 0.0
    %436 = vmatpush1.msra.mxu0 0.0
    %437 = vmatprep.subr.mxu0 0.0
    %438 = vmatpush1.msra.mxu0 0.0
    %439 = vmatprep.subr.mxu0 0.0
    %440 = vmatpush1.msra.mxu0 0.0
    %441 = vmatprep.subr.mxu0 0.0
    %442 = vmatpush1.msra.mxu0 0.0
    %443 = vmatprep.subr.mxu0 0.0
    %444 = vmatpush1.msra.mxu0 0.0
    %445 = vmatprep.subr.mxu0 0.0
    %446 = vmatpush1.msra.mxu0 0.0
    %447 = vmatprep.subr.mxu0 0.0
    %448 = vmatpush1.msra.mxu0 0.0
    %449 = vmatprep.subr.mxu0 0.0
    %450 = vmatpush1.msra.mxu0 0.0
    %451 = vmatprep.subr.mxu0 0.0
    %452 = vmatpush1.msra.mxu0 0.0
    %453 = vmatprep.subr.mxu0 0.0
    %454 = vmatpush1.msra.mxu0 0.0
    %455 = vmatprep.subr.mxu0 0.0
    %456 = vmatpush1.msra.mxu0 0.0
    %457 = vmatprep.subr.mxu0 0.0
    %458 = vmatpush1.msra.mxu0 0.0
    %459 = vmatprep.subr.mxu0 0.0
    %460 = vmatpush1.msra.mxu0 0.0
    %461 = vmatprep.subr.mxu0 0.0
    %462 = vmatpush1.msra.mxu0 0.0
    %463 = vmatprep.subr.mxu0 0.0
    %464 = vmatpush1.msra.mxu0 0.0
    %465 = vmatprep.subr.mxu0 0.0
    %466 = vmatpush1.msra.mxu0 0.0
    %467 = vmatprep.subr.mxu0 0.0
    %468 = vmatpush1.msra.mxu0 0.0
    %469 = vmatprep.subr.mxu0 0.0
    %470 = vmatpush1.msra.mxu0 0.0
    %471 = vmatprep.subr.mxu0 0.0
    %472 = vmatpush1.msra.mxu0 0.0
    %473 = vmatprep.subr.mxu0 0.0
    %474 = vmatpush1.msra.mxu0 0.0
    %475 = vmatprep.subr.mxu0 0.0
    %476 = vmatpush1.msra.mxu0 0.0
    %477 = vmatprep.subr.mxu0 0.0
    %478 = vmatpush1.msra.mxu0 0.0
    %479 = vmatprep.subr.mxu0 0.0
    %480 = vmatpush1.msra.mxu0 0.0
    %481 = vmatprep.subr.mxu0 0.0
    %482 = vmatpush1.msra.mxu0 0.0
    %483 = vmatprep.subr.mxu0 0.0
    %484 = vmatpush1.msra.mxu0 0.0
    %485 = vmatprep.subr.mxu0 0.0
    %486 = vmatpush1.msra.mxu0 0.0
    %487 = vmatprep.subr.mxu0 0.0
    %488 = vmatpush1.msra.mxu0 0.0
    %489 = vmatprep.subr.mxu0 0.0
    %490 = vmatpush1.msra.mxu0 0.0
    %491 = vmatprep.mubr.f32.mxu0 0.0
    %492 = vmatmul.mubr.f32.gmra.mrb[0].mxu0 %v425
    %v493 = vpop.f32.mrb[0].mxu0
    %v494 = vadd.f32 0.0, %v493
    %v495 = vpop.f32.mrb[0].mxu0
    %496 = vdwg.mxu0
    %v499 = vunpack.c.l.s4 1966171168
    %v500 = vunpack.c.0.s8 %v499
    %v501 = vlaneseq
    %v502 = vshrl.u32 %v501, 7
    %v503 = vsub.s32 %v500, %v502
    %v504 = vrot.slane %v421, %v503
    %v505 = vcombine.high %v504, %v504
    %v507 = vunpack.c.l.s4 1966171168
    %v508 = vunpack.c.0.s8 %v507
    %v509 = vlaneseq
    %v510 = vshrl.u32 %v509, 7
    %v511 = vsub.s32 %v508, %v510
    %v512 = vrot.slane %v504, %v511
    %v514 = vunpack.c.l.s4 1966171168
    %v515 = vunpack.c.0.s8 %v514
    %v516 = vlaneseq
    %v517 = vshrl.u32 %v516, 7
    %v518 = vsub.s32 %v515, %v517
    %v519 = vrot.slane %v505, %v518
    %v520 = vlaneseq
    %v521 = vshrl.u32 %v520, 7
    %v522 = vsub.s32 0, %v521
    %v523 = vrot.slane %v512, %v522
    %v524 = vlaneseq
    %v525 = vshrl.u32 %v524, 7
    %v526 = vsub.s32 0, %v525
    %v527 = vrot.slane %v519, %v526
    %v530 = vsub.f32 %v61, %v523
    %v531 = vsub.f32 %v62, %v523
    %v532 = vsub.f32 %v63, %v523
    %v533 = vsub.f32 %v64, %v523
    %v534 = vsub.f32 %v65, %v523
    %v535 = vsub.f32 %v66, %v523
    %v536 = vsub.f32 %v67, %v523
    %v537 = vsub.f32 %v68, %v523
    %v538 = vsub.f32 %v69, %v527
    %v539 = vsub.f32 %v70, %v527
    %v540 = vsub.f32 %v71, %v527
    %v541 = vsub.f32 %v72, %v527
    %v542 = vsub.f32 %v73, %v527
    %v543 = vsub.f32 %v74, %v527
    %v544 = vsub.f32 %v75, %v527
    %v545 = vsub.f32 %v76, %v527
    %v548 = vunpack.c.l.s4 1966171168
    %v549 = vunpack.c.0.s8 %v548
    %v550 = vlaneseq
    %v551 = vshrl.u32 %v550, 7
    %v552 = vsub.s32 %v549, %v551
    %v553 = vrot.slane %v494, %v552
    %v554 = vcombine.high %v553, %v553
    %v556 = vunpack.c.l.s4 1966171168
    %v557 = vunpack.c.0.s8 %v556
    %v558 = vlaneseq
    %v559 = vshrl.u32 %v558, 7
    %v560 = vsub.s32 %v557, %v559
    %v561 = vrot.slane %v553, %v560
    %v563 = vunpack.c.l.s4 1966171168
    %v564 = vunpack.c.0.s8 %v563
    %v565 = vlaneseq
    %v566 = vshrl.u32 %v565, 7
    %v567 = vsub.s32 %v564, %v566
    %v568 = vrot.slane %v554, %v567
    %v569 = vlaneseq
    %v570 = vshrl.u32 %v569, 7
    %v571 = vsub.s32 0, %v570
    %v572 = vrot.slane %v561, %v571
    %v573 = vlaneseq
    %v574 = vshrl.u32 %v573, 7
    %v575 = vsub.s32 0, %v574
    %v576 = vrot.slane %v568, %v575
    %v579 = vmul.f32 %v530, %v572
    %v580 = vmul.f32 %v531, %v572
    %v581 = vmul.f32 %v532, %v572
    %v582 = vmul.f32 %v533, %v572
    %v583 = vmul.f32 %v534, %v572
    %v584 = vmul.f32 %v535, %v572
    %v585 = vmul.f32 %v536, %v572
    %v586 = vmul.f32 %v537, %v572
    %v587 = vmul.f32 %v538, %v576
    %v588 = vmul.f32 %v539, %v576
    %v589 = vmul.f32 %v540, %v576
    %v590 = vmul.f32 %v541, %v576
    %v591 = vmul.f32 %v542, %v576
    %v592 = vmul.f32 %v543, %v576
    %v593 = vmul.f32 %v544, %v576
    %v594 = vmul.f32 %v545, %v576
    %v596 = vlaneseq
    %v597 = vshrl.u32 %v596, 7
    %v598 = vsub.s32 0, %v597
    %v599 = vrot.slane %v77, %v598
    %v601 = vmul.f32 %v579, %v599
    %v602 = vmul.f32 %v580, %v599
    %v603 = vmul.f32 %v581, %v599
    %v604 = vmul.f32 %v582, %v599
    %v605 = vmul.f32 %v583, %v599
    %v606 = vmul.f32 %v584, %v599
    %v607 = vmul.f32 %v585, %v599
    %v608 = vmul.f32 %v586, %v599
    %v609 = vmul.f32 %v587, %v599
    %v610 = vmul.f32 %v588, %v599
    %v611 = vmul.f32 %v589, %v599
    %v612 = vmul.f32 %v590, %v599
    %v613 = vmul.f32 %v591, %v599
    %v614 = vmul.f32 %v592, %v599
    %v615 = vmul.f32 %v593, %v599
    %v616 = vmul.f32 %v594, %v599
    %v618 = vlaneseq
    %v619 = vshrl.u32 %v618, 7
    %v620 = vsub.s32 0, %v619
    %v621 = vrot.slane %v78, %v620
    %v623 = vadd.f32 %v601, %v621
    %v624 = vadd.f32 %v602, %v621
    %v625 = vadd.f32 %v603, %v621
    %v626 = vadd.f32 %v604, %v621
    %v627 = vadd.f32 %v605, %v621
    %v628 = vadd.f32 %v606, %v621
    %v629 = vadd.f32 %v607, %v621
    %v630 = vadd.f32 %v608, %v621
    %v631 = vadd.f32 %v609, %v621
    %v632 = vadd.f32 %v610, %v621
    %v633 = vadd.f32 %v611, %v621
    %v634 = vadd.f32 %v612, %v621
    %v635 = vadd.f32 %v613, %v621
    %v636 = vadd.f32 %v614, %v621
    %v637 = vadd.f32 %v615, %v621
    %v638 = vadd.f32 %v616, %v621
    %v639 = vxor.u32 %v623, 2147483648
    %v640 = vxor.u32 %v624, 2147483648
    %v641 = vxor.u32 %v625, 2147483648
    %v642 = vxor.u32 %v626, 2147483648
    %v643 = vxor.u32 %v627, 2147483648
    %v644 = vxor.u32 %v628, 2147483648
    %v645 = vxor.u32 %v629, 2147483648
    %v646 = vxor.u32 %v630, 2147483648
    %v647 = vxor.u32 %v631, 2147483648
    %v648 = vxor.u32 %v632, 2147483648
    %v649 = vxor.u32 %v633, 2147483648
    %v650 = vxor.u32 %v634, 2147483648
    %v651 = vxor.u32 %v635, 2147483648
    %v652 = vxor.u32 %v636, 2147483648
    %v653 = vxor.u32 %v637, 2147483648
    %v654 = vxor.u32 %v638, 2147483648
    %v655 = vmul.f32 %v639, 1.442695
    %v656 = vpow.pop %v655
    %v657 = vmul.f32 %v640, 1.442695
    %v658 = vpow.pop %v657
    %v659 = vmul.f32 %v641, 1.442695
    %v660 = vpow.pop %v659
    %v661 = vmul.f32 %v642, 1.442695
    %v662 = vpow.pop %v661
    %v663 = vmul.f32 %v643, 1.442695
    %v664 = vpow.pop %v663
    %v665 = vmul.f32 %v644, 1.442695
    %v666 = vpow.pop %v665
    %v667 = vmul.f32 %v645, 1.442695
    %v668 = vpow.pop %v667
    %v669 = vmul.f32 %v646, 1.442695
    %v670 = vpow.pop %v669
    %v671 = vmul.f32 %v647, 1.442695
    %v672 = vpow.pop %v671
    %v673 = vmul.f32 %v648, 1.442695
    %v674 = vpow.pop %v673
    %v675 = vmul.f32 %v649, 1.442695
    %v676 = vpow.pop %v675
    %v677 = vmul.f32 %v650, 1.442695
    %v678 = vpow.pop %v677
    %v679 = vmul.f32 %v651, 1.442695
    %v680 = vpow.pop %v679
    %v681 = vmul.f32 %v652, 1.442695
    %v682 = vpow.pop %v681
    %v683 = vmul.f32 %v653, 1.442695
    %v684 = vpow.pop %v683
    %v685 = vmul.f32 %v654, 1.442695
    %v686 = vpow.pop %v685
    %v687 = vadd.f32 %v656, 1.0
    %v688 = vadd.f32 %v658, 1.0
    %v689 = vadd.f32 %v660, 1.0
    %v690 = vadd.f32 %v662, 1.0
    %v691 = vadd.f32 %v664, 1.0
    %v692 = vadd.f32 %v666, 1.0
    %v693 = vadd.f32 %v668, 1.0
    %v694 = vadd.f32 %v670, 1.0
    %v695 = vadd.f32 %v672, 1.0
    %v696 = vadd.f32 %v674, 1.0
    %v697 = vadd.f32 %v676, 1.0
    %v698 = vadd.f32 %v678, 1.0
    %v699 = vadd.f32 %v680, 1.0
    %v700 = vadd.f32 %v682, 1.0
    %v701 = vadd.f32 %v684, 1.0
    %v702 = vadd.f32 %v686, 1.0
    %v703 = vrcp.pop %v687
    %v704 = vmul.f32 1.0, %v703
    %v705 = vrcp.pop %v688
    %v706 = vmul.f32 1.0, %v705
    %v707 = vrcp.pop %v689
    %v708 = vmul.f32 1.0, %v707
    %v709 = vrcp.pop %v690
    %v710 = vmul.f32 1.0, %v709
    %v711 = vrcp.pop %v691
    %v712 = vmul.f32 1.0, %v711
    %v713 = vrcp.pop %v692
    %v714 = vmul.f32 1.0, %v713
    %v715 = vrcp.pop %v693
    %v716 = vmul.f32 1.0, %v715
    %v717 = vrcp.pop %v694
    %v718 = vmul.f32 1.0, %v717
    %v719 = vrcp.pop %v695
    %v720 = vmul.f32 1.0, %v719
    %v721 = vrcp.pop %v696
    %v722 = vmul.f32 1.0, %v721
    %v723 = vrcp.pop %v697
    %v724 = vmul.f32 1.0, %v723
    %v725 = vrcp.pop %v698
    %v726 = vmul.f32 1.0, %v725
    %v727 = vrcp.pop %v699
    %v728 = vmul.f32 1.0, %v727
    %v729 = vrcp.pop %v700
    %v730 = vmul.f32 1.0, %v729
    %v731 = vrcp.pop %v701
    %v732 = vmul.f32 1.0, %v731
    %v733 = vrcp.pop %v702
    %v734 = vmul.f32 1.0, %v733
    %v735 = vmul.f32 %v623, %v704
    %v736 = vmul.f32 %v624, %v706
    %v737 = vmul.f32 %v625, %v708
    %v738 = vmul.f32 %v626, %v710
    %v739 = vmul.f32 %v627, %v712
    %v740 = vmul.f32 %v628, %v714
    %v741 = vmul.f32 %v629, %v716
    %v742 = vmul.f32 %v630, %v718
    %v743 = vmul.f32 %v631, %v720
    %v744 = vmul.f32 %v632, %v722
    %v745 = vmul.f32 %v633, %v724
    %v746 = vmul.f32 %v634, %v726
    %v747 = vmul.f32 %v635, %v728
    %v748 = vmul.f32 %v636, %v730
    %v749 = vmul.f32 %v637, %v732
    %v750 = vmul.f32 %v638, %v734
    %751 = vst.msk [vmem:[#allocation2] sm:$0xff] %vm91, 0.0
    %vm752 = vcmask 517120
    %753 = vst.msk [vmem:[#allocation2 + $0x8] sm:$0x3] %vm752, 0.0
    %754 = vst.msk [vmem:[#allocation2 + $0x10] sm:$0xff] %vm91, 0.0
    %755 = vst.msk [vmem:[#allocation2 + $0x18] sm:$0x3] %vm752, 0.0
    %756 = vst.msk [vmem:[#allocation2 + $0x20] sm:$0xff] %vm91, 0.0
    %757 = vst.msk [vmem:[#allocation2 + $0x28] sm:$0x3] %vm752, 0.0
    %758 = vst.msk [vmem:[#allocation2 + $0x30] sm:$0xff] %vm91, 0.0
    %759 = vst.msk [vmem:[#allocation2 + $0x38] sm:$0x3] %vm752, 0.0
    %760 = vst.msk [vmem:[#allocation2 + $0x40] sm:$0xff] %vm91, 0.0
    %761 = vst.msk [vmem:[#allocation2 + $0x48] sm:$0x3] %vm752, 0.0
    %762 = vst.msk [vmem:[#allocation2 + $0x50] sm:$0xff] %vm91, 0.0
    %763 = vst.msk [vmem:[#allocation2 + $0x58] sm:$0x3] %vm752, 0.0
    %764 = vst.msk [vmem:[#allocation2 + $0x60] sm:$0xff] %vm91, 0.0
    %765 = vst.msk [vmem:[#allocation2 + $0x68] sm:$0x3] %vm752, 0.0
    %766 = vst.msk [vmem:[#allocation2 + $0x70] sm:$0xff] %vm91, 0.0
    %767 = vst.msk [vmem:[#allocation2 + $0x78] sm:$0x3] %vm752, 0.0
    %768 = vst.msk [vmem:[#allocation2 + $0x80] sm:$0xff] %vm91, 0.0
    %769 = vst.msk [vmem:[#allocation2 + $0x88] sm:$0x3] %vm752, 0.0
    %770 = vst.msk [vmem:[#allocation2 + $0x90] sm:$0xff] %vm91, 0.0
    %771 = vst.msk [vmem:[#allocation2 + $0x98] sm:$0x3] %vm752, 0.0
    %772 = vst.msk [vmem:[#allocation2 + $0xa0] sm:$0xff] %vm91, 0.0
    %773 = vst.msk [vmem:[#allocation2 + $0xa8] sm:$0x3] %vm752, 0.0
    %774 = vst.msk [vmem:[#allocation2 + $0xb0] sm:$0xff] %vm91, 0.0
    %775 = vst.msk [vmem:[#allocation2 + $0xb8] sm:$0x3] %vm752, 0.0
    %776 = vst.msk [vmem:[#allocation2 + $0xc0] sm:$0xff] %vm91, 0.0
    %777 = vst.msk [vmem:[#allocation2 + $0xc8] sm:$0x3] %vm752, 0.0
    %778 = vst.msk [vmem:[#allocation2 + $0xd0] sm:$0xff] %vm91, 0.0
    %779 = vst.msk [vmem:[#allocation2 + $0xd8] sm:$0x3] %vm752, 0.0
    %780 = vst.msk [vmem:[#allocation2 + $0xe0] sm:$0xff] %vm91, 0.0
    %781 = vst.msk [vmem:[#allocation2 + $0xe8] sm:$0x3] %vm752, 0.0
    %782 = vst.msk [vmem:[#allocation2 + $0xf0] sm:$0xff] %vm91, 0.0
    %783 = vst.msk [vmem:[#allocation2 + $0xf8] sm:$0x3] %vm752, 0.0
    %784 = vst.msk [vmem:[#allocation2 + $0x100] sm:$0xff] %vm91, 0.0
    %785 = vst.msk [vmem:[#allocation2 + $0x108] sm:$0x3] %vm752, 0.0
    %786 = vst.msk [vmem:[#allocation2 + $0x110] sm:$0xff] %vm91, 0.0
    %787 = vst.msk [vmem:[#allocation2 + $0x118] sm:$0x3] %vm752, 0.0
    %788 = vst.msk [vmem:[#allocation2 + $0x120] sm:$0xff] %vm91, 0.0
    %789 = vst.msk [vmem:[#allocation2 + $0x128] sm:$0x3] %vm752, 0.0
    %790 = vst.msk [vmem:[#allocation2 + $0x130] sm:$0xff] %vm91, 0.0
    %791 = vst.msk [vmem:[#allocation2 + $0x138] sm:$0x3] %vm752, 0.0
    %s792 = scalar_lea.vmem [#allocation2], 16
    %793 = vst.msk [vmem:[%s792 + $0x1] sm:$0xff] %vm91, %v735
    %794 = vst.msk [vmem:[%s792 + $0x11] sm:$0xff] %vm91, %v736
    %795 = vst.msk [vmem:[%s792 + $0x21] sm:$0xff] %vm91, %v737
    %796 = vst.msk [vmem:[%s792 + $0x31] sm:$0xff] %vm91, %v738
    %797 = vst.msk [vmem:[%s792 + $0x41] sm:$0xff] %vm91, %v739
    %798 = vst.msk [vmem:[%s792 + $0x51] sm:$0xff] %vm91, %v740
    %799 = vst.msk [vmem:[%s792 + $0x61] sm:$0xff] %vm91, %v741
    %800 = vst.msk [vmem:[%s792 + $0x71] sm:$0xff] %vm91, %v742
    %801 = vst.msk [vmem:[%s792 + $0xa1] sm:$0xff] %vm91, %v743
    %802 = vst.msk [vmem:[%s792 + $0xb1] sm:$0xff] %vm91, %v744
    %803 = vst.msk [vmem:[%s792 + $0xc1] sm:$0xff] %vm91, %v745
    %804 = vst.msk [vmem:[%s792 + $0xd1] sm:$0xff] %vm91, %v746
    %805 = vst.msk [vmem:[%s792 + $0xe1] sm:$0xff] %vm91, %v747
    %806 = vst.msk [vmem:[%s792 + $0xf1] sm:$0xff] %vm91, %v748
    %807 = vst.msk [vmem:[%s792 + $0x101] sm:$0xff] %vm91, %v749
    %808 = vst.msk [vmem:[%s792 + $0x111] sm:$0xff] %vm91, %v750
    %v809 = vld [vmem:[#allocation2] sm:$0xff]
    %v810 = vld [vmem:[#allocation2 + $0x10] sm:$0xff]
    %v811 = vld [vmem:[#allocation2 + $0x20] sm:$0xff]
    %v812 = vld [vmem:[#allocation2 + $0x30] sm:$0xff]
    %v813 = vld [vmem:[#allocation2 + $0x40] sm:$0xff]
    %v814 = vld [vmem:[#allocation2 + $0x50] sm:$0xff]
    %v815 = vld [vmem:[#allocation2 + $0x60] sm:$0xff]
    %v816 = vld [vmem:[#allocation2 + $0x70] sm:$0xff]
    %v817 = vld [vmem:[#allocation2 + $0xa0] sm:$0xff]
    %v818 = vld [vmem:[#allocation2 + $0xb0] sm:$0xff]
    %v819 = vld [vmem:[#allocation2 + $0xc0] sm:$0xff]
    %v820 = vld [vmem:[#allocation2 + $0xd0] sm:$0xff]
    %v821 = vld [vmem:[#allocation2 + $0xe0] sm:$0xff]
    %v822 = vld [vmem:[#allocation2 + $0xf0] sm:$0xff]
    %v823 = vld [vmem:[#allocation2 + $0x100] sm:$0xff]
    %v824 = vld [vmem:[#allocation2 + $0x110] sm:$0xff]
    %v825 = vpack.c.bf16 %v810, %v809
    %v826 = vpack.c.bf16 %v812, %v811
    %v827 = vpack.c.bf16 %v814, %v813
    %v828 = vpack.c.bf16 %v816, %v815
    %v829 = vpack.c.bf16 %v818, %v817
    %v830 = vpack.c.bf16 %v820, %v819
    %v831 = vpack.c.bf16 %v822, %v821
    %v832 = vpack.c.bf16 %v824, %v823
    %v833 = vld [vmem:[#allocation2 + $0x1] sm:$0xff]
    %v834 = vld [vmem:[#allocation2 + $0x11] sm:$0xff]
    %v835 = vld [vmem:[#allocation2 + $0x21] sm:$0xff]
    %v836 = vld [vmem:[#allocation2 + $0x31] sm:$0xff]
    %v837 = vld [vmem:[#allocation2 + $0x41] sm:$0xff]
    %v838 = vld [vmem:[#allocation2 + $0x51] sm:$0xff]
    %v839 = vld [vmem:[#allocation2 + $0x61] sm:$0xff]
    %v840 = vld [vmem:[#allocation2 + $0x71] sm:$0xff]
    %v841 = vld [vmem:[#allocation2 + $0xa1] sm:$0xff]
    %v842 = vld [vmem:[#allocation2 + $0xb1] sm:$0xff]
    %v843 = vld [vmem:[#allocation2 + $0xc1] sm:$0xff]
    %v844 = vld [vmem:[#allocation2 + $0xd1] sm:$0xff]
    %v845 = vld [vmem:[#allocation2 + $0xe1] sm:$0xff]
    %v846 = vld [vmem:[#allocation2 + $0xf1] sm:$0xff]
    %v847 = vld [vmem:[#allocation2 + $0x101] sm:$0xff]
    %v848 = vld [vmem:[#allocation2 + $0x111] sm:$0xff]
    %v849 = vpack.c.bf16 %v834, %v833
    %v850 = vpack.c.bf16 %v836, %v835
    %v851 = vpack.c.bf16 %v838, %v837
    %v852 = vpack.c.bf16 %v840, %v839
    %v853 = vpack.c.bf16 %v842, %v841
    %v854 = vpack.c.bf16 %v844, %v843
    %v855 = vpack.c.bf16 %v846, %v845
    %v856 = vpack.c.bf16 %v848, %v847
    %v857 = vld [vmem:[#allocation2 + $0x2] sm:$0xff]
    %v858 = vld [vmem:[#allocation2 + $0x12] sm:$0xff]
    %v859 = vld [vmem:[#allocation2 + $0x22] sm:$0xff]
    %v860 = vld [vmem:[#allocation2 + $0x32] sm:$0xff]
    %v861 = vld [vmem:[#allocation2 + $0x42] sm:$0xff]
    %v862 = vld [vmem:[#allocation2 + $0x52] sm:$0xff]
    %v863 = vld [vmem:[#allocation2 + $0x62] sm:$0xff]
    %v864 = vld [vmem:[#allocation2 + $0x72] sm:$0xff]
    %v865 = vld [vmem:[#allocation2 + $0xa2] sm:$0xff]
    %v866 = vld [vmem:[#allocation2 + $0xb2] sm:$0xff]
    %v867 = vld [vmem:[#allocation2 + $0xc2] sm:$0xff]
    %v868 = vld [vmem:[#allocation2 + $0xd2] sm:$0xff]
    %v869 = vld [vmem:[#allocation2 + $0xe2] sm:$0xff]
    %v870 = vld [vmem:[#allocation2 + $0xf2] sm:$0xff]
    %v871 = vld [vmem:[#allocation2 + $0x102] sm:$0xff]
    %v872 = vld [vmem:[#allocation2 + $0x112] sm:$0xff]
    %v873 = vpack.c.bf16 %v858, %v857
    %v874 = vpack.c.bf16 %v860, %v859
    %v875 = vpack.c.bf16 %v862, %v861
    %v876 = vpack.c.bf16 %v864, %v863
    %v877 = vpack.c.bf16 %v866, %v865
    %v878 = vpack.c.bf16 %v868, %v867
    %v879 = vpack.c.bf16 %v870, %v869
    %v880 = vpack.c.bf16 %v872, %v871
    %v881 = vld [vmem:[%s792] sm:$0xff]
    %v882 = vld [vmem:[%s792 + $0x10] sm:$0xff]
    %v883 = vld [vmem:[%s792 + $0x20] sm:$0xff]
    %v884 = vld [vmem:[%s792 + $0x30] sm:$0xff]
    %v885 = vld [vmem:[%s792 + $0x40] sm:$0xff]
    %v886 = vld [vmem:[%s792 + $0x50] sm:$0xff]
    %v887 = vld [vmem:[%s792 + $0x60] sm:$0xff]
    %v888 = vld [vmem:[%s792 + $0x70] sm:$0xff]
    %v889 = vld [vmem:[%s792 + $0xa0] sm:$0xff]
    %v890 = vld [vmem:[%s792 + $0xb0] sm:$0xff]
    %v891 = vld [vmem:[%s792 + $0xc0] sm:$0xff]
    %v892 = vld [vmem:[%s792 + $0xd0] sm:$0xff]
    %v893 = vld [vmem:[%s792 + $0xe0] sm:$0xff]
    %v894 = vld [vmem:[%s792 + $0xf0] sm:$0xff]
    %v895 = vld [vmem:[%s792 + $0x100] sm:$0xff]
    %v896 = vld [vmem:[%s792 + $0x110] sm:$0xff]
    %v897 = vpack.c.bf16 %v882, %v881
    %v898 = vpack.c.bf16 %v884, %v883
    %v899 = vpack.c.bf16 %v886, %v885
    %v900 = vpack.c.bf16 %v888, %v887
    %v901 = vpack.c.bf16 %v890, %v889
    %v902 = vpack.c.bf16 %v892, %v891
    %v903 = vpack.c.bf16 %v894, %v893
    %v904 = vpack.c.bf16 %v896, %v895
    %v905 = vld [vmem:[%s792 + $0x1] sm:$0xff]
    %v906 = vld [vmem:[%s792 + $0x11] sm:$0xff]
    %v907 = vld [vmem:[%s792 + $0x21] sm:$0xff]
    %v908 = vld [vmem:[%s792 + $0x31] sm:$0xff]
    %v909 = vld [vmem:[%s792 + $0x41] sm:$0xff]
    %v910 = vld [vmem:[%s792 + $0x51] sm:$0xff]
    %v911 = vld [vmem:[%s792 + $0x61] sm:$0xff]
    %v912 = vld [vmem:[%s792 + $0x71] sm:$0xff]
    %v913 = vld [vmem:[%s792 + $0xa1] sm:$0xff]
    %v914 = vld [vmem:[%s792 + $0xb1] sm:$0xff]
    %v915 = vld [vmem:[%s792 + $0xc1] sm:$0xff]
    %v916 = vld [vmem:[%s792 + $0xd1] sm:$0xff]
    %v917 = vld [vmem:[%s792 + $0xe1] sm:$0xff]
    %v918 = vld [vmem:[%s792 + $0xf1] sm:$0xff]
    %v919 = vld [vmem:[%s792 + $0x101] sm:$0xff]
    %v920 = vld [vmem:[%s792 + $0x111] sm:$0xff]
    %v921 = vpack.c.bf16 %v906, %v905
    %v922 = vpack.c.bf16 %v908, %v907
    %v923 = vpack.c.bf16 %v910, %v909
    %v924 = vpack.c.bf16 %v912, %v911
    %v925 = vpack.c.bf16 %v914, %v913
    %v926 = vpack.c.bf16 %v916, %v915
    %v927 = vpack.c.bf16 %v918, %v917
    %v928 = vpack.c.bf16 %v920, %v919
    %v929 = vld [vmem:[%s792 + $0x2] sm:$0xff]
    %v930 = vld [vmem:[%s792 + $0x12] sm:$0xff]
    %v931 = vld [vmem:[%s792 + $0x22] sm:$0xff]
    %v932 = vld [vmem:[%s792 + $0x32] sm:$0xff]
    %v933 = vld [vmem:[%s792 + $0x42] sm:$0xff]
    %v934 = vld [vmem:[%s792 + $0x52] sm:$0xff]
    %v935 = vld [vmem:[%s792 + $0x62] sm:$0xff]
    %v936 = vld [vmem:[%s792 + $0x72] sm:$0xff]
    %v937 = vld [vmem:[%s792 + $0xa2] sm:$0xff]
    %v938 = vld [vmem:[%s792 + $0xb2] sm:$0xff]
    %v939 = vld [vmem:[%s792 + $0xc2] sm:$0xff]
    %v940 = vld [vmem:[%s792 + $0xd2] sm:$0xff]
    %v941 = vld [vmem:[%s792 + $0xe2] sm:$0xff]
    %v942 = vld [vmem:[%s792 + $0xf2] sm:$0xff]
    %v943 = vld [vmem:[%s792 + $0x102] sm:$0xff]
    %v944 = vld [vmem:[%s792 + $0x112] sm:$0xff]
    %v945 = vpack.c.bf16 %v930, %v929
    %v946 = vpack.c.bf16 %v932, %v931
    %v947 = vpack.c.bf16 %v934, %v933
    %v948 = vpack.c.bf16 %v936, %v935
    %v949 = vpack.c.bf16 %v938, %v937
    %v950 = vpack.c.bf16 %v940, %v939
    %v951 = vpack.c.bf16 %v942, %v941
    %v952 = vpack.c.bf16 %v944, %v943
    %s953 = scalar_lea.vmem [#allocation2], 32
    %v954 = vld [vmem:[%s953] sm:$0xff]
    %v955 = vld [vmem:[%s953 + $0x10] sm:$0xff]
    %v956 = vld [vmem:[%s953 + $0x20] sm:$0xff]
    %v957 = vld [vmem:[%s953 + $0x30] sm:$0xff]
    %v958 = vld [vmem:[%s953 + $0x40] sm:$0xff]
    %v959 = vld [vmem:[%s953 + $0x50] sm:$0xff]
    %v960 = vld [vmem:[%s953 + $0x60] sm:$0xff]
    %v961 = vld [vmem:[%s953 + $0x70] sm:$0xff]
    %v962 = vld [vmem:[%s953 + $0xa0] sm:$0xff]
    %v963 = vld [vmem:[%s953 + $0xb0] sm:$0xff]
    %v964 = vld [vmem:[%s953 + $0xc0] sm:$0xff]
    %v965 = vld [vmem:[%s953 + $0xd0] sm:$0xff]
    %v966 = vld [vmem:[%s953 + $0xe0] sm:$0xff]
    %v967 = vld [vmem:[%s953 + $0xf0] sm:$0xff]
    %v968 = vld [vmem:[%s953 + $0x100] sm:$0xff]
    %v969 = vld [vmem:[%s953 + $0x110] sm:$0xff]
    %v970 = vpack.c.bf16 %v955, %v954
    %v971 = vpack.c.bf16 %v957, %v956
    %v972 = vpack.c.bf16 %v959, %v958
    %v973 = vpack.c.bf16 %v961, %v960
    %v974 = vpack.c.bf16 %v963, %v962
    %v975 = vpack.c.bf16 %v965, %v964
    %v976 = vpack.c.bf16 %v967, %v966
    %v977 = vpack.c.bf16 %v969, %v968
    %v978 = vld [vmem:[%s953 + $0x1] sm:$0xff]
    %v979 = vld [vmem:[%s953 + $0x11] sm:$0xff]
    %v980 = vld [vmem:[%s953 + $0x21] sm:$0xff]
    %v981 = vld [vmem:[%s953 + $0x31] sm:$0xff]
    %v982 = vld [vmem:[%s953 + $0x41] sm:$0xff]
    %v983 = vld [vmem:[%s953 + $0x51] sm:$0xff]
    %v984 = vld [vmem:[%s953 + $0x61] sm:$0xff]
    %v985 = vld [vmem:[%s953 + $0x71] sm:$0xff]
    %v986 = vld [vmem:[%s953 + $0xa1] sm:$0xff]
    %v987 = vld [vmem:[%s953 + $0xb1] sm:$0xff]
    %v988 = vld [vmem:[%s953 + $0xc1] sm:$0xff]
    %v989 = vld [vmem:[%s953 + $0xd1] sm:$0xff]
    %v990 = vld [vmem:[%s953 + $0xe1] sm:$0xff]
    %v991 = vld [vmem:[%s953 + $0xf1] sm:$0xff]
    %v992 = vld [vmem:[%s953 + $0x101] sm:$0xff]
    %v993 = vld [vmem:[%s953 + $0x111] sm:$0xff]
    %v994 = vpack.c.bf16 %v979, %v978
    %v995 = vpack.c.bf16 %v981, %v980
    %v996 = vpack.c.bf16 %v983, %v982
    %v997 = vpack.c.bf16 %v985, %v984
    %v998 = vpack.c.bf16 %v987, %v986
    %v999 = vpack.c.bf16 %v989, %v988
    %v1000 = vpack.c.bf16 %v991, %v990
    %v1001 = vpack.c.bf16 %v993, %v992
    %v1002 = vld [vmem:[%s953 + $0x2] sm:$0xff]
    %v1003 = vld [vmem:[%s953 + $0x12] sm:$0xff]
    %v1004 = vld [vmem:[%s953 + $0x22] sm:$0xff]
    %v1005 = vld [vmem:[%s953 + $0x32] sm:$0xff]
    %v1006 = vld [vmem:[%s953 + $0x42] sm:$0xff]
    %v1007 = vld [vmem:[%s953 + $0x52] sm:$0xff]
    %v1008 = vld [vmem:[%s953 + $0x62] sm:$0xff]
    %v1009 = vld [vmem:[%s953 + $0x72] sm:$0xff]
    %v1010 = vld [vmem:[%s953 + $0xa2] sm:$0xff]
    %v1011 = vld [vmem:[%s953 + $0xb2] sm:$0xff]
    %v1012 = vld [vmem:[%s953 + $0xc2] sm:$0xff]
    %v1013 = vld [vmem:[%s953 + $0xd2] sm:$0xff]
    %v1014 = vld [vmem:[%s953 + $0xe2] sm:$0xff]
    %v1015 = vld [vmem:[%s953 + $0xf2] sm:$0xff]
    %v1016 = vld [vmem:[%s953 + $0x102] sm:$0xff]
    %v1017 = vld [vmem:[%s953 + $0x112] sm:$0xff]
    %v1018 = vpack.c.bf16 %v1003, %v1002
    %v1019 = vpack.c.bf16 %v1005, %v1004
    %v1020 = vpack.c.bf16 %v1007, %v1006
    %v1021 = vpack.c.bf16 %v1009, %v1008
    %v1022 = vpack.c.bf16 %v1011, %v1010
    %v1023 = vpack.c.bf16 %v1013, %v1012
    %v1024 = vpack.c.bf16 %v1015, %v1014
    %v1025 = vpack.c.bf16 %v1017, %v1016
    %1034 = vrot.lane.b32.xlu0 %v849, 64
    %v1035 = vpop.permute.xlu0 %1034
    %1036 = vrot.lane.b32.xlu0 %v850, 64
    %v1037 = vpop.permute.xlu0 %1036
    %1038 = vrot.lane.b32.xlu0 %v851, 64
    %v1039 = vpop.permute.xlu0 %1038
    %1040 = vrot.lane.b32.xlu0 %v852, 64
    %v1041 = vpop.permute.xlu0 %1040
    %1042 = vrot.lane.b32.xlu0 %v853, 64
    %v1043 = vpop.permute.xlu0 %1042
    %1044 = vrot.lane.b32.xlu0 %v854, 64
    %v1045 = vpop.permute.xlu0 %1044
    %1046 = vrot.lane.b32.xlu0 %v855, 64
    %v1047 = vpop.permute.xlu0 %1046
    %1048 = vrot.lane.b32.xlu0 %v856, 64
    %v1049 = vpop.permute.xlu0 %1048
    %1058 = vrot.lane.b32.xlu0 %v897, 64
    %v1059 = vpop.permute.xlu0 %1058
    %1060 = vrot.lane.b32.xlu0 %v898, 64
    %v1061 = vpop.permute.xlu0 %1060
    %1062 = vrot.lane.b32.xlu0 %v899, 64
    %v1063 = vpop.permute.xlu0 %1062
    %1064 = vrot.lane.b32.xlu0 %v900, 64
    %v1065 = vpop.permute.xlu0 %1064
    %1066 = vrot.lane.b32.xlu0 %v901, 64
    %v1067 = vpop.permute.xlu0 %1066
    %1068 = vrot.lane.b32.xlu0 %v902, 64
    %v1069 = vpop.permute.xlu0 %1068
    %1070 = vrot.lane.b32.xlu0 %v903, 64
    %v1071 = vpop.permute.xlu0 %1070
    %1072 = vrot.lane.b32.xlu0 %v904, 64
    %v1073 = vpop.permute.xlu0 %1072
    %1082 = vrot.lane.b32.xlu0 %v945, 64
    %v1083 = vpop.permute.xlu0 %1082
    %1084 = vrot.lane.b32.xlu0 %v946, 64
    %v1085 = vpop.permute.xlu0 %1084
    %1086 = vrot.lane.b32.xlu0 %v947, 64
    %v1087 = vpop.permute.xlu0 %1086
    %1088 = vrot.lane.b32.xlu0 %v948, 64
    %v1089 = vpop.permute.xlu0 %1088
    %1090 = vrot.lane.b32.xlu0 %v949, 64
    %v1091 = vpop.permute.xlu0 %1090
    %1092 = vrot.lane.b32.xlu0 %v950, 64
    %v1093 = vpop.permute.xlu0 %1092
    %1094 = vrot.lane.b32.xlu0 %v951, 64
    %v1095 = vpop.permute.xlu0 %1094
    %1096 = vrot.lane.b32.xlu0 %v952, 64
    %v1097 = vpop.permute.xlu0 %1096
    %1106 = vrot.lane.b32.xlu0 %v994, 64
    %v1107 = vpop.permute.xlu0 %1106
    %1108 = vrot.lane.b32.xlu0 %v995, 64
    %v1109 = vpop.permute.xlu0 %1108
    %1110 = vrot.lane.b32.xlu0 %v996, 64
    %v1111 = vpop.permute.xlu0 %1110
    %1112 = vrot.lane.b32.xlu0 %v997, 64
    %v1113 = vpop.permute.xlu0 %1112
    %1114 = vrot.lane.b32.xlu0 %v998, 64
    %v1115 = vpop.permute.xlu0 %1114
    %1116 = vrot.lane.b32.xlu0 %v999, 64
    %v1117 = vpop.permute.xlu0 %1116
    %1118 = vrot.lane.b32.xlu0 %v1000, 64
    %v1119 = vpop.permute.xlu0 %1118
    %1120 = vrot.lane.b32.xlu0 %v1001, 64
    %v1121 = vpop.permute.xlu0 %1120
    %v1124 = vsel %vm91, %v825, %v1035
    %v1128 = vsel %vm91, %v826, %v1037
    %v1132 = vsel %vm91, %v827, %v1039
    %v1136 = vsel %vm91, %v828, %v1041
    %v1140 = vsel %vm91, %v829, %v1043
    %v1144 = vsel %vm91, %v830, %v1045
    %v1148 = vsel %vm91, %v831, %v1047
    %v1152 = vsel %vm91, %v832, %v1049
    %v1156 = vsel %vm91, %v873, %v1059
    %v1160 = vsel %vm91, %v874, %v1061
    %v1164 = vsel %vm91, %v875, %v1063
    %v1168 = vsel %vm91, %v876, %v1065
    %v1172 = vsel %vm91, %v877, %v1067
    %v1176 = vsel %vm91, %v878, %v1069
    %v1180 = vsel %vm91, %v879, %v1071
    %v1184 = vsel %vm91, %v880, %v1073
    %v1188 = vsel %vm91, %v921, %v1083
    %v1192 = vsel %vm91, %v922, %v1085
    %v1196 = vsel %vm91, %v923, %v1087
    %v1200 = vsel %vm91, %v924, %v1089
    %v1204 = vsel %vm91, %v925, %v1091
    %v1208 = vsel %vm91, %v926, %v1093
    %v1212 = vsel %vm91, %v927, %v1095
    %v1216 = vsel %vm91, %v928, %v1097
    %v1220 = vsel %vm91, %v970, %v1107
    %v1224 = vsel %vm91, %v971, %v1109
    %v1228 = vsel %vm91, %v972, %v1111
    %v1232 = vsel %vm91, %v973, %v1113
    %v1236 = vsel %vm91, %v974, %v1115
    %v1240 = vsel %vm91, %v975, %v1117
    %v1244 = vsel %vm91, %v976, %v1119
    %v1248 = vsel %vm91, %v977, %v1121
    %v1250 = vld [vmem:[%s6] sm:$0xf]
    %v1251 = vld [vmem:[%s6 + $0x4] sm:$0xf]
    %v1252 = vld [vmem:[%s6 + $0x8] sm:$0xf]
    %v1253 = vld [vmem:[%s6 + $0xc] sm:$0xf]
    %v1254 = vld [vmem:[%s6 + $0x10] sm:$0xf]
    %v1255 = vld [vmem:[%s6 + $0x14] sm:$0xf]
    %v1256 = vld [vmem:[%s6 + $0x18] sm:$0xf]
    %v1257 = vld [vmem:[%s6 + $0x1c] sm:$0xf]
    %v1258 = vld [vmem:[%s6 + $0x20] sm:$0xf]
    %v1259 = vld [vmem:[%s6 + $0x24] sm:$0xf]
    %v1260 = vld [vmem:[%s6 + $0x28] sm:$0xf]
    %v1261 = vld [vmem:[%s6 + $0x2c] sm:$0xf]
    %v1262 = vld [vmem:[%s6 + $0x30] sm:$0xf]
    %v1263 = vld [vmem:[%s6 + $0x34] sm:$0xf]
    %v1264 = vld [vmem:[%s6 + $0x38] sm:$0xf]
    %v1265 = vld [vmem:[%s6 + $0x3c] sm:$0xf]
    %v1266 = vld [vmem:[%s6 + $0x40] sm:$0xf]
    %v1267 = vld [vmem:[%s6 + $0x44] sm:$0xf]
    %v1268 = vld [vmem:[%s6 + $0x48] sm:$0xf]
    %v1269 = vld [vmem:[%s6 + $0x4c] sm:$0xf]
    %v1270 = vld [vmem:[%s6 + $0x50] sm:$0xf]
    %v1271 = vld [vmem:[%s6 + $0x54] sm:$0xf]
    %v1272 = vld [vmem:[%s6 + $0x58] sm:$0xf]
    %v1273 = vld [vmem:[%s6 + $0x5c] sm:$0xf]
    %v1274 = vld [vmem:[%s6 + $0x60] sm:$0xf]
    %v1275 = vld [vmem:[%s6 + $0x64] sm:$0xf]
    %v1276 = vld [vmem:[%s6 + $0x68] sm:$0xf]
    %v1277 = vld [vmem:[%s6 + $0x6c] sm:$0xf]
    %v1278 = vld [vmem:[%s6 + $0x70] sm:$0xf]
    %v1279 = vld [vmem:[%s6 + $0x74] sm:$0xf]
    %v1280 = vld [vmem:[%s6 + $0x78] sm:$0xf]
    %v1281 = vld [vmem:[%s6 + $0x7c] sm:$0xf]
    %v1282 = vld [vmem:[%s6 + $0x80] sm:$0xf]
    %v1283 = vld [vmem:[%s6 + $0x84] sm:$0xf]
    %v1284 = vld [vmem:[%s6 + $0x88] sm:$0xf]
    %v1285 = vld [vmem:[%s6 + $0x8c] sm:$0xf]
    %v1286 = vld [vmem:[%s6 + $0x90] sm:$0xf]
    %v1287 = vld [vmem:[%s6 + $0x94] sm:$0xf]
    %v1288 = vld [vmem:[%s6 + $0x98] sm:$0xf]
    %v1289 = vld [vmem:[%s6 + $0x9c] sm:$0xf]
    %v1290 = vld [vmem:[%s6 + $0xa0] sm:$0xf]
    %v1291 = vld [vmem:[%s6 + $0xa4] sm:$0xf]
    %v1292 = vld [vmem:[%s6 + $0xa8] sm:$0xf]
    %v1293 = vld [vmem:[%s6 + $0xac] sm:$0xf]
    %v1294 = vld [vmem:[%s6 + $0xb0] sm:$0xf]
    %v1295 = vld [vmem:[%s6 + $0xb4] sm:$0xf]
    %v1296 = vld [vmem:[%s6 + $0xb8] sm:$0xf]
    %v1297 = vld [vmem:[%s6 + $0xbc] sm:$0xf]
    %v1298 = vld [vmem:[%s6 + $0xc0] sm:$0xf]
    %v1299 = vld [vmem:[%s6 + $0xc4] sm:$0xf]
    %v1300 = vld [vmem:[%s6 + $0xc8] sm:$0xf]
    %v1301 = vld [vmem:[%s6 + $0xcc] sm:$0xf]
    %v1302 = vld [vmem:[%s6 + $0xd0] sm:$0xf]
    %v1303 = vld [vmem:[%s6 + $0xd4] sm:$0xf]
    %v1304 = vld [vmem:[%s6 + $0xd8] sm:$0xf]
    %v1305 = vld [vmem:[%s6 + $0xdc] sm:$0xf]
    %v1306 = vld [vmem:[%s6 + $0xe0] sm:$0xf]
    %v1307 = vld [vmem:[%s6 + $0xe4] sm:$0xf]
    %v1308 = vld [vmem:[%s6 + $0xe8] sm:$0xf]
    %v1309 = vld [vmem:[%s6 + $0xec] sm:$0xf]
    %v1310 = vld [vmem:[%s6 + $0xf0] sm:$0xf]
    %v1311 = vld [vmem:[%s6 + $0xf4] sm:$0xf]
    %v1312 = vld [vmem:[%s6 + $0xf8] sm:$0xf]
    %v1313 = vld [vmem:[%s6 + $0xfc] sm:$0xf]
    %v1314 = vld [vmem:[%s6 + $0x100] sm:$0xf]
    %v1315 = vld [vmem:[%s6 + $0x104] sm:$0xf]
    %v1316 = vld [vmem:[%s6 + $0x108] sm:$0xf]
    %v1317 = vld [vmem:[%s6 + $0x10c] sm:$0xf]
    %v1318 = vld [vmem:[%s6 + $0x110] sm:$0xf]
    %v1319 = vld [vmem:[%s6 + $0x114] sm:$0xf]
    %v1320 = vld [vmem:[%s6 + $0x118] sm:$0xf]
    %v1321 = vld [vmem:[%s6 + $0x11c] sm:$0xf]
    %v1394 = vunpack.c.l.b16 %v1250
    %v1395 = vunpack.c.l.b16 %v1251
    %v1396 = vunpack.c.l.b16 %v1252
    %v1397 = vunpack.c.l.b16 %v1253
    %v1398 = vunpack.c.l.b16 %v1254
    %v1399 = vunpack.c.l.b16 %v1255
    %v1400 = vunpack.c.l.b16 %v1256
    %v1401 = vunpack.c.l.b16 %v1257
    %v1402 = vunpack.c.l.b16 %v1258
    %v1403 = vunpack.c.l.b16 %v1259
    %v1404 = vunpack.c.l.b16 %v1260
    %v1405 = vunpack.c.l.b16 %v1261
    %v1406 = vunpack.c.l.b16 %v1262
    %v1407 = vunpack.c.l.b16 %v1263
    %v1408 = vunpack.c.l.b16 %v1264
    %v1409 = vunpack.c.l.b16 %v1265
    %v1410 = vunpack.c.l.b16 %v1266
    %v1411 = vunpack.c.l.b16 %v1267
    %v1412 = vunpack.c.l.b16 %v1268
    %v1413 = vunpack.c.l.b16 %v1269
    %v1414 = vunpack.c.l.b16 %v1270
    %v1415 = vunpack.c.l.b16 %v1271
    %v1416 = vunpack.c.l.b16 %v1272
    %v1417 = vunpack.c.l.b16 %v1273
    %v1418 = vunpack.c.l.b16 %v1274
    %v1419 = vunpack.c.l.b16 %v1275
    %v1420 = vunpack.c.l.b16 %v1276
    %v1421 = vunpack.c.l.b16 %v1277
    %v1422 = vunpack.c.l.b16 %v1278
    %v1423 = vunpack.c.l.b16 %v1279
    %v1424 = vunpack.c.l.b16 %v1280
    %v1425 = vunpack.c.l.b16 %v1281
    %v1426 = vunpack.c.l.b16 %v1282
    %v1427 = vunpack.c.l.b16 %v1283
    %v1428 = vunpack.c.l.b16 %v1284
    %v1429 = vunpack.c.l.b16 %v1285
    %v1430 = vunpack.c.l.b16 %v1286
    %v1431 = vunpack.c.l.b16 %v1287
    %v1432 = vunpack.c.l.b16 %v1288
    %v1433 = vunpack.c.l.b16 %v1289
    %v1434 = vunpack.c.l.b16 %v1290
    %v1435 = vunpack.c.l.b16 %v1291
    %v1436 = vunpack.c.l.b16 %v1292
    %v1437 = vunpack.c.l.b16 %v1293
    %v1438 = vunpack.c.l.b16 %v1294
    %v1439 = vunpack.c.l.b16 %v1295
    %v1440 = vunpack.c.l.b16 %v1296
    %v1441 = vunpack.c.l.b16 %v1297
    %v1442 = vunpack.c.l.b16 %v1298
    %v1443 = vunpack.c.l.b16 %v1299
    %v1444 = vunpack.c.l.b16 %v1300
    %v1445 = vunpack.c.l.b16 %v1301
    %v1446 = vunpack.c.l.b16 %v1302
    %v1447 = vunpack.c.l.b16 %v1303
    %v1448 = vunpack.c.l.b16 %v1304
    %v1449 = vunpack.c.l.b16 %v1305
    %v1450 = vunpack.c.l.b16 %v1306
    %v1451 = vunpack.c.l.b16 %v1307
    %v1452 = vunpack.c.l.b16 %v1308
    %v1453 = vunpack.c.l.b16 %v1309
    %v1454 = vunpack.c.l.b16 %v1310
    %v1455 = vunpack.c.l.b16 %v1311
    %v1456 = vunpack.c.l.b16 %v1312
    %v1457 = vunpack.c.l.b16 %v1313
    %v1458 = vunpack.c.l.b16 %v1314
    %v1459 = vunpack.c.l.b16 %v1315
    %v1460 = vunpack.c.l.b16 %v1316
    %v1461 = vunpack.c.l.b16 %v1317
    %v1462 = vunpack.c.l.b16 %v1318
    %v1463 = vunpack.c.l.b16 %v1319
    %v1464 = vunpack.c.l.b16 %v1320
    %v1465 = vunpack.c.l.b16 %v1321
    %v1466 = vpack.c.b16 %v1395, %v1394
    %v1467 = vpack.c.b16 %v1397, %v1396
    %v1468 = vpack.c.b16 %v1399, %v1398
    %v1469 = vpack.c.b16 %v1401, %v1400
    %v1470 = vpack.c.b16 %v1403, %v1402
    %v1471 = vpack.c.b16 %v1405, %v1404
    %v1472 = vpack.c.b16 %v1407, %v1406
    %v1473 = vpack.c.b16 %v1409, %v1408
    %v1474 = vpack.c.b16 %v1411, %v1410
    %v1475 = vpack.c.b16 %v1413, %v1412
    %v1476 = vpack.c.b16 %v1415, %v1414
    %v1477 = vpack.c.b16 %v1417, %v1416
    %v1478 = vpack.c.b16 %v1419, %v1418
    %v1479 = vpack.c.b16 %v1421, %v1420
    %v1480 = vpack.c.b16 %v1423, %v1422
    %v1481 = vpack.c.b16 %v1425, %v1424
    %v1482 = vpack.c.b16 %v1427, %v1426
    %v1483 = vpack.c.b16 %v1429, %v1428
    %v1484 = vpack.c.b16 %v1431, %v1430
    %v1485 = vpack.c.b16 %v1433, %v1432
    %v1486 = vpack.c.b16 %v1435, %v1434
    %v1487 = vpack.c.b16 %v1437, %v1436
    %v1488 = vpack.c.b16 %v1439, %v1438
    %v1489 = vpack.c.b16 %v1441, %v1440
    %v1490 = vpack.c.b16 %v1443, %v1442
    %v1491 = vpack.c.b16 %v1445, %v1444
    %v1492 = vpack.c.b16 %v1447, %v1446
    %v1493 = vpack.c.b16 %v1449, %v1448
    %v1494 = vpack.c.b16 %v1451, %v1450
    %v1495 = vpack.c.b16 %v1453, %v1452
    %v1496 = vpack.c.b16 %v1455, %v1454
    %v1497 = vpack.c.b16 %v1457, %v1456
    %v1498 = vpack.c.b16 %v1459, %v1458
    %v1499 = vpack.c.b16 %v1461, %v1460
    %v1500 = vpack.c.b16 %v1463, %v1462
    %v1501 = vpack.c.b16 %v1465, %v1464
    %v1539 = vsel %vm91, %v1018, 0
    %v1542 = vsel %vm91, %v1019, 0
    %v1545 = vsel %vm91, %v1020, 0
    %v1548 = vsel %vm91, %v1021, 0
    %v1551 = vsel %vm91, %v1022, 0
    %v1554 = vsel %vm91, %v1023, 0
    %v1557 = vsel %vm91, %v1024, 0
    %v1560 = vsel %vm91, %v1025, 0
    %1562 = vmatprep.subr.bf16.mxu0 0
    %1563 = vmatpush1.bf16.msra.mxu0 %v1466
    %1564 = vmatprep.subr.bf16.mxu0 0
    %1565 = vmatpush1.bf16.msra.mxu0 %v1467
    %1566 = vmatprep.subr.bf16.mxu0 0
    %1567 = vmatpush1.bf16.msra.mxu0 %v1468
    %1568 = vmatprep.subr.bf16.mxu0 0
    %1569 = vmatpush1.bf16.msra.mxu0 %v1469
    %1570 = vmatprep.subr.bf16.mxu0 0
    %1571 = vmatpush1.bf16.msra.mxu0 %v1470
    %1572 = vmatprep.subr.bf16.mxu0 0
    %1573 = vmatpush1.bf16.msra.mxu0 %v1471
    %1574 = vmatprep.subr.bf16.mxu0 0
    %1575 = vmatpush1.bf16.msra.mxu0 %v1472
    %1576 = vmatprep.subr.bf16.mxu0 0
    %1577 = vmatpush1.bf16.msra.mxu0 %v1473
    %1578 = vmatprep.subr.bf16.mxu0 0
    %1579 = vmatpush1.bf16.msra.mxu0 %v1474
    %1580 = vmatprep.subr.bf16.mxu0 0
    %1581 = vmatpush1.bf16.msra.mxu0 %v1475
    %1582 = vmatprep.subr.bf16.mxu0 0
    %1583 = vmatpush1.bf16.msra.mxu0 %v1476
    %1584 = vmatprep.subr.bf16.mxu0 0
    %1585 = vmatpush1.bf16.msra.mxu0 %v1477
    %1586 = vmatprep.subr.bf16.mxu0 0
    %1587 = vmatpush1.bf16.msra.mxu0 %v1478
    %1588 = vmatprep.subr.bf16.mxu0 0
    %1589 = vmatpush1.bf16.msra.mxu0 %v1479
    %1590 = vmatprep.subr.bf16.mxu0 0
    %1591 = vmatpush1.bf16.msra.mxu0 %v1480
    %1592 = vmatprep.subr.bf16.mxu0 0
    %1593 = vmatpush1.bf16.msra.mxu0 %v1481
    %1594 = vmatprep.mubr.bf16.mxu0 %v1156
    %1595 = vmatmul.mubr.bf16.gmra.mrb[0].mxu0 %v1124
    %v1596 = vpop.f32.mrb[0].mxu0
    %v1597 = vadd.f32 0.0, %v1596
    %v1598 = vpop.f32.mrb[0].mxu0
    %v1599 = vpop.f32.mrb[0].mxu0
    %v1600 = vadd.f32 0.0, %v1599
    %v1601 = vpop.f32.mrb[0].mxu0
    %1602 = vmatprep.mubr.bf16.mxu0 %v1160
    %1603 = vmatmul.mubr.bf16.gmra.mrb[0].mxu0 %v1128
    %v1604 = vpop.f32.mrb[0].mxu0
    %v1605 = vadd.f32 0.0, %v1604
    %v1606 = vpop.f32.mrb[0].mxu0
    %v1607 = vpop.f32.mrb[0].mxu0
    %v1608 = vadd.f32 0.0, %v1607
    %v1609 = vpop.f32.mrb[0].mxu0
    %1610 = vmatprep.mubr.bf16.mxu0 %v1164
    %1611 = vmatmul.mubr.bf16.gmra.mrb[0].mxu0 %v1132
    %v1612 = vpop.f32.mrb[0].mxu0
    %v1613 = vadd.f32 0.0, %v1612
    %v1614 = vpop.f32.mrb[0].mxu0
    %v1615 = vpop.f32.mrb[0].mxu0
    %v1616 = vadd.f32 0.0, %v1615
    %v1617 = vpop.f32.mrb[0].mxu0
    %1618 = vmatprep.mubr.bf16.mxu0 %v1168
    %1619 = vmatmul.mubr.bf16.gmra.mrb[0].mxu0 %v1136
    %v1620 = vpop.f32.mrb[0].mxu0
    %v1621 = vadd.f32 0.0, %v1620
    %v1622 = vpop.f32.mrb[0].mxu0
    %v1623 = vpop.f32.mrb[0].mxu0
    %v1624 = vadd.f32 0.0, %v1623
    %v1625 = vpop.f32.mrb[0].mxu0
    %1626 = vmatprep.mubr.bf16.mxu0 %v1172
    %1627 = vmatmul.mubr.bf16.gmra.mrb[0].mxu0 %v1140
    %v1628 = vpop.f32.mrb[0].mxu0
    %v1629 = vadd.f32 0.0, %v1628
    %v1630 = vpop.f32.mrb[0].mxu0
    %v1631 = vpop.f32.mrb[0].mxu0
    %v1632 = vadd.f32 0.0, %v1631
    %v1633 = vpop.f32.mrb[0].mxu0
    %1634 = vmatprep.mubr.bf16.mxu0 %v1176
    %1635 = vmatmul.mubr.bf16.gmra.mrb[0].mxu0 %v1144
    %v1636 = vpop.f32.mrb[0].mxu0
    %v1637 = vadd.f32 0.0, %v1636
    %v1638 = vpop.f32.mrb[0].mxu0
    %v1639 = vpop.f32.mrb[0].mxu0
    %v1640 = vadd.f32 0.0, %v1639
    %v1641 = vpop.f32.mrb[0].mxu0
    %1642 = vmatprep.mubr.bf16.mxu0 %v1180
    %1643 = vmatmul.mubr.bf16.gmra.mrb[0].mxu0 %v1148
    %v1644 = vpop.f32.mrb[0].mxu0
    %v1645 = vadd.f32 0.0, %v1644
    %v1646 = vpop.f32.mrb[0].mxu0
    %v1647 = vpop.f32.mrb[0].mxu0
    %v1648 = vadd.f32 0.0, %v1647
    %v1649 = vpop.f32.mrb[0].mxu0
    %1650 = vmatprep.mubr.bf16.mxu0 %v1184
    %1651 = vmatmul.mubr.bf16.gmra.mrb[0].mxu0 %v1152
    %v1652 = vpop.f32.mrb[0].mxu0
    %v1653 = vadd.f32 0.0, %v1652
    %v1654 = vpop.f32.mrb[0].mxu0
    %v1655 = vpop.f32.mrb[0].mxu0
    %v1656 = vadd.f32 0.0, %v1655
    %v1657 = vpop.f32.mrb[0].mxu0
    %1658 = vdwg.mxu0
    %1659 = vmatprep.subr.bf16.mxu0 0
    %1660 = vmatpush1.bf16.msra.mxu0 %v1482
    %1661 = vmatprep.subr.bf16.mxu0 0
    %1662 = vmatpush1.bf16.msra.mxu0 %v1483
    %1663 = vmatprep.subr.bf16.mxu0 0
    %1664 = vmatpush1.bf16.msra.mxu0 %v1484
    %1665 = vmatprep.subr.bf16.mxu0 0
    %1666 = vmatpush1.bf16.msra.mxu0 %v1485
    %1667 = vmatprep.subr.bf16.mxu0 0
    %1668 = vmatpush1.bf16.msra.mxu0 %v1486
    %1669 = vmatprep.subr.bf16.mxu0 0
    %1670 = vmatpush1.bf16.msra.mxu0 %v1487
    %1671 = vmatprep.subr.bf16.mxu0 0
    %1672 = vmatpush1.bf16.msra.mxu0 %v1488
    %1673 = vmatprep.subr.bf16.mxu0 0
    %1674 = vmatpush1.bf16.msra.mxu0 %v1489
    %1675 = vmatprep.subr.bf16.mxu0 0
    %1676 = vmatpush1.bf16.msra.mxu0 %v1490
    %1677 = vmatprep.subr.bf16.mxu0 0
    %1678 = vmatpush1.bf16.msra.mxu0 %v1491
    %1679 = vmatprep.subr.bf16.mxu0 0
    %1680 = vmatpush1.bf16.msra.mxu0 %v1492
    %1681 = vmatprep.subr.bf16.mxu0 0
    %1682 = vmatpush1.bf16.msra.mxu0 %v1493
    %1683 = vmatprep.subr.bf16.mxu0 0
    %1684 = vmatpush1.bf16.msra.mxu0 %v1494
    %1685 = vmatprep.subr.bf16.mxu0 0
    %1686 = vmatpush1.bf16.msra.mxu0 %v1495
    %1687 = vmatprep.subr.bf16.mxu0 0
    %1688 = vmatpush1.bf16.msra.mxu0 %v1496
    %1689 = vmatprep.subr.bf16.mxu0 0
    %1690 = vmatpush1.bf16.msra.mxu0 %v1497
    %1691 = vmatprep.mubr.bf16.mxu0 %v1220
    %1692 = vmatmul.mubr.bf16.gmra.mrb[0].mxu0 %v1188
    %v1693 = vpop.f32.mrb[0].mxu0
    %v1694 = vadd.f32 %v1597, %v1693
    %v1695 = vpop.f32.mrb[0].mxu0
    %v1696 = vpop.f32.mrb[0].mxu0
    %v1697 = vadd.f32 %v1600, %v1696
    %v1698 = vpop.f32.mrb[0].mxu0
    %1699 = vmatprep.mubr.bf16.mxu0 %v1224
    %1700 = vmatmul.mubr.bf16.gmra.mrb[0].mxu0 %v1192
    %v1701 = vpop.f32.mrb[0].mxu0
    %v1702 = vadd.f32 %v1605, %v1701
    %v1703 = vpop.f32.mrb[0].mxu0
    %v1704 = vpop.f32.mrb[0].mxu0
    %v1705 = vadd.f32 %v1608, %v1704
    %v1706 = vpop.f32.mrb[0].mxu0
    %1707 = vmatprep.mubr.bf16.mxu0 %v1228
    %1708 = vmatmul.mubr.bf16.gmra.mrb[0].mxu0 %v1196
    %v1709 = vpop.f32.mrb[0].mxu0
    %v1710 = vadd.f32 %v1613, %v1709
    %v1711 = vpop.f32.mrb[0].mxu0
    %v1712 = vpop.f32.mrb[0].mxu0
    %v1713 = vadd.f32 %v1616, %v1712
    %v1714 = vpop.f32.mrb[0].mxu0
    %1715 = vmatprep.mubr.bf16.mxu0 %v1232
    %1716 = vmatmul.mubr.bf16.gmra.mrb[0].mxu0 %v1200
    %v1717 = vpop.f32.mrb[0].mxu0
    %v1718 = vadd.f32 %v1621, %v1717
    %v1719 = vpop.f32.mrb[0].mxu0
    %v1720 = vpop.f32.mrb[0].mxu0
    %v1721 = vadd.f32 %v1624, %v1720
    %v1722 = vpop.f32.mrb[0].mxu0
    %1723 = vmatprep.mubr.bf16.mxu0 %v1236
    %1724 = vmatmul.mubr.bf16.gmra.mrb[0].mxu0 %v1204
    %v1725 = vpop.f32.mrb[0].mxu0
    %v1726 = vadd.f32 %v1629, %v1725
    %v1727 = vpop.f32.mrb[0].mxu0
    %v1728 = vpop.f32.mrb[0].mxu0
    %v1729 = vadd.f32 %v1632, %v1728
    %v1730 = vpop.f32.mrb[0].mxu0
    %1731 = vmatprep.mubr.bf16.mxu0 %v1240
    %1732 = vmatmul.mubr.bf16.gmra.mrb[0].mxu0 %v1208
    %v1733 = vpop.f32.mrb[0].mxu0
    %v1734 = vadd.f32 %v1637, %v1733
    %v1735 = vpop.f32.mrb[0].mxu0
    %v1736 = vpop.f32.mrb[0].mxu0
    %v1737 = vadd.f32 %v1640, %v1736
    %v1738 = vpop.f32.mrb[0].mxu0
    %1739 = vmatprep.mubr.bf16.mxu0 %v1244
    %1740 = vmatmul.mubr.bf16.gmra.mrb[0].mxu0 %v1212
    %v1741 = vpop.f32.mrb[0].mxu0
    %v1742 = vadd.f32 %v1645, %v1741
    %v1743 = vpop.f32.mrb[0].mxu0
    %v1744 = vpop.f32.mrb[0].mxu0
    %v1745 = vadd.f32 %v1648, %v1744
    %v1746 = vpop.f32.mrb[0].mxu0
    %1747 = vmatprep.mubr.bf16.mxu0 %v1248
    %1748 = vmatmul.mubr.bf16.gmra.mrb[0].mxu0 %v1216
    %v1749 = vpop.f32.mrb[0].mxu0
    %v1750 = vadd.f32 %v1653, %v1749
    %v1751 = vpop.f32.mrb[0].mxu0
    %v1752 = vpop.f32.mrb[0].mxu0
    %v1753 = vadd.f32 %v1656, %v1752
    %v1754 = vpop.f32.mrb[0].mxu0
    %1755 = vdwg.mxu0
    %1756 = vmatprep.subr.bf16.mxu0 0
    %1757 = vmatpush1.bf16.msra.mxu0 %v1498
    %1758 = vmatprep.subr.bf16.mxu0 0
    %1759 = vmatpush1.bf16.msra.mxu0 %v1499
    %1760 = vmatprep.subr.bf16.mxu0 0
    %1761 = vmatpush1.bf16.msra.mxu0 %v1500
    %1762 = vmatprep.subr.bf16.mxu0 0
    %1763 = vmatpush1.bf16.msra.mxu0 %v1501
    %1764 = vmatprep.subr.bf16.mxu0 0
    %1765 = vmatpush1.bf16.msra.mxu0 0
    %1766 = vmatprep.subr.bf16.mxu0 0
    %1767 = vmatpush1.bf16.msra.mxu0 0
    %1768 = vmatprep.subr.bf16.mxu0 0
    %1769 = vmatpush1.bf16.msra.mxu0 0
    %1770 = vmatprep.subr.bf16.mxu0 0
    %1771 = vmatpush1.bf16.msra.mxu0 0
    %1772 = vmatprep.subr.bf16.mxu0 0
    %1773 = vmatpush1.bf16.msra.mxu0 0
    %1774 = vmatprep.subr.bf16.mxu0 0
    %1775 = vmatpush1.bf16.msra.mxu0 0
    %1776 = vmatprep.subr.bf16.mxu0 0
    %1777 = vmatpush1.bf16.msra.mxu0 0
    %1778 = vmatprep.subr.bf16.mxu0 0
    %1779 = vmatpush1.bf16.msra.mxu0 0
    %1780 = vmatprep.subr.bf16.mxu0 0
    %1781 = vmatpush1.bf16.msra.mxu0 0
    %1782 = vmatprep.subr.bf16.mxu0 0
    %1783 = vmatpush1.bf16.msra.mxu0 0
    %1784 = vmatprep.subr.bf16.mxu0 0
    %1785 = vmatpush1.bf16.msra.mxu0 0
    %1786 = vmatprep.subr.bf16.mxu0 0
    %1787 = vmatpush1.bf16.msra.mxu0 0
    %1788 = vmatprep.mubr.bf16.mxu0 0
    %1789 = vmatmul.mubr.bf16.gmra.mrb[0].mxu0 %v1539
    %v1790 = vpop.f32.mrb[0].mxu0
    %v1791 = vadd.f32 %v1694, %v1790
    %v1792 = vpop.f32.mrb[0].mxu0
    %v1793 = vpop.f32.mrb[0].mxu0
    %v1794 = vadd.f32 %v1697, %v1793
    %v1795 = vpop.f32.mrb[0].mxu0
    %1796 = vmatprep.mubr.bf16.mxu0 0
    %1797 = vmatmul.mubr.bf16.gmra.mrb[0].mxu0 %v1542
    %v1798 = vpop.f32.mrb[0].mxu0
    %v1799 = vadd.f32 %v1702, %v1798
    %v1800 = vpop.f32.mrb[0].mxu0
    %v1801 = vpop.f32.mrb[0].mxu0
    %v1802 = vadd.f32 %v1705, %v1801
    %v1803 = vpop.f32.mrb[0].mxu0
    %1804 = vmatprep.mubr.bf16.mxu0 0
    %1805 = vmatmul.mubr.bf16.gmra.mrb[0].mxu0 %v1545
    %v1806 = vpop.f32.mrb[0].mxu0
    %v1807 = vadd.f32 %v1710, %v1806
    %v1808 = vpop.f32.mrb[0].mxu0
    %v1809 = vpop.f32.mrb[0].mxu0
    %v1810 = vadd.f32 %v1713, %v1809
    %v1811 = vpop.f32.mrb[0].mxu0
    %1812 = vmatprep.mubr.bf16.mxu0 0
    %1813 = vmatmul.mubr.bf16.gmra.mrb[0].mxu0 %v1548
    %v1814 = vpop.f32.mrb[0].mxu0
    %v1815 = vadd.f32 %v1718, %v1814
    %v1816 = vpop.f32.mrb[0].mxu0
    %v1817 = vpop.f32.mrb[0].mxu0
    %v1818 = vadd.f32 %v1721, %v1817
    %v1819 = vpop.f32.mrb[0].mxu0
    %1820 = vmatprep.mubr.bf16.mxu0 0
    %1821 = vmatmul.mubr.bf16.gmra.mrb[0].mxu0 %v1551
    %v1822 = vpop.f32.mrb[0].mxu0
    %v1823 = vadd.f32 %v1726, %v1822
    %v1824 = vpop.f32.mrb[0].mxu0
    %v1825 = vpop.f32.mrb[0].mxu0
    %v1826 = vadd.f32 %v1729, %v1825
    %v1827 = vpop.f32.mrb[0].mxu0
    %1828 = vmatprep.mubr.bf16.mxu0 0
    %1829 = vmatmul.mubr.bf16.gmra.mrb[0].mxu0 %v1554
    %v1830 = vpop.f32.mrb[0].mxu0
    %v1831 = vadd.f32 %v1734, %v1830
    %v1832 = vpop.f32.mrb[0].mxu0
    %v1833 = vpop.f32.mrb[0].mxu0
    %v1834 = vadd.f32 %v1737, %v1833
    %v1835 = vpop.f32.mrb[0].mxu0
    %1836 = vmatprep.mubr.bf16.mxu0 0
    %1837 = vmatmul.mubr.bf16.gmra.mrb[0].mxu0 %v1557
    %v1838 = vpop.f32.mrb[0].mxu0
    %v1839 = vadd.f32 %v1742, %v1838
    %v1840 = vpop.f32.mrb[0].mxu0
    %v1841 = vpop.f32.mrb[0].mxu0
    %v1842 = vadd.f32 %v1745, %v1841
    %v1843 = vpop.f32.mrb[0].mxu0
    %1844 = vmatprep.mubr.bf16.mxu0 0
    %1845 = vmatmul.mubr.bf16.gmra.mrb[0].mxu0 %v1560
    %v1846 = vpop.f32.mrb[0].mxu0
    %v1847 = vadd.f32 %v1750, %v1846
    %v1848 = vpop.f32.mrb[0].mxu0
    %v1849 = vpop.f32.mrb[0].mxu0
    %v1850 = vadd.f32 %v1753, %v1849
    %v1851 = vpop.f32.mrb[0].mxu0
    %1852 = vdwg.mxu0
    %v1853 = vld [vmem:[%s1] sm:$0x3]
    %v1856 = vunpack.c.l.s4 1966171168
    %v1857 = vunpack.c.0.s8 %v1856
    %v1858 = vlaneseq
    %v1859 = vshrl.u32 %v1858, 7
    %v1860 = vsub.s32 %v1857, %v1859
    %v1861 = vrot.slane %v1853, %v1860
    %v1862 = vcombine.high %v1861, %v1861
    %v1864 = vunpack.c.l.s4 1966171168
    %v1865 = vunpack.c.0.s8 %v1864
    %v1866 = vlaneseq
    %v1867 = vshrl.u32 %v1866, 7
    %v1868 = vsub.s32 %v1865, %v1867
    %v1869 = vrot.slane %v1861, %v1868
    %v1871 = vunpack.c.l.s4 1966171168
    %v1872 = vunpack.c.0.s8 %v1871
    %v1873 = vlaneseq
    %v1874 = vshrl.u32 %v1873, 7
    %v1875 = vsub.s32 %v1872, %v1874
    %v1876 = vrot.slane %v1862, %v1875
    %v1877 = vlaneseq
    %v1878 = vshrl.u32 %v1877, 7
    %v1879 = vsub.s32 0, %v1878
    %v1880 = vrot.slane %v1869, %v1879
    %v1881 = vlaneseq
    %v1882 = vshrl.u32 %v1881, 7
    %v1883 = vsub.s32 0, %v1882
    %v1884 = vrot.slane %v1876, %v1883
    %v1887 = vadd.f32 %v1791, %v1880
    %v1888 = vadd.f32 %v1794, %v1880
    %v1889 = vadd.f32 %v1799, %v1880
    %v1890 = vadd.f32 %v1802, %v1880
    %v1891 = vadd.f32 %v1807, %v1880
    %v1892 = vadd.f32 %v1810, %v1880
    %v1893 = vadd.f32 %v1815, %v1880
    %v1894 = vadd.f32 %v1818, %v1880
    %v1895 = vadd.f32 %v1823, %v1884
    %v1896 = vadd.f32 %v1826, %v1884
    %v1897 = vadd.f32 %v1831, %v1884
    %v1898 = vadd.f32 %v1834, %v1884
    %v1899 = vadd.f32 %v1839, %v1884
    %v1900 = vadd.f32 %v1842, %v1884
    %v1901 = vadd.f32 %v1847, %v1884
    %v1902 = vadd.f32 %v1850, %v1884
    %v1903 = vld [vmem:[%s7] sm:$0x1]
    %v1904 = vld [vmem:[%s8] sm:$0x1]
    %v1905 = vld [vmem:[%s9] sm:$0xff]
    %v1906 = vld [vmem:[%s9 + $0x8] sm:$0xff]
    %v1907 = vld [vmem:[%s9 + $0x10] sm:$0xff]
    %v1908 = vld [vmem:[%s9 + $0x18] sm:$0xff]
    %v1909 = vld [vmem:[%s10] sm:$0xff]
    %v1910 = vld [vmem:[%s10 + $0x8] sm:$0xff]
    %v1911 = vld [vmem:[%s10 + $0x10] sm:$0xff]
    %v1912 = vld [vmem:[%s10 + $0x18] sm:$0xff]
    %v1913 = vsel %vm350, %v1887, 0.0
    %v1914 = vsel %vm350, %v1888, 0.0
    %v1915 = vadd.f32 %v1913, %v1914
    %v1916 = vsel %vm350, %v1889, 0.0
    %v1917 = vadd.f32 %v1915, %v1916
    %v1918 = vsel %vm350, %v1890, 0.0
    %v1919 = vadd.f32 %v1917, %v1918
    %v1920 = vsel %vm350, %v1891, 0.0
    %v1921 = vadd.f32 %v1919, %v1920
    %v1922 = vsel %vm350, %v1892, 0.0
    %v1923 = vadd.f32 %v1921, %v1922
    %v1924 = vsel %vm350, %v1893, 0.0
    %v1925 = vadd.f32 %v1923, %v1924
    %v1926 = vsel %vm350, %v1894, 0.0
    %v1927 = vadd.f32 %v1925, %v1926
    %v1928 = vrot.slane %v1927, 4
    %v1929 = vadd.f32 %v1927, %v1928
    %v1930 = vrot.slane %v1929, 2
    %v1931 = vadd.f32 %v1929, %v1930
    %v1932 = vrot.slane %v1931, 1
    %v1933 = vadd.f32 %v1931, %v1932
    %v1934 = vsel %vm350, %v1895, 0.0
    %v1935 = vsel %vm350, %v1896, 0.0
    %v1936 = vadd.f32 %v1934, %v1935
    %v1937 = vsel %vm350, %v1897, 0.0
    %v1938 = vadd.f32 %v1936, %v1937
    %v1939 = vsel %vm350, %v1898, 0.0
    %v1940 = vadd.f32 %v1938, %v1939
    %v1941 = vsel %vm350, %v1899, 0.0
    %v1942 = vadd.f32 %v1940, %v1941
    %v1943 = vsel %vm350, %v1900, 0.0
    %v1944 = vadd.f32 %v1942, %v1943
    %v1945 = vsel %vm350, %v1901, 0.0
    %v1946 = vadd.f32 %v1944, %v1945
    %v1947 = vsel %vm350, %v1902, 0.0
    %v1948 = vadd.f32 %v1946, %v1947
    %v1949 = vrot.slane %v1948, 4
    %v1950 = vadd.f32 %v1948, %v1949
    %v1951 = vrot.slane %v1950, 2
    %v1952 = vadd.f32 %v1950, %v1951
    %v1953 = vrot.slane %v1952, 1
    %v1954 = vadd.f32 %v1952, %v1953
    %v1955 = vmul.f32 %v1887, %v1887
    %v1956 = vmul.f32 %v1888, %v1888
    %v1957 = vmul.f32 %v1889, %v1889
    %v1958 = vmul.f32 %v1890, %v1890
    %v1959 = vmul.f32 %v1891, %v1891
    %v1960 = vmul.f32 %v1892, %v1892
    %v1961 = vmul.f32 %v1893, %v1893
    %v1962 = vmul.f32 %v1894, %v1894
    %v1963 = vmul.f32 %v1895, %v1895
    %v1964 = vmul.f32 %v1896, %v1896
    %v1965 = vmul.f32 %v1897, %v1897
    %v1966 = vmul.f32 %v1898, %v1898
    %v1967 = vmul.f32 %v1899, %v1899
    %v1968 = vmul.f32 %v1900, %v1900
    %v1969 = vmul.f32 %v1901, %v1901
    %v1970 = vmul.f32 %v1902, %v1902
    %v1971 = vsel %vm350, %v1955, 0.0
    %v1972 = vsel %vm350, %v1956, 0.0
    %v1973 = vadd.f32 %v1971, %v1972
    %v1974 = vsel %vm350, %v1957, 0.0
    %v1975 = vadd.f32 %v1973, %v1974
    %v1976 = vsel %vm350, %v1958, 0.0
    %v1977 = vadd.f32 %v1975, %v1976
    %v1978 = vsel %vm350, %v1959, 0.0
    %v1979 = vadd.f32 %v1977, %v1978
    %v1980 = vsel %vm350, %v1960, 0.0
    %v1981 = vadd.f32 %v1979, %v1980
    %v1982 = vsel %vm350, %v1961, 0.0
    %v1983 = vadd.f32 %v1981, %v1982
    %v1984 = vsel %vm350, %v1962, 0.0
    %v1985 = vadd.f32 %v1983, %v1984
    %v1986 = vrot.slane %v1985, 4
    %v1987 = vadd.f32 %v1985, %v1986
    %v1988 = vrot.slane %v1987, 2
    %v1989 = vadd.f32 %v1987, %v1988
    %v1990 = vrot.slane %v1989, 1
    %v1991 = vadd.f32 %v1989, %v1990
    %v1992 = vsel %vm350, %v1963, 0.0
    %v1993 = vsel %vm350, %v1964, 0.0
    %v1994 = vadd.f32 %v1992, %v1993
    %v1995 = vsel %vm350, %v1965, 0.0
    %v1996 = vadd.f32 %v1994, %v1995
    %v1997 = vsel %vm350, %v1966, 0.0
    %v1998 = vadd.f32 %v1996, %v1997
    %v1999 = vsel %vm350, %v1967, 0.0
    %v2000 = vadd.f32 %v1998, %v1999
    %v2001 = vsel %vm350, %v1968, 0.0
    %v2002 = vadd.f32 %v2000, %v2001
    %v2003 = vsel %vm350, %v1969, 0.0
    %v2004 = vadd.f32 %v2002, %v2003
    %v2005 = vsel %vm350, %v1970, 0.0
    %v2006 = vadd.f32 %v2004, %v2005
    %v2007 = vrot.slane %v2006, 4
    %v2008 = vadd.f32 %v2006, %v2007
    %v2009 = vrot.slane %v2008, 2
    %v2010 = vadd.f32 %v2008, %v2009
    %v2011 = vrot.slane %v2010, 1
    %v2012 = vadd.f32 %v2010, %v2011
    %v2015 = vsel %vm194, %v1954, %v1933
    %v2016 = vsel %vm350, %v2015, 0
    %2018 = vmatprep.subr.mxu0 0.0
    %2019 = vmatpush1.msra.mxu0 %v1905
    %2020 = vmatprep.subr.mxu0 0.0
    %2021 = vmatpush1.msra.mxu0 %v1906
    %2022 = vmatprep.subr.mxu0 0.0
    %2023 = vmatpush1.msra.mxu0 %v1907
    %2024 = vmatprep.subr.mxu0 0.0
    %2025 = vmatpush1.msra.mxu0 %v1908
    %2026 = vmatprep.subr.mxu0 0.0
    %2027 = vmatpush1.msra.mxu0 0.0
    %2028 = vmatprep.subr.mxu0 0.0
    %2029 = vmatpush1.msra.mxu0 0.0
    %2030 = vmatprep.subr.mxu0 0.0
    %2031 = vmatpush1.msra.mxu0 0.0
    %2032 = vmatprep.subr.mxu0 0.0
    %2033 = vmatpush1.msra.mxu0 0.0
    %2034 = vmatprep.subr.mxu0 0.0
    %2035 = vmatpush1.msra.mxu0 0.0
    %2036 = vmatprep.subr.mxu0 0.0
    %2037 = vmatpush1.msra.mxu0 0.0
    %2038 = vmatprep.subr.mxu0 0.0
    %2039 = vmatpush1.msra.mxu0 0.0
    %2040 = vmatprep.subr.mxu0 0.0
    %2041 = vmatpush1.msra.mxu0 0.0
    %2042 = vmatprep.subr.mxu0 0.0
    %2043 = vmatpush1.msra.mxu0 0.0
    %2044 = vmatprep.subr.mxu0 0.0
    %2045 = vmatpush1.msra.mxu0 0.0
    %2046 = vmatprep.subr.mxu0 0.0
    %2047 = vmatpush1.msra.mxu0 0.0
    %2048 = vmatprep.subr.mxu0 0.0
    %2049 = vmatpush1.msra.mxu0 0.0
    %2050 = vmatprep.subr.mxu0 0.0
    %2051 = vmatpush1.msra.mxu0 0.0
    %2052 = vmatprep.subr.mxu0 0.0
    %2053 = vmatpush1.msra.mxu0 0.0
    %2054 = vmatprep.subr.mxu0 0.0
    %2055 = vmatpush1.msra.mxu0 0.0
    %2056 = vmatprep.subr.mxu0 0.0
    %2057 = vmatpush1.msra.mxu0 0.0
    %2058 = vmatprep.subr.mxu0 0.0
    %2059 = vmatpush1.msra.mxu0 0.0
    %2060 = vmatprep.subr.mxu0 0.0
    %2061 = vmatpush1.msra.mxu0 0.0
    %2062 = vmatprep.subr.mxu0 0.0
    %2063 = vmatpush1.msra.mxu0 0.0
    %2064 = vmatprep.subr.mxu0 0.0
    %2065 = vmatpush1.msra.mxu0 0.0
    %2066 = vmatprep.subr.mxu0 0.0
    %2067 = vmatpush1.msra.mxu0 0.0
    %2068 = vmatprep.subr.mxu0 0.0
    %2069 = vmatpush1.msra.mxu0 0.0
    %2070 = vmatprep.subr.mxu0 0.0
    %2071 = vmatpush1.msra.mxu0 0.0
    %2072 = vmatprep.subr.mxu0 0.0
    %2073 = vmatpush1.msra.mxu0 0.0
    %2074 = vmatprep.subr.mxu0 0.0
    %2075 = vmatpush1.msra.mxu0 0.0
    %2076 = vmatprep.subr.mxu0 0.0
    %2077 = vmatpush1.msra.mxu0 0.0
    %2078 = vmatprep.subr.mxu0 0.0
    %2079 = vmatpush1.msra.mxu0 0.0
    %2080 = vmatprep.subr.mxu0 0.0
    %2081 = vmatpush1.msra.mxu0 0.0
    %2082 = vmatprep.mubr.f32.mxu0 0.0
    %2083 = vmatmul.mubr.f32.gmra.mrb[0].mxu0 %v2016
    %v2084 = vpop.f32.mrb[0].mxu0
    %v2085 = vadd.f32 0.0, %v2084
    %v2086 = vpop.f32.mrb[0].mxu0
    %2087 = vdwg.mxu0
    %v2088 = vrcp.pop 64.0
    %v2089 = vmul.f32 %v2085, %v2088
    %v2092 = vsel %vm194, %v2012, %v1991
    %v2093 = vsel %vm350, %v2092, 0
    %2095 = vmatprep.subr.mxu0 0.0
    %2096 = vmatpush1.msra.mxu0 %v1905
    %2097 = vmatprep.subr.mxu0 0.0
    %2098 = vmatpush1.msra.mxu0 %v1906
    %2099 = vmatprep.subr.mxu0 0.0
    %2100 = vmatpush1.msra.mxu0 %v1907
    %2101 = vmatprep.subr.mxu0 0.0
    %2102 = vmatpush1.msra.mxu0 %v1908
    %2103 = vmatprep.subr.mxu0 0.0
    %2104 = vmatpush1.msra.mxu0 0.0
    %2105 = vmatprep.subr.mxu0 0.0
    %2106 = vmatpush1.msra.mxu0 0.0
    %2107 = vmatprep.subr.mxu0 0.0
    %2108 = vmatpush1.msra.mxu0 0.0
    %2109 = vmatprep.subr.mxu0 0.0
    %2110 = vmatpush1.msra.mxu0 0.0
    %2111 = vmatprep.subr.mxu0 0.0
    %2112 = vmatpush1.msra.mxu0 0.0
    %2113 = vmatprep.subr.mxu0 0.0
    %2114 = vmatpush1.msra.mxu0 0.0
    %2115 = vmatprep.subr.mxu0 0.0
    %2116 = vmatpush1.msra.mxu0 0.0
    %2117 = vmatprep.subr.mxu0 0.0
    %2118 = vmatpush1.msra.mxu0 0.0
    %2119 = vmatprep.subr.mxu0 0.0
    %2120 = vmatpush1.msra.mxu0 0.0
    %2121 = vmatprep.subr.mxu0 0.0
    %2122 = vmatpush1.msra.mxu0 0.0
    %2123 = vmatprep.subr.mxu0 0.0
    %2124 = vmatpush1.msra.mxu0 0.0
    %2125 = vmatprep.subr.mxu0 0.0
    %2126 = vmatpush1.msra.mxu0 0.0
    %2127 = vmatprep.subr.mxu0 0.0
    %2128 = vmatpush1.msra.mxu0 0.0
    %2129 = vmatprep.subr.mxu0 0.0
    %2130 = vmatpush1.msra.mxu0 0.0
    %2131 = vmatprep.subr.mxu0 0.0
    %2132 = vmatpush1.msra.mxu0 0.0
    %2133 = vmatprep.subr.mxu0 0.0
    %2134 = vmatpush1.msra.mxu0 0.0
    %2135 = vmatprep.subr.mxu0 0.0
    %2136 = vmatpush1.msra.mxu0 0.0
    %2137 = vmatprep.subr.mxu0 0.0
    %2138 = vmatpush1.msra.mxu0 0.0
    %2139 = vmatprep.subr.mxu0 0.0
    %2140 = vmatpush1.msra.mxu0 0.0
    %2141 = vmatprep.subr.mxu0 0.0
    %2142 = vmatpush1.msra.mxu0 0.0
    %2143 = vmatprep.subr.mxu0 0.0
    %2144 = vmatpush1.msra.mxu0 0.0
    %2145 = vmatprep.subr.mxu0 0.0
    %2146 = vmatpush1.msra.mxu0 0.0
    %2147 = vmatprep.subr.mxu0 0.0
    %2148 = vmatpush1.msra.mxu0 0.0
    %2149 = vmatprep.subr.mxu0 0.0
    %2150 = vmatpush1.msra.mxu0 0.0
    %2151 = vmatprep.subr.mxu0 0.0
    %2152 = vmatpush1.msra.mxu0 0.0
    %2153 = vmatprep.subr.mxu0 0.0
    %2154 = vmatpush1.msra.mxu0 0.0
    %2155 = vmatprep.subr.mxu0 0.0
    %2156 = vmatpush1.msra.mxu0 0.0
    %2157 = vmatprep.subr.mxu0 0.0
    %2158 = vmatpush1.msra.mxu0 0.0
    %2159 = vmatprep.mubr.f32.mxu0 0.0
    %2160 = vmatmul.mubr.f32.gmra.mrb[0].mxu0 %v2093
    %v2161 = vpop.f32.mrb[0].mxu0
    %v2162 = vadd.f32 0.0, %v2161
    %v2163 = vpop.f32.mrb[0].mxu0
    %2164 = vdwg.mxu0
    %v2165 = vmul.f32 %v2162, %v2088
    %v2166 = vmul.f32 %v2089, %v2089
    %v2167 = vsub.f32 %v2165, %v2166
    %v2168 = vadd.f32 %v2167, 1e-05
    %v2169 = vrsqrt.pop %v2168
    %v2171 = vsel %vm350, %v2089, 0
    %2173 = vmatprep.subr.mxu0 0.0
    %2174 = vmatpush1.msra.mxu0 %v1909
    %2175 = vmatprep.subr.mxu0 0.0
    %2176 = vmatpush1.msra.mxu0 %v1910
    %2177 = vmatprep.subr.mxu0 0.0
    %2178 = vmatpush1.msra.mxu0 %v1911
    %2179 = vmatprep.subr.mxu0 0.0
    %2180 = vmatpush1.msra.mxu0 %v1912
    %2181 = vmatprep.subr.mxu0 0.0
    %2182 = vmatpush1.msra.mxu0 0.0
    %2183 = vmatprep.subr.mxu0 0.0
    %2184 = vmatpush1.msra.mxu0 0.0
    %2185 = vmatprep.subr.mxu0 0.0
    %2186 = vmatpush1.msra.mxu0 0.0
    %2187 = vmatprep.subr.mxu0 0.0
    %2188 = vmatpush1.msra.mxu0 0.0
    %2189 = vmatprep.subr.mxu0 0.0
    %2190 = vmatpush1.msra.mxu0 0.0
    %2191 = vmatprep.subr.mxu0 0.0
    %2192 = vmatpush1.msra.mxu0 0.0
    %2193 = vmatprep.subr.mxu0 0.0
    %2194 = vmatpush1.msra.mxu0 0.0
    %2195 = vmatprep.subr.mxu0 0.0
    %2196 = vmatpush1.msra.mxu0 0.0
    %2197 = vmatprep.subr.mxu0 0.0
    %2198 = vmatpush1.msra.mxu0 0.0
    %2199 = vmatprep.subr.mxu0 0.0
    %2200 = vmatpush1.msra.mxu0 0.0
    %2201 = vmatprep.subr.mxu0 0.0
    %2202 = vmatpush1.msra.mxu0 0.0
    %2203 = vmatprep.subr.mxu0 0.0
    %2204 = vmatpush1.msra.mxu0 0.0
    %2205 = vmatprep.subr.mxu0 0.0
    %2206 = vmatpush1.msra.mxu0 0.0
    %2207 = vmatprep.subr.mxu0 0.0
    %2208 = vmatpush1.msra.mxu0 0.0
    %2209 = vmatprep.subr.mxu0 0.0
    %2210 = vmatpush1.msra.mxu0 0.0
    %2211 = vmatprep.subr.mxu0 0.0
    %2212 = vmatpush1.msra.mxu0 0.0
    %2213 = vmatprep.subr.mxu0 0.0
    %2214 = vmatpush1.msra.mxu0 0.0
    %2215 = vmatprep.subr.mxu0 0.0
    %2216 = vmatpush1.msra.mxu0 0.0
    %2217 = vmatprep.subr.mxu0 0.0
    %2218 = vmatpush1.msra.mxu0 0.0
    %2219 = vmatprep.subr.mxu0 0.0
    %2220 = vmatpush1.msra.mxu0 0.0
    %2221 = vmatprep.subr.mxu0 0.0
    %2222 = vmatpush1.msra.mxu0 0.0
    %2223 = vmatprep.subr.mxu0 0.0
    %2224 = vmatpush1.msra.mxu0 0.0
    %2225 = vmatprep.subr.mxu0 0.0
    %2226 = vmatpush1.msra.mxu0 0.0
    %2227 = vmatprep.subr.mxu0 0.0
    %2228 = vmatpush1.msra.mxu0 0.0
    %2229 = vmatprep.subr.mxu0 0.0
    %2230 = vmatpush1.msra.mxu0 0.0
    %2231 = vmatprep.subr.mxu0 0.0
    %2232 = vmatpush1.msra.mxu0 0.0
    %2233 = vmatprep.subr.mxu0 0.0
    %2234 = vmatpush1.msra.mxu0 0.0
    %2235 = vmatprep.subr.mxu0 0.0
    %2236 = vmatpush1.msra.mxu0 0.0
    %2237 = vmatprep.mubr.f32.mxu0 0.0
    %2238 = vmatmul.mubr.f32.gmra.mrb[0].mxu0 %v2171
    %v2239 = vpop.f32.mrb[0].mxu0
    %v2240 = vadd.f32 0.0, %v2239
    %v2241 = vpop.f32.mrb[0].mxu0
    %2242 = vdwg.mxu0
    %v2244 = vsel %vm350, %v2169, 0
    %2246 = vmatprep.subr.mxu0 0.0
    %2247 = vmatpush1.msra.mxu0 %v1909
    %2248 = vmatprep.subr.mxu0 0.0
    %2249 = vmatpush1.msra.mxu0 %v1910
    %2250 = vmatprep.subr.mxu0 0.0
    %2251 = vmatpush1.msra.mxu0 %v1911
    %2252 = vmatprep.subr.mxu0 0.0
    %2253 = vmatpush1.msra.mxu0 %v1912
    %2254 = vmatprep.subr.mxu0 0.0
    %2255 = vmatpush1.msra.mxu0 0.0
    %2256 = vmatprep.subr.mxu0 0.0
    %2257 = vmatpush1.msra.mxu0 0.0
    %2258 = vmatprep.subr.mxu0 0.0
    %2259 = vmatpush1.msra.mxu0 0.0
    %2260 = vmatprep.subr.mxu0 0.0
    %2261 = vmatpush1.msra.mxu0 0.0
    %2262 = vmatprep.subr.mxu0 0.0
    %2263 = vmatpush1.msra.mxu0 0.0
    %2264 = vmatprep.subr.mxu0 0.0
    %2265 = vmatpush1.msra.mxu0 0.0
    %2266 = vmatprep.subr.mxu0 0.0
    %2267 = vmatpush1.msra.mxu0 0.0
    %2268 = vmatprep.subr.mxu0 0.0
    %2269 = vmatpush1.msra.mxu0 0.0
    %2270 = vmatprep.subr.mxu0 0.0
    %2271 = vmatpush1.msra.mxu0 0.0
    %2272 = vmatprep.subr.mxu0 0.0
    %2273 = vmatpush1.msra.mxu0 0.0
    %2274 = vmatprep.subr.mxu0 0.0
    %2275 = vmatpush1.msra.mxu0 0.0
    %2276 = vmatprep.subr.mxu0 0.0
    %2277 = vmatpush1.msra.mxu0 0.0
    %2278 = vmatprep.subr.mxu0 0.0
    %2279 = vmatpush1.msra.mxu0 0.0
    %2280 = vmatprep.subr.mxu0 0.0
    %2281 = vmatpush1.msra.mxu0 0.0
    %2282 = vmatprep.subr.mxu0 0.0
    %2283 = vmatpush1.msra.mxu0 0.0
    %2284 = vmatprep.subr.mxu0 0.0
    %2285 = vmatpush1.msra.mxu0 0.0
    %2286 = vmatprep.subr.mxu0 0.0
    %2287 = vmatpush1.msra.mxu0 0.0
    %2288 = vmatprep.subr.mxu0 0.0
    %2289 = vmatpush1.msra.mxu0 0.0
    %2290 = vmatprep.subr.mxu0 0.0
    %2291 = vmatpush1.msra.mxu0 0.0
    %2292 = vmatprep.subr.mxu0 0.0
    %2293 = vmatpush1.msra.mxu0 0.0
    %2294 = vmatprep.subr.mxu0 0.0
    %2295 = vmatpush1.msra.mxu0 0.0
    %2296 = vmatprep.subr.mxu0 0.0
    %2297 = vmatpush1.msra.mxu0 0.0
    %2298 = vmatprep.subr.mxu0 0.0
    %2299 = vmatpush1.msra.mxu0 0.0
    %2300 = vmatprep.subr.mxu0 0.0
    %2301 = vmatpush1.msra.mxu0 0.0
    %2302 = vmatprep.subr.mxu0 0.0
    %2303 = vmatpush1.msra.mxu0 0.0
    %2304 = vmatprep.subr.mxu0 0.0
    %2305 = vmatpush1.msra.mxu0 0.0
    %2306 = vmatprep.subr.mxu0 0.0
    %2307 = vmatpush1.msra.mxu0 0.0
    %2308 = vmatprep.subr.mxu0 0.0
    %2309 = vmatpush1.msra.mxu0 0.0
    %2310 = vmatprep.mubr.f32.mxu0 0.0
    %2311 = vmatmul.mubr.f32.gmra.mrb[0].mxu0 %v2244
    %v2312 = vpop.f32.mrb[0].mxu0
    %v2313 = vadd.f32 0.0, %v2312
    %v2314 = vpop.f32.mrb[0].mxu0
    %2315 = vdwg.mxu0
    %v2318 = vunpack.c.l.s4 1966171168
    %v2319 = vunpack.c.0.s8 %v2318
    %v2320 = vlaneseq
    %v2321 = vshrl.u32 %v2320, 7
    %v2322 = vsub.s32 %v2319, %v2321
    %v2323 = vrot.slane %v2240, %v2322
    %v2324 = vcombine.high %v2323, %v2323
    %v2326 = vunpack.c.l.s4 1966171168
    %v2327 = vunpack.c.0.s8 %v2326
    %v2328 = vlaneseq
    %v2329 = vshrl.u32 %v2328, 7
    %v2330 = vsub.s32 %v2327, %v2329
    %v2331 = vrot.slane %v2323, %v2330
    %v2333 = vunpack.c.l.s4 1966171168
    %v2334 = vunpack.c.0.s8 %v2333
    %v2335 = vlaneseq
    %v2336 = vshrl.u32 %v2335, 7
    %v2337 = vsub.s32 %v2334, %v2336
    %v2338 = vrot.slane %v2324, %v2337
    %v2339 = vlaneseq
    %v2340 = vshrl.u32 %v2339, 7
    %v2341 = vsub.s32 0, %v2340
    %v2342 = vrot.slane %v2331, %v2341
    %v2343 = vlaneseq
    %v2344 = vshrl.u32 %v2343, 7
    %v2345 = vsub.s32 0, %v2344
    %v2346 = vrot.slane %v2338, %v2345
    %v2349 = vsub.f32 %v1887, %v2342
    %v2350 = vsub.f32 %v1888, %v2342
    %v2351 = vsub.f32 %v1889, %v2342
    %v2352 = vsub.f32 %v1890, %v2342
    %v2353 = vsub.f32 %v1891, %v2342
    %v2354 = vsub.f32 %v1892, %v2342
    %v2355 = vsub.f32 %v1893, %v2342
    %v2356 = vsub.f32 %v1894, %v2342
    %v2357 = vsub.f32 %v1895, %v2346
    %v2358 = vsub.f32 %v1896, %v2346
    %v2359 = vsub.f32 %v1897, %v2346
    %v2360 = vsub.f32 %v1898, %v2346
    %v2361 = vsub.f32 %v1899, %v2346
    %v2362 = vsub.f32 %v1900, %v2346
    %v2363 = vsub.f32 %v1901, %v2346
    %v2364 = vsub.f32 %v1902, %v2346
    %v2367 = vunpack.c.l.s4 1966171168
    %v2368 = vunpack.c.0.s8 %v2367
    %v2369 = vlaneseq
    %v2370 = vshrl.u32 %v2369, 7
    %v2371 = vsub.s32 %v2368, %v2370
    %v2372 = vrot.slane %v2313, %v2371
    %v2373 = vcombine.high %v2372, %v2372
    %v2375 = vunpack.c.l.s4 1966171168
    %v2376 = vunpack.c.0.s8 %v2375
    %v2377 = vlaneseq
    %v2378 = vshrl.u32 %v2377, 7
    %v2379 = vsub.s32 %v2376, %v2378
    %v2380 = vrot.slane %v2372, %v2379
    %v2382 = vunpack.c.l.s4 1966171168
    %v2383 = vunpack.c.0.s8 %v2382
    %v2384 = vlaneseq
    %v2385 = vshrl.u32 %v2384, 7
    %v2386 = vsub.s32 %v2383, %v2385
    %v2387 = vrot.slane %v2373, %v2386
    %v2388 = vlaneseq
    %v2389 = vshrl.u32 %v2388, 7
    %v2390 = vsub.s32 0, %v2389
    %v2391 = vrot.slane %v2380, %v2390
    %v2392 = vlaneseq
    %v2393 = vshrl.u32 %v2392, 7
    %v2394 = vsub.s32 0, %v2393
    %v2395 = vrot.slane %v2387, %v2394
    %v2398 = vmul.f32 %v2349, %v2391
    %v2399 = vmul.f32 %v2350, %v2391
    %v2400 = vmul.f32 %v2351, %v2391
    %v2401 = vmul.f32 %v2352, %v2391
    %v2402 = vmul.f32 %v2353, %v2391
    %v2403 = vmul.f32 %v2354, %v2391
    %v2404 = vmul.f32 %v2355, %v2391
    %v2405 = vmul.f32 %v2356, %v2391
    %v2406 = vmul.f32 %v2357, %v2395
    %v2407 = vmul.f32 %v2358, %v2395
    %v2408 = vmul.f32 %v2359, %v2395
    %v2409 = vmul.f32 %v2360, %v2395
    %v2410 = vmul.f32 %v2361, %v2395
    %v2411 = vmul.f32 %v2362, %v2395
    %v2412 = vmul.f32 %v2363, %v2395
    %v2413 = vmul.f32 %v2364, %v2395
    %v2415 = vlaneseq
    %v2416 = vshrl.u32 %v2415, 7
    %v2417 = vsub.s32 0, %v2416
    %v2418 = vrot.slane %v1903, %v2417
    %v2420 = vmul.f32 %v2398, %v2418
    %v2421 = vmul.f32 %v2399, %v2418
    %v2422 = vmul.f32 %v2400, %v2418
    %v2423 = vmul.f32 %v2401, %v2418
    %v2424 = vmul.f32 %v2402, %v2418
    %v2425 = vmul.f32 %v2403, %v2418
    %v2426 = vmul.f32 %v2404, %v2418
    %v2427 = vmul.f32 %v2405, %v2418
    %v2428 = vmul.f32 %v2406, %v2418
    %v2429 = vmul.f32 %v2407, %v2418
    %v2430 = vmul.f32 %v2408, %v2418
    %v2431 = vmul.f32 %v2409, %v2418
    %v2432 = vmul.f32 %v2410, %v2418
    %v2433 = vmul.f32 %v2411, %v2418
    %v2434 = vmul.f32 %v2412, %v2418
    %v2435 = vmul.f32 %v2413, %v2418
    %v2437 = vlaneseq
    %v2438 = vshrl.u32 %v2437, 7
    %v2439 = vsub.s32 0, %v2438
    %v2440 = vrot.slane %v1904, %v2439
    %v2442 = vadd.f32 %v2420, %v2440
    %v2443 = vadd.f32 %v2421, %v2440
    %v2444 = vadd.f32 %v2422, %v2440
    %v2445 = vadd.f32 %v2423, %v2440
    %v2446 = vadd.f32 %v2424, %v2440
    %v2447 = vadd.f32 %v2425, %v2440
    %v2448 = vadd.f32 %v2426, %v2440
    %v2449 = vadd.f32 %v2427, %v2440
    %v2450 = vadd.f32 %v2428, %v2440
    %v2451 = vadd.f32 %v2429, %v2440
    %v2452 = vadd.f32 %v2430, %v2440
    %v2453 = vadd.f32 %v2431, %v2440
    %v2454 = vadd.f32 %v2432, %v2440
    %v2455 = vadd.f32 %v2433, %v2440
    %v2456 = vadd.f32 %v2434, %v2440
    %v2457 = vadd.f32 %v2435, %v2440
    %v2458 = vxor.u32 %v2442, 2147483648
    %v2459 = vxor.u32 %v2443, 2147483648
    %v2460 = vxor.u32 %v2444, 2147483648
    %v2461 = vxor.u32 %v2445, 2147483648
    %v2462 = vxor.u32 %v2446, 2147483648
    %v2463 = vxor.u32 %v2447, 2147483648
    %v2464 = vxor.u32 %v2448, 2147483648
    %v2465 = vxor.u32 %v2449, 2147483648
    %v2466 = vxor.u32 %v2450, 2147483648
    %v2467 = vxor.u32 %v2451, 2147483648
    %v2468 = vxor.u32 %v2452, 2147483648
    %v2469 = vxor.u32 %v2453, 2147483648
    %v2470 = vxor.u32 %v2454, 2147483648
    %v2471 = vxor.u32 %v2455, 2147483648
    %v2472 = vxor.u32 %v2456, 2147483648
    %v2473 = vxor.u32 %v2457, 2147483648
    %v2474 = vmul.f32 %v2458, 1.442695
    %v2475 = vpow.pop %v2474
    %v2476 = vmul.f32 %v2459, 1.442695
    %v2477 = vpow.pop %v2476
    %v2478 = vmul.f32 %v2460, 1.442695
    %v2479 = vpow.pop %v2478
    %v2480 = vmul.f32 %v2461, 1.442695
    %v2481 = vpow.pop %v2480
    %v2482 = vmul.f32 %v2462, 1.442695
    %v2483 = vpow.pop %v2482
    %v2484 = vmul.f32 %v2463, 1.442695
    %v2485 = vpow.pop %v2484
    %v2486 = vmul.f32 %v2464, 1.442695
    %v2487 = vpow.pop %v2486
    %v2488 = vmul.f32 %v2465, 1.442695
    %v2489 = vpow.pop %v2488
    %v2490 = vmul.f32 %v2466, 1.442695
    %v2491 = vpow.pop %v2490
    %v2492 = vmul.f32 %v2467, 1.442695
    %v2493 = vpow.pop %v2492
    %v2494 = vmul.f32 %v2468, 1.442695
    %v2495 = vpow.pop %v2494
    %v2496 = vmul.f32 %v2469, 1.442695
    %v2497 = vpow.pop %v2496
    %v2498 = vmul.f32 %v2470, 1.442695
    %v2499 = vpow.pop %v2498
    %v2500 = vmul.f32 %v2471, 1.442695
    %v2501 = vpow.pop %v2500
    %v2502 = vmul.f32 %v2472, 1.442695
    %v2503 = vpow.pop %v2502
    %v2504 = vmul.f32 %v2473, 1.442695
    %v2505 = vpow.pop %v2504
    %v2506 = vadd.f32 %v2475, 1.0
    %v2507 = vadd.f32 %v2477, 1.0
    %v2508 = vadd.f32 %v2479, 1.0
    %v2509 = vadd.f32 %v2481, 1.0
    %v2510 = vadd.f32 %v2483, 1.0
    %v2511 = vadd.f32 %v2485, 1.0
    %v2512 = vadd.f32 %v2487, 1.0
    %v2513 = vadd.f32 %v2489, 1.0
    %v2514 = vadd.f32 %v2491, 1.0
    %v2515 = vadd.f32 %v2493, 1.0
    %v2516 = vadd.f32 %v2495, 1.0
    %v2517 = vadd.f32 %v2497, 1.0
    %v2518 = vadd.f32 %v2499, 1.0
    %v2519 = vadd.f32 %v2501, 1.0
    %v2520 = vadd.f32 %v2503, 1.0
    %v2521 = vadd.f32 %v2505, 1.0
    %v2522 = vrcp.pop %v2506
    %v2523 = vmul.f32 1.0, %v2522
    %v2524 = vrcp.pop %v2507
    %v2525 = vmul.f32 1.0, %v2524
    %v2526 = vrcp.pop %v2508
    %v2527 = vmul.f32 1.0, %v2526
    %v2528 = vrcp.pop %v2509
    %v2529 = vmul.f32 1.0, %v2528
    %v2530 = vrcp.pop %v2510
    %v2531 = vmul.f32 1.0, %v2530
    %v2532 = vrcp.pop %v2511
    %v2533 = vmul.f32 1.0, %v2532
    %v2534 = vrcp.pop %v2512
    %v2535 = vmul.f32 1.0, %v2534
    %v2536 = vrcp.pop %v2513
    %v2537 = vmul.f32 1.0, %v2536
    %v2538 = vrcp.pop %v2514
    %v2539 = vmul.f32 1.0, %v2538
    %v2540 = vrcp.pop %v2515
    %v2541 = vmul.f32 1.0, %v2540
    %v2542 = vrcp.pop %v2516
    %v2543 = vmul.f32 1.0, %v2542
    %v2544 = vrcp.pop %v2517
    %v2545 = vmul.f32 1.0, %v2544
    %v2546 = vrcp.pop %v2518
    %v2547 = vmul.f32 1.0, %v2546
    %v2548 = vrcp.pop %v2519
    %v2549 = vmul.f32 1.0, %v2548
    %v2550 = vrcp.pop %v2520
    %v2551 = vmul.f32 1.0, %v2550
    %v2552 = vrcp.pop %v2521
    %v2553 = vmul.f32 1.0, %v2552
    %v2554 = vmul.f32 %v2442, %v2523
    %v2555 = vmul.f32 %v2443, %v2525
    %v2556 = vmul.f32 %v2444, %v2527
    %v2557 = vmul.f32 %v2445, %v2529
    %v2558 = vmul.f32 %v2446, %v2531
    %v2559 = vmul.f32 %v2447, %v2533
    %v2560 = vmul.f32 %v2448, %v2535
    %v2561 = vmul.f32 %v2449, %v2537
    %v2562 = vmul.f32 %v2450, %v2539
    %v2563 = vmul.f32 %v2451, %v2541
    %v2564 = vmul.f32 %v2452, %v2543
    %v2565 = vmul.f32 %v2453, %v2545
    %v2566 = vmul.f32 %v2454, %v2547
    %v2567 = vmul.f32 %v2455, %v2549
    %v2568 = vmul.f32 %v2456, %v2551
    %v2569 = vmul.f32 %v2457, %v2553
    %2570 = vst.msk [vmem:[#allocation3] sm:$0xff] %vm350, 0.0
    %vm2571 = vcmask 254976
    %2572 = vst.msk [vmem:[#allocation3 + $0x8] sm:$0x3] %vm2571, 0.0
    %2573 = vst.msk [vmem:[#allocation3 + $0x10] sm:$0xff] %vm350, 0.0
    %2574 = vst.msk [vmem:[#allocation3 + $0x18] sm:$0x3] %vm2571, 0.0
    %2575 = vst.msk [vmem:[#allocation3 + $0x20] sm:$0xff] %vm350, 0.0
    %2576 = vst.msk [vmem:[#allocation3 + $0x28] sm:$0x3] %vm2571, 0.0
    %2577 = vst.msk [vmem:[#allocation3 + $0x30] sm:$0xff] %vm350, 0.0
    %2578 = vst.msk [vmem:[#allocation3 + $0x38] sm:$0x3] %vm2571, 0.0
    %2579 = vst.msk [vmem:[#allocation3 + $0x40] sm:$0xff] %vm350, 0.0
    %2580 = vst.msk [vmem:[#allocation3 + $0x48] sm:$0x3] %vm2571, 0.0
    %2581 = vst.msk [vmem:[#allocation3 + $0x50] sm:$0xff] %vm350, 0.0
    %2582 = vst.msk [vmem:[#allocation3 + $0x58] sm:$0x3] %vm2571, 0.0
    %2583 = vst.msk [vmem:[#allocation3 + $0x60] sm:$0xff] %vm350, 0.0
    %2584 = vst.msk [vmem:[#allocation3 + $0x68] sm:$0x3] %vm2571, 0.0
    %2585 = vst.msk [vmem:[#allocation3 + $0x70] sm:$0xff] %vm350, 0.0
    %2586 = vst.msk [vmem:[#allocation3 + $0x78] sm:$0x3] %vm2571, 0.0
    %2587 = vst.msk [vmem:[#allocation3 + $0x80] sm:$0xff] %vm350, 0.0
    %2588 = vst.msk [vmem:[#allocation3 + $0x88] sm:$0x3] %vm2571, 0.0
    %2589 = vst.msk [vmem:[#allocation3 + $0x90] sm:$0xff] %vm350, 0.0
    %2590 = vst.msk [vmem:[#allocation3 + $0x98] sm:$0x3] %vm2571, 0.0
    %2591 = vst.msk [vmem:[#allocation3 + $0xa0] sm:$0xff] %vm350, 0.0
    %2592 = vst.msk [vmem:[#allocation3 + $0xa8] sm:$0x3] %vm2571, 0.0
    %2593 = vst.msk [vmem:[#allocation3 + $0xb0] sm:$0xff] %vm350, 0.0
    %2594 = vst.msk [vmem:[#allocation3 + $0xb8] sm:$0x3] %vm2571, 0.0
    %2595 = vst.msk [vmem:[#allocation3 + $0xc0] sm:$0xff] %vm350, 0.0
    %2596 = vst.msk [vmem:[#allocation3 + $0xc8] sm:$0x3] %vm2571, 0.0
    %2597 = vst.msk [vmem:[#allocation3 + $0xd0] sm:$0xff] %vm350, 0.0
    %2598 = vst.msk [vmem:[#allocation3 + $0xd8] sm:$0x3] %vm2571, 0.0
    %2599 = vst.msk [vmem:[#allocation3 + $0xe0] sm:$0xff] %vm350, 0.0
    %2600 = vst.msk [vmem:[#allocation3 + $0xe8] sm:$0x3] %vm2571, 0.0
    %2601 = vst.msk [vmem:[#allocation3 + $0xf0] sm:$0xff] %vm350, 0.0
    %2602 = vst.msk [vmem:[#allocation3 + $0xf8] sm:$0x3] %vm2571, 0.0
    %2603 = vst.msk [vmem:[#allocation3 + $0x100] sm:$0xff] %vm350, 0.0
    %2604 = vst.msk [vmem:[#allocation3 + $0x108] sm:$0x3] %vm2571, 0.0
    %2605 = vst.msk [vmem:[#allocation3 + $0x110] sm:$0xff] %vm350, 0.0
    %2606 = vst.msk [vmem:[#allocation3 + $0x118] sm:$0x3] %vm2571, 0.0
    %2607 = vst.msk [vmem:[#allocation3 + $0x120] sm:$0xff] %vm350, 0.0
    %2608 = vst.msk [vmem:[#allocation3 + $0x128] sm:$0x3] %vm2571, 0.0
    %2609 = vst.msk [vmem:[#allocation3 + $0x130] sm:$0xff] %vm350, 0.0
    %2610 = vst.msk [vmem:[#allocation3 + $0x138] sm:$0x3] %vm2571, 0.0
    %s2611 = scalar_lea.vmem [#allocation3], 16
    %2612 = vst.msk [vmem:[%s2611 + $0x1] sm:$0xff] %vm350, %v2554
    %2613 = vst.msk [vmem:[%s2611 + $0x11] sm:$0xff] %vm350, %v2555
    %2614 = vst.msk [vmem:[%s2611 + $0x21] sm:$0xff] %vm350, %v2556
    %2615 = vst.msk [vmem:[%s2611 + $0x31] sm:$0xff] %vm350, %v2557
    %2616 = vst.msk [vmem:[%s2611 + $0x41] sm:$0xff] %vm350, %v2558
    %2617 = vst.msk [vmem:[%s2611 + $0x51] sm:$0xff] %vm350, %v2559
    %2618 = vst.msk [vmem:[%s2611 + $0x61] sm:$0xff] %vm350, %v2560
    %2619 = vst.msk [vmem:[%s2611 + $0x71] sm:$0xff] %vm350, %v2561
    %2620 = vst.msk [vmem:[%s2611 + $0xa1] sm:$0xff] %vm350, %v2562
    %2621 = vst.msk [vmem:[%s2611 + $0xb1] sm:$0xff] %vm350, %v2563
    %2622 = vst.msk [vmem:[%s2611 + $0xc1] sm:$0xff] %vm350, %v2564
    %2623 = vst.msk [vmem:[%s2611 + $0xd1] sm:$0xff] %vm350, %v2565
    %2624 = vst.msk [vmem:[%s2611 + $0xe1] sm:$0xff] %vm350, %v2566
    %2625 = vst.msk [vmem:[%s2611 + $0xf1] sm:$0xff] %vm350, %v2567
    %2626 = vst.msk [vmem:[%s2611 + $0x101] sm:$0xff] %vm350, %v2568
    %2627 = vst.msk [vmem:[%s2611 + $0x111] sm:$0xff] %vm350, %v2569
    %v2628 = vld [vmem:[#allocation3] sm:$0xff]
    %v2629 = vld [vmem:[#allocation3 + $0x10] sm:$0xff]
    %v2630 = vld [vmem:[#allocation3 + $0x20] sm:$0xff]
    %v2631 = vld [vmem:[#allocation3 + $0x30] sm:$0xff]
    %v2632 = vld [vmem:[#allocation3 + $0x40] sm:$0xff]
    %v2633 = vld [vmem:[#allocation3 + $0x50] sm:$0xff]
    %v2634 = vld [vmem:[#allocation3 + $0x60] sm:$0xff]
    %v2635 = vld [vmem:[#allocation3 + $0x70] sm:$0xff]
    %v2636 = vld [vmem:[#allocation3 + $0xa0] sm:$0xff]
    %v2637 = vld [vmem:[#allocation3 + $0xb0] sm:$0xff]
    %v2638 = vld [vmem:[#allocation3 + $0xc0] sm:$0xff]
    %v2639 = vld [vmem:[#allocation3 + $0xd0] sm:$0xff]
    %v2640 = vld [vmem:[#allocation3 + $0xe0] sm:$0xff]
    %v2641 = vld [vmem:[#allocation3 + $0xf0] sm:$0xff]
    %v2642 = vld [vmem:[#allocation3 + $0x100] sm:$0xff]
    %v2643 = vld [vmem:[#allocation3 + $0x110] sm:$0xff]
    %v2644 = vpack.c.bf16 %v2629, %v2628
    %v2645 = vpack.c.bf16 %v2631, %v2630
    %v2646 = vpack.c.bf16 %v2633, %v2632
    %v2647 = vpack.c.bf16 %v2635, %v2634
    %v2648 = vpack.c.bf16 %v2637, %v2636
    %v2649 = vpack.c.bf16 %v2639, %v2638
    %v2650 = vpack.c.bf16 %v2641, %v2640
    %v2651 = vpack.c.bf16 %v2643, %v2642
    %v2652 = vld [vmem:[#allocation3 + $0x1] sm:$0xff]
    %v2653 = vld [vmem:[#allocation3 + $0x11] sm:$0xff]
    %v2654 = vld [vmem:[#allocation3 + $0x21] sm:$0xff]
    %v2655 = vld [vmem:[#allocation3 + $0x31] sm:$0xff]
    %v2656 = vld [vmem:[#allocation3 + $0x41] sm:$0xff]
    %v2657 = vld [vmem:[#allocation3 + $0x51] sm:$0xff]
    %v2658 = vld [vmem:[#allocation3 + $0x61] sm:$0xff]
    %v2659 = vld [vmem:[#allocation3 + $0x71] sm:$0xff]
    %v2660 = vld [vmem:[#allocation3 + $0xa1] sm:$0xff]
    %v2661 = vld [vmem:[#allocation3 + $0xb1] sm:$0xff]
    %v2662 = vld [vmem:[#allocation3 + $0xc1] sm:$0xff]
    %v2663 = vld [vmem:[#allocation3 + $0xd1] sm:$0xff]
    %v2664 = vld [vmem:[#allocation3 + $0xe1] sm:$0xff]
    %v2665 = vld [vmem:[#allocation3 + $0xf1] sm:$0xff]
    %v2666 = vld [vmem:[#allocation3 + $0x101] sm:$0xff]
    %v2667 = vld [vmem:[#allocation3 + $0x111] sm:$0xff]
    %v2668 = vpack.c.bf16 %v2653, %v2652
    %v2669 = vpack.c.bf16 %v2655, %v2654
    %v2670 = vpack.c.bf16 %v2657, %v2656
    %v2671 = vpack.c.bf16 %v2659, %v2658
    %v2672 = vpack.c.bf16 %v2661, %v2660
    %v2673 = vpack.c.bf16 %v2663, %v2662
    %v2674 = vpack.c.bf16 %v2665, %v2664
    %v2675 = vpack.c.bf16 %v2667, %v2666
    %v2676 = vld [vmem:[#allocation3 + $0x2] sm:$0xff]
    %v2677 = vld [vmem:[#allocation3 + $0x12] sm:$0xff]
    %v2678 = vld [vmem:[#allocation3 + $0x22] sm:$0xff]
    %v2679 = vld [vmem:[#allocation3 + $0x32] sm:$0xff]
    %v2680 = vld [vmem:[#allocation3 + $0x42] sm:$0xff]
    %v2681 = vld [vmem:[#allocation3 + $0x52] sm:$0xff]
    %v2682 = vld [vmem:[#allocation3 + $0x62] sm:$0xff]
    %v2683 = vld [vmem:[#allocation3 + $0x72] sm:$0xff]
    %v2684 = vld [vmem:[#allocation3 + $0xa2] sm:$0xff]
    %v2685 = vld [vmem:[#allocation3 + $0xb2] sm:$0xff]
    %v2686 = vld [vmem:[#allocation3 + $0xc2] sm:$0xff]
    %v2687 = vld [vmem:[#allocation3 + $0xd2] sm:$0xff]
    %v2688 = vld [vmem:[#allocation3 + $0xe2] sm:$0xff]
    %v2689 = vld [vmem:[#allocation3 + $0xf2] sm:$0xff]
    %v2690 = vld [vmem:[#allocation3 + $0x102] sm:$0xff]
    %v2691 = vld [vmem:[#allocation3 + $0x112] sm:$0xff]
    %v2692 = vpack.c.bf16 %v2677, %v2676
    %v2693 = vpack.c.bf16 %v2679, %v2678
    %v2694 = vpack.c.bf16 %v2681, %v2680
    %v2695 = vpack.c.bf16 %v2683, %v2682
    %v2696 = vpack.c.bf16 %v2685, %v2684
    %v2697 = vpack.c.bf16 %v2687, %v2686
    %v2698 = vpack.c.bf16 %v2689, %v2688
    %v2699 = vpack.c.bf16 %v2691, %v2690
    %v2700 = vld [vmem:[%s2611] sm:$0xff]
    %v2701 = vld [vmem:[%s2611 + $0x10] sm:$0xff]
    %v2702 = vld [vmem:[%s2611 + $0x20] sm:$0xff]
    %v2703 = vld [vmem:[%s2611 + $0x30] sm:$0xff]
    %v2704 = vld [vmem:[%s2611 + $0x40] sm:$0xff]
    %v2705 = vld [vmem:[%s2611 + $0x50] sm:$0xff]
    %v2706 = vld [vmem:[%s2611 + $0x60] sm:$0xff]
    %v2707 = vld [vmem:[%s2611 + $0x70] sm:$0xff]
    %v2708 = vld [vmem:[%s2611 + $0xa0] sm:$0xff]
    %v2709 = vld [vmem:[%s2611 + $0xb0] sm:$0xff]
    %v2710 = vld [vmem:[%s2611 + $0xc0] sm:$0xff]
    %v2711 = vld [vmem:[%s2611 + $0xd0] sm:$0xff]
    %v2712 = vld [vmem:[%s2611 + $0xe0] sm:$0xff]
    %v2713 = vld [vmem:[%s2611 + $0xf0] sm:$0xff]
    %v2714 = vld [vmem:[%s2611 + $0x100] sm:$0xff]
    %v2715 = vld [vmem:[%s2611 + $0x110] sm:$0xff]
    %v2716 = vpack.c.bf16 %v2701, %v2700
    %v2717 = vpack.c.bf16 %v2703, %v2702
    %v2718 = vpack.c.bf16 %v2705, %v2704
    %v2719 = vpack.c.bf16 %v2707, %v2706
    %v2720 = vpack.c.bf16 %v2709, %v2708
    %v2721 = vpack.c.bf16 %v2711, %v2710
    %v2722 = vpack.c.bf16 %v2713, %v2712
    %v2723 = vpack.c.bf16 %v2715, %v2714
    %v2724 = vld [vmem:[%s2611 + $0x1] sm:$0xff]
    %v2725 = vld [vmem:[%s2611 + $0x11] sm:$0xff]
    %v2726 = vld [vmem:[%s2611 + $0x21] sm:$0xff]
    %v2727 = vld [vmem:[%s2611 + $0x31] sm:$0xff]
    %v2728 = vld [vmem:[%s2611 + $0x41] sm:$0xff]
    %v2729 = vld [vmem:[%s2611 + $0x51] sm:$0xff]
    %v2730 = vld [vmem:[%s2611 + $0x61] sm:$0xff]
    %v2731 = vld [vmem:[%s2611 + $0x71] sm:$0xff]
    %v2732 = vld [vmem:[%s2611 + $0xa1] sm:$0xff]
    %v2733 = vld [vmem:[%s2611 + $0xb1] sm:$0xff]
    %v2734 = vld [vmem:[%s2611 + $0xc1] sm:$0xff]
    %v2735 = vld [vmem:[%s2611 + $0xd1] sm:$0xff]
    %v2736 = vld [vmem:[%s2611 + $0xe1] sm:$0xff]
    %v2737 = vld [vmem:[%s2611 + $0xf1] sm:$0xff]
    %v2738 = vld [vmem:[%s2611 + $0x101] sm:$0xff]
    %v2739 = vld [vmem:[%s2611 + $0x111] sm:$0xff]
    %v2740 = vpack.c.bf16 %v2725, %v2724
    %v2741 = vpack.c.bf16 %v2727, %v2726
    %v2742 = vpack.c.bf16 %v2729, %v2728
    %v2743 = vpack.c.bf16 %v2731, %v2730
    %v2744 = vpack.c.bf16 %v2733, %v2732
    %v2745 = vpack.c.bf16 %v2735, %v2734
    %v2746 = vpack.c.bf16 %v2737, %v2736
    %v2747 = vpack.c.bf16 %v2739, %v2738
    %v2748 = vld [vmem:[%s2611 + $0x2] sm:$0xff]
    %v2749 = vld [vmem:[%s2611 + $0x12] sm:$0xff]
    %v2750 = vld [vmem:[%s2611 + $0x22] sm:$0xff]
    %v2751 = vld [vmem:[%s2611 + $0x32] sm:$0xff]
    %v2752 = vld [vmem:[%s2611 + $0x42] sm:$0xff]
    %v2753 = vld [vmem:[%s2611 + $0x52] sm:$0xff]
    %v2754 = vld [vmem:[%s2611 + $0x62] sm:$0xff]
    %v2755 = vld [vmem:[%s2611 + $0x72] sm:$0xff]
    %v2756 = vld [vmem:[%s2611 + $0xa2] sm:$0xff]
    %v2757 = vld [vmem:[%s2611 + $0xb2] sm:$0xff]
    %v2758 = vld [vmem:[%s2611 + $0xc2] sm:$0xff]
    %v2759 = vld [vmem:[%s2611 + $0xd2] sm:$0xff]
    %v2760 = vld [vmem:[%s2611 + $0xe2] sm:$0xff]
    %v2761 = vld [vmem:[%s2611 + $0xf2] sm:$0xff]
    %v2762 = vld [vmem:[%s2611 + $0x102] sm:$0xff]
    %v2763 = vld [vmem:[%s2611 + $0x112] sm:$0xff]
    %v2764 = vpack.c.bf16 %v2749, %v2748
    %v2765 = vpack.c.bf16 %v2751, %v2750
    %v2766 = vpack.c.bf16 %v2753, %v2752
    %v2767 = vpack.c.bf16 %v2755, %v2754
    %v2768 = vpack.c.bf16 %v2757, %v2756
    %v2769 = vpack.c.bf16 %v2759, %v2758
    %v2770 = vpack.c.bf16 %v2761, %v2760
    %v2771 = vpack.c.bf16 %v2763, %v2762
    %s2772 = scalar_lea.vmem [#allocation3], 32
    %v2773 = vld [vmem:[%s2772] sm:$0xff]
    %v2774 = vld [vmem:[%s2772 + $0x10] sm:$0xff]
    %v2775 = vld [vmem:[%s2772 + $0x20] sm:$0xff]
    %v2776 = vld [vmem:[%s2772 + $0x30] sm:$0xff]
    %v2777 = vld [vmem:[%s2772 + $0x40] sm:$0xff]
    %v2778 = vld [vmem:[%s2772 + $0x50] sm:$0xff]
    %v2779 = vld [vmem:[%s2772 + $0x60] sm:$0xff]
    %v2780 = vld [vmem:[%s2772 + $0x70] sm:$0xff]
    %v2781 = vld [vmem:[%s2772 + $0xa0] sm:$0xff]
    %v2782 = vld [vmem:[%s2772 + $0xb0] sm:$0xff]
    %v2783 = vld [vmem:[%s2772 + $0xc0] sm:$0xff]
    %v2784 = vld [vmem:[%s2772 + $0xd0] sm:$0xff]
    %v2785 = vld [vmem:[%s2772 + $0xe0] sm:$0xff]
    %v2786 = vld [vmem:[%s2772 + $0xf0] sm:$0xff]
    %v2787 = vld [vmem:[%s2772 + $0x100] sm:$0xff]
    %v2788 = vld [vmem:[%s2772 + $0x110] sm:$0xff]
    %v2789 = vpack.c.bf16 %v2774, %v2773
    %v2790 = vpack.c.bf16 %v2776, %v2775
    %v2791 = vpack.c.bf16 %v2778, %v2777
    %v2792 = vpack.c.bf16 %v2780, %v2779
    %v2793 = vpack.c.bf16 %v2782, %v2781
    %v2794 = vpack.c.bf16 %v2784, %v2783
    %v2795 = vpack.c.bf16 %v2786, %v2785
    %v2796 = vpack.c.bf16 %v2788, %v2787
    %v2797 = vld [vmem:[%s2772 + $0x1] sm:$0xff]
    %v2798 = vld [vmem:[%s2772 + $0x11] sm:$0xff]
    %v2799 = vld [vmem:[%s2772 + $0x21] sm:$0xff]
    %v2800 = vld [vmem:[%s2772 + $0x31] sm:$0xff]
    %v2801 = vld [vmem:[%s2772 + $0x41] sm:$0xff]
    %v2802 = vld [vmem:[%s2772 + $0x51] sm:$0xff]
    %v2803 = vld [vmem:[%s2772 + $0x61] sm:$0xff]
    %v2804 = vld [vmem:[%s2772 + $0x71] sm:$0xff]
    %v2805 = vld [vmem:[%s2772 + $0xa1] sm:$0xff]
    %v2806 = vld [vmem:[%s2772 + $0xb1] sm:$0xff]
    %v2807 = vld [vmem:[%s2772 + $0xc1] sm:$0xff]
    %v2808 = vld [vmem:[%s2772 + $0xd1] sm:$0xff]
    %v2809 = vld [vmem:[%s2772 + $0xe1] sm:$0xff]
    %v2810 = vld [vmem:[%s2772 + $0xf1] sm:$0xff]
    %v2811 = vld [vmem:[%s2772 + $0x101] sm:$0xff]
    %v2812 = vld [vmem:[%s2772 + $0x111] sm:$0xff]
    %v2813 = vpack.c.bf16 %v2798, %v2797
    %v2814 = vpack.c.bf16 %v2800, %v2799
    %v2815 = vpack.c.bf16 %v2802, %v2801
    %v2816 = vpack.c.bf16 %v2804, %v2803
    %v2817 = vpack.c.bf16 %v2806, %v2805
    %v2818 = vpack.c.bf16 %v2808, %v2807
    %v2819 = vpack.c.bf16 %v2810, %v2809
    %v2820 = vpack.c.bf16 %v2812, %v2811
    %v2821 = vld [vmem:[%s2772 + $0x2] sm:$0xff]
    %v2822 = vld [vmem:[%s2772 + $0x12] sm:$0xff]
    %v2823 = vld [vmem:[%s2772 + $0x22] sm:$0xff]
    %v2824 = vld [vmem:[%s2772 + $0x32] sm:$0xff]
    %v2825 = vld [vmem:[%s2772 + $0x42] sm:$0xff]
    %v2826 = vld [vmem:[%s2772 + $0x52] sm:$0xff]
    %v2827 = vld [vmem:[%s2772 + $0x62] sm:$0xff]
    %v2828 = vld [vmem:[%s2772 + $0x72] sm:$0xff]
    %v2829 = vld [vmem:[%s2772 + $0xa2] sm:$0xff]
    %v2830 = vld [vmem:[%s2772 + $0xb2] sm:$0xff]
    %v2831 = vld [vmem:[%s2772 + $0xc2] sm:$0xff]
    %v2832 = vld [vmem:[%s2772 + $0xd2] sm:$0xff]
    %v2833 = vld [vmem:[%s2772 + $0xe2] sm:$0xff]
    %v2834 = vld [vmem:[%s2772 + $0xf2] sm:$0xff]
    %v2835 = vld [vmem:[%s2772 + $0x102] sm:$0xff]
    %v2836 = vld [vmem:[%s2772 + $0x112] sm:$0xff]
    %v2837 = vpack.c.bf16 %v2822, %v2821
    %v2838 = vpack.c.bf16 %v2824, %v2823
    %v2839 = vpack.c.bf16 %v2826, %v2825
    %v2840 = vpack.c.bf16 %v2828, %v2827
    %v2841 = vpack.c.bf16 %v2830, %v2829
    %v2842 = vpack.c.bf16 %v2832, %v2831
    %v2843 = vpack.c.bf16 %v2834, %v2833
    %v2844 = vpack.c.bf16 %v2836, %v2835
    %2853 = vrot.lane.b32.xlu0 %v2668, 32
    %v2854 = vpop.permute.xlu0 %2853
    %2855 = vrot.lane.b32.xlu0 %v2669, 32
    %v2856 = vpop.permute.xlu0 %2855
    %2857 = vrot.lane.b32.xlu0 %v2670, 32
    %v2858 = vpop.permute.xlu0 %2857
    %2859 = vrot.lane.b32.xlu0 %v2671, 32
    %v2860 = vpop.permute.xlu0 %2859
    %2861 = vrot.lane.b32.xlu0 %v2672, 32
    %v2862 = vpop.permute.xlu0 %2861
    %2863 = vrot.lane.b32.xlu0 %v2673, 32
    %v2864 = vpop.permute.xlu0 %2863
    %2865 = vrot.lane.b32.xlu0 %v2674, 32
    %v2866 = vpop.permute.xlu0 %2865
    %2867 = vrot.lane.b32.xlu0 %v2675, 32
    %v2868 = vpop.permute.xlu0 %2867
    %2877 = vrot.lane.b32.xlu0 %v2692, 64
    %v2878 = vpop.permute.xlu0 %2877
    %2879 = vrot.lane.b32.xlu0 %v2693, 64
    %v2880 = vpop.permute.xlu0 %2879
    %2881 = vrot.lane.b32.xlu0 %v2694, 64
    %v2882 = vpop.permute.xlu0 %2881
    %2883 = vrot.lane.b32.xlu0 %v2695, 64
    %v2884 = vpop.permute.xlu0 %2883
    %2885 = vrot.lane.b32.xlu0 %v2696, 64
    %v2886 = vpop.permute.xlu0 %2885
    %2887 = vrot.lane.b32.xlu0 %v2697, 64
    %v2888 = vpop.permute.xlu0 %2887
    %2889 = vrot.lane.b32.xlu0 %v2698, 64
    %v2890 = vpop.permute.xlu0 %2889
    %2891 = vrot.lane.b32.xlu0 %v2699, 64
    %v2892 = vpop.permute.xlu0 %2891
    %2901 = vrot.lane.b32.xlu0 %v2716, 96
    %v2902 = vpop.permute.xlu0 %2901
    %2903 = vrot.lane.b32.xlu0 %v2717, 96
    %v2904 = vpop.permute.xlu0 %2903
    %2905 = vrot.lane.b32.xlu0 %v2718, 96
    %v2906 = vpop.permute.xlu0 %2905
    %2907 = vrot.lane.b32.xlu0 %v2719, 96
    %v2908 = vpop.permute.xlu0 %2907
    %2909 = vrot.lane.b32.xlu0 %v2720, 96
    %v2910 = vpop.permute.xlu0 %2909
    %2911 = vrot.lane.b32.xlu0 %v2721, 96
    %v2912 = vpop.permute.xlu0 %2911
    %2913 = vrot.lane.b32.xlu0 %v2722, 96
    %v2914 = vpop.permute.xlu0 %2913
    %2915 = vrot.lane.b32.xlu0 %v2723, 96
    %v2916 = vpop.permute.xlu0 %2915
    %2925 = vrot.lane.b32.xlu0 %v2764, 32
    %v2926 = vpop.permute.xlu0 %2925
    %2927 = vrot.lane.b32.xlu0 %v2765, 32
    %v2928 = vpop.permute.xlu0 %2927
    %2929 = vrot.lane.b32.xlu0 %v2766, 32
    %v2930 = vpop.permute.xlu0 %2929
    %2931 = vrot.lane.b32.xlu0 %v2767, 32
    %v2932 = vpop.permute.xlu0 %2931
    %2933 = vrot.lane.b32.xlu0 %v2768, 32
    %v2934 = vpop.permute.xlu0 %2933
    %2935 = vrot.lane.b32.xlu0 %v2769, 32
    %v2936 = vpop.permute.xlu0 %2935
    %2937 = vrot.lane.b32.xlu0 %v2770, 32
    %v2938 = vpop.permute.xlu0 %2937
    %2939 = vrot.lane.b32.xlu0 %v2771, 32
    %v2940 = vpop.permute.xlu0 %2939
    %2949 = vrot.lane.b32.xlu0 %v2789, 64
    %v2950 = vpop.permute.xlu0 %2949
    %2951 = vrot.lane.b32.xlu0 %v2790, 64
    %v2952 = vpop.permute.xlu0 %2951
    %2953 = vrot.lane.b32.xlu0 %v2791, 64
    %v2954 = vpop.permute.xlu0 %2953
    %2955 = vrot.lane.b32.xlu0 %v2792, 64
    %v2956 = vpop.permute.xlu0 %2955
    %2957 = vrot.lane.b32.xlu0 %v2793, 64
    %v2958 = vpop.permute.xlu0 %2957
    %2959 = vrot.lane.b32.xlu0 %v2794, 64
    %v2960 = vpop.permute.xlu0 %2959
    %2961 = vrot.lane.b32.xlu0 %v2795, 64
    %v2962 = vpop.permute.xlu0 %2961
    %2963 = vrot.lane.b32.xlu0 %v2796, 64
    %v2964 = vpop.permute.xlu0 %2963
    %2973 = vrot.lane.b32.xlu0 %v2813, 96
    %v2974 = vpop.permute.xlu0 %2973
    %2975 = vrot.lane.b32.xlu0 %v2814, 96
    %v2976 = vpop.permute.xlu0 %2975
    %2977 = vrot.lane.b32.xlu0 %v2815, 96
    %v2978 = vpop.permute.xlu0 %2977
    %2979 = vrot.lane.b32.xlu0 %v2816, 96
    %v2980 = vpop.permute.xlu0 %2979
    %2981 = vrot.lane.b32.xlu0 %v2817, 96
    %v2982 = vpop.permute.xlu0 %2981
    %2983 = vrot.lane.b32.xlu0 %v2818, 96
    %v2984 = vpop.permute.xlu0 %2983
    %2985 = vrot.lane.b32.xlu0 %v2819, 96
    %v2986 = vpop.permute.xlu0 %2985
    %2987 = vrot.lane.b32.xlu0 %v2820, 96
    %v2988 = vpop.permute.xlu0 %2987
    %v2991 = vsel %vm350, %v2644, %v2854
    %v2994 = vsel %vm350, %v2645, %v2856
    %v2997 = vsel %vm350, %v2646, %v2858
    %v3000 = vsel %vm350, %v2647, %v2860
    %v3003 = vsel %vm350, %v2648, %v2862
    %v3006 = vsel %vm350, %v2649, %v2864
    %v3009 = vsel %vm350, %v2650, %v2866
    %v3012 = vsel %vm350, %v2651, %v2868
    %v3014 = vsel %vm91, %v2991, %v2878
    %v3016 = vsel %vm91, %v2994, %v2880
    %v3018 = vsel %vm91, %v2997, %v2882
    %v3020 = vsel %vm91, %v3000, %v2884
    %v3022 = vsel %vm91, %v3003, %v2886
    %v3024 = vsel %vm91, %v3006, %v2888
    %v3026 = vsel %vm91, %v3009, %v2890
    %v3028 = vsel %vm91, %v3012, %v2892
    %vm3029 = vcmask 785408
    %v3031 = vsel %vm3029, %v3014, %v2902
    %v3034 = vsel %vm3029, %v3016, %v2904
    %v3037 = vsel %vm3029, %v3018, %v2906
    %v3040 = vsel %vm3029, %v3020, %v2908
    %v3043 = vsel %vm3029, %v3022, %v2910
    %v3046 = vsel %vm3029, %v3024, %v2912
    %v3049 = vsel %vm3029, %v3026, %v2914
    %v3052 = vsel %vm3029, %v3028, %v2916
    %v3056 = vsel %vm350, %v2740, %v2926
    %v3059 = vsel %vm350, %v2741, %v2928
    %v3062 = vsel %vm350, %v2742, %v2930
    %v3065 = vsel %vm350, %v2743, %v2932
    %v3068 = vsel %vm350, %v2744, %v2934
    %v3071 = vsel %vm350, %v2745, %v2936
    %v3074 = vsel %vm350, %v2746, %v2938
    %v3077 = vsel %vm350, %v2747, %v2940
    %v3079 = vsel %vm91, %v3056, %v2950
    %v3081 = vsel %vm91, %v3059, %v2952
    %v3083 = vsel %vm91, %v3062, %v2954
    %v3085 = vsel %vm91, %v3065, %v2956
    %v3087 = vsel %vm91, %v3068, %v2958
    %v3089 = vsel %vm91, %v3071, %v2960
    %v3091 = vsel %vm91, %v3074, %v2962
    %v3093 = vsel %vm91, %v3077, %v2964
    %v3095 = vsel %vm3029, %v3079, %v2974
    %v3098 = vsel %vm3029, %v3081, %v2976
    %v3101 = vsel %vm3029, %v3083, %v2978
    %v3104 = vsel %vm3029, %v3085, %v2980
    %v3107 = vsel %vm3029, %v3087, %v2982
    %v3110 = vsel %vm3029, %v3089, %v2984
    %v3113 = vsel %vm3029, %v3091, %v2986
    %v3116 = vsel %vm3029, %v3093, %v2988
    %v3118 = vld [vmem:[%s11] sm:$0xf]
    %v3119 = vld [vmem:[%s11 + $0x4] sm:$0xf]
    %v3120 = vld [vmem:[%s11 + $0x8] sm:$0xf]
    %v3121 = vld [vmem:[%s11 + $0xc] sm:$0xf]
    %v3122 = vld [vmem:[%s11 + $0x10] sm:$0xf]
    %v3123 = vld [vmem:[%s11 + $0x14] sm:$0xf]
    %v3124 = vld [vmem:[%s11 + $0x18] sm:$0xf]
    %v3125 = vld [vmem:[%s11 + $0x1c] sm:$0xf]
    %v3126 = vld [vmem:[%s11 + $0x20] sm:$0xf]
    %v3127 = vld [vmem:[%s11 + $0x24] sm:$0xf]
    %v3128 = vld [vmem:[%s11 + $0x28] sm:$0xf]
    %v3129 = vld [vmem:[%s11 + $0x2c] sm:$0xf]
    %v3130 = vld [vmem:[%s11 + $0x30] sm:$0xf]
    %v3131 = vld [vmem:[%s11 + $0x34] sm:$0xf]
    %v3132 = vld [vmem:[%s11 + $0x38] sm:$0xf]
    %v3133 = vld [vmem:[%s11 + $0x3c] sm:$0xf]
    %v3134 = vld [vmem:[%s11 + $0x40] sm:$0xf]
    %v3135 = vld [vmem:[%s11 + $0x44] sm:$0xf]
    %v3136 = vld [vmem:[%s11 + $0x48] sm:$0xf]
    %v3137 = vld [vmem:[%s11 + $0x4c] sm:$0xf]
    %v3138 = vld [vmem:[%s11 + $0x50] sm:$0xf]
    %v3139 = vld [vmem:[%s11 + $0x54] sm:$0xf]
    %v3140 = vld [vmem:[%s11 + $0x58] sm:$0xf]
    %v3141 = vld [vmem:[%s11 + $0x5c] sm:$0xf]
    %v3142 = vld [vmem:[%s11 + $0x60] sm:$0xf]
    %v3143 = vld [vmem:[%s11 + $0x64] sm:$0xf]
    %v3144 = vld [vmem:[%s11 + $0x68] sm:$0xf]
    %v3145 = vld [vmem:[%s11 + $0x6c] sm:$0xf]
    %v3146 = vld [vmem:[%s11 + $0x70] sm:$0xf]
    %v3147 = vld [vmem:[%s11 + $0x74] sm:$0xf]
    %v3148 = vld [vmem:[%s11 + $0x78] sm:$0xf]
    %v3149 = vld [vmem:[%s11 + $0x7c] sm:$0xf]
    %v3150 = vld [vmem:[%s11 + $0x80] sm:$0xf]
    %v3151 = vld [vmem:[%s11 + $0x84] sm:$0xf]
    %v3152 = vld [vmem:[%s11 + $0x88] sm:$0xf]
    %v3153 = vld [vmem:[%s11 + $0x8c] sm:$0xf]
    %v3190 = vunpack.c.l.b16 %v3118
    %v3191 = vunpack.c.l.b16 %v3119
    %v3192 = vunpack.c.l.b16 %v3120
    %v3193 = vunpack.c.l.b16 %v3121
    %v3194 = vunpack.c.l.b16 %v3122
    %v3195 = vunpack.c.l.b16 %v3123
    %v3196 = vunpack.c.l.b16 %v3124
    %v3197 = vunpack.c.l.b16 %v3125
    %v3198 = vunpack.c.l.b16 %v3126
    %v3199 = vunpack.c.l.b16 %v3127
    %v3200 = vunpack.c.l.b16 %v3128
    %v3201 = vunpack.c.l.b16 %v3129
    %v3202 = vunpack.c.l.b16 %v3130
    %v3203 = vunpack.c.l.b16 %v3131
    %v3204 = vunpack.c.l.b16 %v3132
    %v3205 = vunpack.c.l.b16 %v3133
    %v3206 = vunpack.c.l.b16 %v3134
    %v3207 = vunpack.c.l.b16 %v3135
    %v3208 = vunpack.c.l.b16 %v3136
    %v3209 = vunpack.c.l.b16 %v3137
    %v3210 = vunpack.c.l.b16 %v3138
    %v3211 = vunpack.c.l.b16 %v3139
    %v3212 = vunpack.c.l.b16 %v3140
    %v3213 = vunpack.c.l.b16 %v3141
    %v3214 = vunpack.c.l.b16 %v3142
    %v3215 = vunpack.c.l.b16 %v3143
    %v3216 = vunpack.c.l.b16 %v3144
    %v3217 = vunpack.c.l.b16 %v3145
    %v3218 = vunpack.c.l.b16 %v3146
    %v3219 = vunpack.c.l.b16 %v3147
    %v3220 = vunpack.c.l.b16 %v3148
    %v3221 = vunpack.c.l.b16 %v3149
    %v3222 = vunpack.c.l.b16 %v3150
    %v3223 = vunpack.c.l.b16 %v3151
    %v3224 = vunpack.c.l.b16 %v3152
    %v3225 = vunpack.c.l.b16 %v3153
    %v3226 = vpack.c.b16 %v3191, %v3190
    %v3227 = vpack.c.b16 %v3193, %v3192
    %v3228 = vpack.c.b16 %v3195, %v3194
    %v3229 = vpack.c.b16 %v3197, %v3196
    %v3230 = vpack.c.b16 %v3199, %v3198
    %v3231 = vpack.c.b16 %v3201, %v3200
    %v3232 = vpack.c.b16 %v3203, %v3202
    %v3233 = vpack.c.b16 %v3205, %v3204
    %v3234 = vpack.c.b16 %v3207, %v3206
    %v3235 = vpack.c.b16 %v3209, %v3208
    %v3236 = vpack.c.b16 %v3211, %v3210
    %v3237 = vpack.c.b16 %v3213, %v3212
    %v3238 = vpack.c.b16 %v3215, %v3214
    %v3239 = vpack.c.b16 %v3217, %v3216
    %v3240 = vpack.c.b16 %v3219, %v3218
    %v3241 = vpack.c.b16 %v3221, %v3220
    %v3242 = vpack.c.b16 %v3223, %v3222
    %v3243 = vpack.c.b16 %v3225, %v3224
    %v3263 = vsel %vm350, %v2837, 0
    %v3266 = vsel %vm350, %v2838, 0
    %v3269 = vsel %vm350, %v2839, 0
    %v3272 = vsel %vm350, %v2840, 0
    %v3275 = vsel %vm350, %v2841, 0
    %v3278 = vsel %vm350, %v2842, 0
    %v3281 = vsel %vm350, %v2843, 0
    %v3284 = vsel %vm350, %v2844, 0
    %3286 = vmatprep.subr.bf16.mxu0 0
    %3287 = vmatpush1.bf16.msra.mxu0 %v3226
    %3288 = vmatprep.subr.bf16.mxu0 0
    %3289 = vmatpush1.bf16.msra.mxu0 %v3227
    %3290 = vmatprep.subr.bf16.mxu0 0
    %3291 = vmatpush1.bf16.msra.mxu0 %v3228
    %3292 = vmatprep.subr.bf16.mxu0 0
    %3293 = vmatpush1.bf16.msra.mxu0 %v3229
    %3294 = vmatprep.subr.bf16.mxu0 0
    %3295 = vmatpush1.bf16.msra.mxu0 %v3230
    %3296 = vmatprep.subr.bf16.mxu0 0
    %3297 = vmatpush1.bf16.msra.mxu0 %v3231
    %3298 = vmatprep.subr.bf16.mxu0 0
    %3299 = vmatpush1.bf16.msra.mxu0 %v3232
    %3300 = vmatprep.subr.bf16.mxu0 0
    %3301 = vmatpush1.bf16.msra.mxu0 %v3233
    %3302 = vmatprep.subr.bf16.mxu0 0
    %3303 = vmatpush1.bf16.msra.mxu0 %v3234
    %3304 = vmatprep.subr.bf16.mxu0 0
    %3305 = vmatpush1.bf16.msra.mxu0 %v3235
    %3306 = vmatprep.subr.bf16.mxu0 0
    %3307 = vmatpush1.bf16.msra.mxu0 %v3236
    %3308 = vmatprep.subr.bf16.mxu0 0
    %3309 = vmatpush1.bf16.msra.mxu0 %v3237
    %3310 = vmatprep.subr.bf16.mxu0 0
    %3311 = vmatpush1.bf16.msra.mxu0 %v3238
    %3312 = vmatprep.subr.bf16.mxu0 0
    %3313 = vmatpush1.bf16.msra.mxu0 %v3239
    %3314 = vmatprep.subr.bf16.mxu0 0
    %3315 = vmatpush1.bf16.msra.mxu0 %v3240
    %3316 = vmatprep.subr.bf16.mxu0 0
    %3317 = vmatpush1.bf16.msra.mxu0 %v3241
    %3318 = vmatprep.mubr.bf16.mxu0 %v3095
    %3319 = vmatmul.mubr.bf16.gmra.mrb[0].mxu0 %v3031
    %v3320 = vpop.f32.mrb[0].mxu0
    %v3321 = vadd.f32 0.0, %v3320
    %v3322 = vpop.f32.mrb[0].mxu0
    %v3323 = vpop.f32.mrb[0].mxu0
    %v3324 = vadd.f32 0.0, %v3323
    %v3325 = vpop.f32.mrb[0].mxu0
    %3326 = vmatprep.mubr.bf16.mxu0 %v3098
    %3327 = vmatmul.mubr.bf16.gmra.mrb[0].mxu0 %v3034
    %v3328 = vpop.f32.mrb[0].mxu0
    %v3329 = vadd.f32 0.0, %v3328
    %v3330 = vpop.f32.mrb[0].mxu0
    %v3331 = vpop.f32.mrb[0].mxu0
    %v3332 = vadd.f32 0.0, %v3331
    %v3333 = vpop.f32.mrb[0].mxu0
    %3334 = vmatprep.mubr.bf16.mxu0 %v3101
    %3335 = vmatmul.mubr.bf16.gmra.mrb[0].mxu0 %v3037
    %v3336 = vpop.f32.mrb[0].mxu0
    %v3337 = vadd.f32 0.0, %v3336
    %v3338 = vpop.f32.mrb[0].mxu0
    %v3339 = vpop.f32.mrb[0].mxu0
    %v3340 = vadd.f32 0.0, %v3339
    %v3341 = vpop.f32.mrb[0].mxu0
    %3342 = vmatprep.mubr.bf16.mxu0 %v3104
    %3343 = vmatmul.mubr.bf16.gmra.mrb[0].mxu0 %v3040
    %v3344 = vpop.f32.mrb[0].mxu0
    %v3345 = vadd.f32 0.0, %v3344
    %v3346 = vpop.f32.mrb[0].mxu0
    %v3347 = vpop.f32.mrb[0].mxu0
    %v3348 = vadd.f32 0.0, %v3347
    %v3349 = vpop.f32.mrb[0].mxu0
    %3350 = vmatprep.mubr.bf16.mxu0 %v3107
    %3351 = vmatmul.mubr.bf16.gmra.mrb[0].mxu0 %v3043
    %v3352 = vpop.f32.mrb[0].mxu0
    %v3353 = vadd.f32 0.0, %v3352
    %v3354 = vpop.f32.mrb[0].mxu0
    %v3355 = vpop.f32.mrb[0].mxu0
    %v3356 = vadd.f32 0.0, %v3355
    %v3357 = vpop.f32.mrb[0].mxu0
    %3358 = vmatprep.mubr.bf16.mxu0 %v3110
    %3359 = vmatmul.mubr.bf16.gmra.mrb[0].mxu0 %v3046
    %v3360 = vpop.f32.mrb[0].mxu0
    %v3361 = vadd.f32 0.0, %v3360
    %v3362 = vpop.f32.mrb[0].mxu0
    %v3363 = vpop.f32.mrb[0].mxu0
    %v3364 = vadd.f32 0.0, %v3363
    %v3365 = vpop.f32.mrb[0].mxu0
    %3366 = vmatprep.mubr.bf16.mxu0 %v3113
    %3367 = vmatmul.mubr.bf16.gmra.mrb[0].mxu0 %v3049
    %v3368 = vpop.f32.mrb[0].mxu0
    %v3369 = vadd.f32 0.0, %v3368
    %v3370 = vpop.f32.mrb[0].mxu0
    %v3371 = vpop.f32.mrb[0].mxu0
    %v3372 = vadd.f32 0.0, %v3371
    %v3373 = vpop.f32.mrb[0].mxu0
    %3374 = vmatprep.mubr.bf16.mxu0 %v3116
    %3375 = vmatmul.mubr.bf16.gmra.mrb[0].mxu0 %v3052
    %v3376 = vpop.f32.mrb[0].mxu0
    %v3377 = vadd.f32 0.0, %v3376
    %v3378 = vpop.f32.mrb[0].mxu0
    %v3379 = vpop.f32.mrb[0].mxu0
    %v3380 = vadd.f32 0.0, %v3379
    %v3381 = vpop.f32.mrb[0].mxu0
    %3382 = vdwg.mxu0
    %3383 = vmatprep.subr.bf16.mxu0 0
    %3384 = vmatpush1.bf16.msra.mxu0 %v3242
    %3385 = vmatprep.subr.bf16.mxu0 0
    %3386 = vmatpush1.bf16.msra.mxu0 %v3243
    %3387 = vmatprep.subr.bf16.mxu0 0
    %3388 = vmatpush1.bf16.msra.mxu0 0
    %3389 = vmatprep.subr.bf16.mxu0 0
    %3390 = vmatpush1.bf16.msra.mxu0 0
    %3391 = vmatprep.subr.bf16.mxu0 0
    %3392 = vmatpush1.bf16.msra.mxu0 0
    %3393 = vmatprep.subr.bf16.mxu0 0
    %3394 = vmatpush1.bf16.msra.mxu0 0
    %3395 = vmatprep.subr.bf16.mxu0 0
    %3396 = vmatpush1.bf16.msra.mxu0 0
    %3397 = vmatprep.subr.bf16.mxu0 0
    %3398 = vmatpush1.bf16.msra.mxu0 0
    %3399 = vmatprep.subr.bf16.mxu0 0
    %3400 = vmatpush1.bf16.msra.mxu0 0
    %3401 = vmatprep.subr.bf16.mxu0 0
    %3402 = vmatpush1.bf16.msra.mxu0 0
    %3403 = vmatprep.subr.bf16.mxu0 0
    %3404 = vmatpush1.bf16.msra.mxu0 0
    %3405 = vmatprep.subr.bf16.mxu0 0
    %3406 = vmatpush1.bf16.msra.mxu0 0
    %3407 = vmatprep.subr.bf16.mxu0 0
    %3408 = vmatpush1.bf16.msra.mxu0 0
    %3409 = vmatprep.subr.bf16.mxu0 0
    %3410 = vmatpush1.bf16.msra.mxu0 0
    %3411 = vmatprep.subr.bf16.mxu0 0
    %3412 = vmatpush1.bf16.msra.mxu0 0
    %3413 = vmatprep.subr.bf16.mxu0 0
    %3414 = vmatpush1.bf16.msra.mxu0 0
    %3415 = vmatprep.mubr.bf16.mxu0 0
    %3416 = vmatmul.mubr.bf16.gmra.mrb[0].mxu0 %v3263
    %v3417 = vpop.f32.mrb[0].mxu0
    %v3418 = vadd.f32 %v3321, %v3417
    %v3419 = vpop.f32.mrb[0].mxu0
    %v3420 = vpop.f32.mrb[0].mxu0
    %v3421 = vadd.f32 %v3324, %v3420
    %v3422 = vpop.f32.mrb[0].mxu0
    %3423 = vmatprep.mubr.bf16.mxu0 0
    %3424 = vmatmul.mubr.bf16.gmra.mrb[0].mxu0 %v3266
    %v3425 = vpop.f32.mrb[0].mxu0
    %v3426 = vadd.f32 %v3329, %v3425
    %v3427 = vpop.f32.mrb[0].mxu0
    %v3428 = vpop.f32.mrb[0].mxu0
    %v3429 = vadd.f32 %v3332, %v3428
    %v3430 = vpop.f32.mrb[0].mxu0
    %3431 = vmatprep.mubr.bf16.mxu0 0
    %3432 = vmatmul.mubr.bf16.gmra.mrb[0].mxu0 %v3269
    %v3433 = vpop.f32.mrb[0].mxu0
    %v3434 = vadd.f32 %v3337, %v3433
    %v3435 = vpop.f32.mrb[0].mxu0
    %v3436 = vpop.f32.mrb[0].mxu0
    %v3437 = vadd.f32 %v3340, %v3436
    %v3438 = vpop.f32.mrb[0].mxu0
    %3439 = vmatprep.mubr.bf16.mxu0 0
    %3440 = vmatmul.mubr.bf16.gmra.mrb[0].mxu0 %v3272
    %v3441 = vpop.f32.mrb[0].mxu0
    %v3442 = vadd.f32 %v3345, %v3441
    %v3443 = vpop.f32.mrb[0].mxu0
    %v3444 = vpop.f32.mrb[0].mxu0
    %v3445 = vadd.f32 %v3348, %v3444
    %v3446 = vpop.f32.mrb[0].mxu0
    %3447 = vmatprep.mubr.bf16.mxu0 0
    %3448 = vmatmul.mubr.bf16.gmra.mrb[0].mxu0 %v3275
    %v3449 = vpop.f32.mrb[0].mxu0
    %v3450 = vadd.f32 %v3353, %v3449
    %v3451 = vpop.f32.mrb[0].mxu0
    %v3452 = vpop.f32.mrb[0].mxu0
    %v3453 = vadd.f32 %v3356, %v3452
    %v3454 = vpop.f32.mrb[0].mxu0
    %3455 = vmatprep.mubr.bf16.mxu0 0
    %3456 = vmatmul.mubr.bf16.gmra.mrb[0].mxu0 %v3278
    %v3457 = vpop.f32.mrb[0].mxu0
    %v3458 = vadd.f32 %v3361, %v3457
    %v3459 = vpop.f32.mrb[0].mxu0
    %v3460 = vpop.f32.mrb[0].mxu0
    %v3461 = vadd.f32 %v3364, %v3460
    %v3462 = vpop.f32.mrb[0].mxu0
    %3463 = vmatprep.mubr.bf16.mxu0 0
    %3464 = vmatmul.mubr.bf16.gmra.mrb[0].mxu0 %v3281
    %v3465 = vpop.f32.mrb[0].mxu0
    %v3466 = vadd.f32 %v3369, %v3465
    %v3467 = vpop.f32.mrb[0].mxu0
    %v3468 = vpop.f32.mrb[0].mxu0
    %v3469 = vadd.f32 %v3372, %v3468
    %v3470 = vpop.f32.mrb[0].mxu0
    %3471 = vmatprep.mubr.bf16.mxu0 0
    %3472 = vmatmul.mubr.bf16.gmra.mrb[0].mxu0 %v3284
    %v3473 = vpop.f32.mrb[0].mxu0
    %v3474 = vadd.f32 %v3377, %v3473
    %v3475 = vpop.f32.mrb[0].mxu0
    %v3476 = vpop.f32.mrb[0].mxu0
    %v3477 = vadd.f32 %v3380, %v3476
    %v3478 = vpop.f32.mrb[0].mxu0
    %3479 = vdwg.mxu0
    %v3480 = vpack.c.bf16 %v62, %v61
    %v3481 = vpack.c.bf16 %v64, %v63
    %v3482 = vpack.c.bf16 %v66, %v65
    %v3483 = vpack.c.bf16 %v68, %v67
    %v3484 = vpack.c.bf16 %v70, %v69
    %v3485 = vpack.c.bf16 %v72, %v71
    %v3486 = vpack.c.bf16 %v74, %v73
    %v3487 = vpack.c.bf16 %v76, %v75
    %v3488 = vld [vmem:[%s13] sm:$0xf]
    %v3489 = vld [vmem:[%s13 + $0x4] sm:$0xf]
    %v3490 = vld [vmem:[%s13 + $0x8] sm:$0xf]
    %v3491 = vld [vmem:[%s13 + $0xc] sm:$0xf]
    %v3492 = vld [vmem:[%s13 + $0x10] sm:$0xf]
    %v3493 = vld [vmem:[%s13 + $0x14] sm:$0xf]
    %v3494 = vld [vmem:[%s13 + $0x18] sm:$0xf]
    %v3495 = vld [vmem:[%s13 + $0x1c] sm:$0xf]
    %v3504 = vunpack.c.l.b16 %v3488
    %v3505 = vunpack.c.l.b16 %v3489
    %v3506 = vunpack.c.l.b16 %v3490
    %v3507 = vunpack.c.l.b16 %v3491
    %v3508 = vunpack.c.l.b16 %v3492
    %v3509 = vunpack.c.l.b16 %v3493
    %v3510 = vunpack.c.l.b16 %v3494
    %v3511 = vunpack.c.l.b16 %v3495
    %v3512 = vpack.c.b16 %v3505, %v3504
    %v3513 = vpack.c.b16 %v3507, %v3506
    %v3514 = vpack.c.b16 %v3509, %v3508
    %v3515 = vpack.c.b16 %v3511, %v3510
    %v3521 = vsel %vm91, %v3480, 0
    %v3524 = vsel %vm91, %v3481, 0
    %v3527 = vsel %vm91, %v3482, 0
    %v3530 = vsel %vm91, %v3483, 0
    %v3533 = vsel %vm91, %v3484, 0
    %v3536 = vsel %vm91, %v3485, 0
    %v3539 = vsel %vm91, %v3486, 0
    %v3542 = vsel %vm91, %v3487, 0
    %3544 = vmatprep.subr.bf16.mxu0 0
    %3545 = vmatpush1.bf16.msra.mxu0 %v3512
    %3546 = vmatprep.subr.bf16.mxu0 0
    %3547 = vmatpush1.bf16.msra.mxu0 %v3513
    %3548 = vmatprep.subr.bf16.mxu0 0
    %3549 = vmatpush1.bf16.msra.mxu0 %v3514
    %3550 = vmatprep.subr.bf16.mxu0 0
    %3551 = vmatpush1.bf16.msra.mxu0 %v3515
    %3552 = vmatprep.subr.bf16.mxu0 0
    %3553 = vmatpush1.bf16.msra.mxu0 0
    %3554 = vmatprep.subr.bf16.mxu0 0
    %3555 = vmatpush1.bf16.msra.mxu0 0
    %3556 = vmatprep.subr.bf16.mxu0 0
    %3557 = vmatpush1.bf16.msra.mxu0 0
    %3558 = vmatprep.subr.bf16.mxu0 0
    %3559 = vmatpush1.bf16.msra.mxu0 0
    %3560 = vmatprep.subr.bf16.mxu0 0
    %3561 = vmatpush1.bf16.msra.mxu0 0
    %3562 = vmatprep.subr.bf16.mxu0 0
    %3563 = vmatpush1.bf16.msra.mxu0 0
    %3564 = vmatprep.subr.bf16.mxu0 0
    %3565 = vmatpush1.bf16.msra.mxu0 0
    %3566 = vmatprep.subr.bf16.mxu0 0
    %3567 = vmatpush1.bf16.msra.mxu0 0
    %3568 = vmatprep.subr.bf16.mxu0 0
    %3569 = vmatpush1.bf16.msra.mxu0 0
    %3570 = vmatprep.subr.bf16.mxu0 0
    %3571 = vmatpush1.bf16.msra.mxu0 0
    %3572 = vmatprep.subr.bf16.mxu0 0
    %3573 = vmatpush1.bf16.msra.mxu0 0
    %3574 = vmatprep.subr.bf16.mxu0 0
    %3575 = vmatpush1.bf16.msra.mxu0 0
    %3576 = vmatprep.mubr.bf16.mxu0 0
    %3577 = vmatmul.mubr.bf16.gmra.mrb[0].mxu0 %v3521
    %v3578 = vpop.f32.mrb[0].mxu0
    %v3579 = vadd.f32 0.0, %v3578
    %v3580 = vpop.f32.mrb[0].mxu0
    %v3581 = vpop.f32.mrb[0].mxu0
    %v3582 = vadd.f32 0.0, %v3581
    %v3583 = vpop.f32.mrb[0].mxu0
    %3584 = vmatprep.mubr.bf16.mxu0 0
    %3585 = vmatmul.mubr.bf16.gmra.mrb[0].mxu0 %v3524
    %v3586 = vpop.f32.mrb[0].mxu0
    %v3587 = vadd.f32 0.0, %v3586
    %v3588 = vpop.f32.mrb[0].mxu0
    %v3589 = vpop.f32.mrb[0].mxu0
    %v3590 = vadd.f32 0.0, %v3589
    %v3591 = vpop.f32.mrb[0].mxu0
    %3592 = vmatprep.mubr.bf16.mxu0 0
    %3593 = vmatmul.mubr.bf16.gmra.mrb[0].mxu0 %v3527
    %v3594 = vpop.f32.mrb[0].mxu0
    %v3595 = vadd.f32 0.0, %v3594
    %v3596 = vpop.f32.mrb[0].mxu0
    %v3597 = vpop.f32.mrb[0].mxu0
    %v3598 = vadd.f32 0.0, %v3597
    %v3599 = vpop.f32.mrb[0].mxu0
    %3600 = vmatprep.mubr.bf16.mxu0 0
    %3601 = vmatmul.mubr.bf16.gmra.mrb[0].mxu0 %v3530
    %v3602 = vpop.f32.mrb[0].mxu0
    %v3603 = vadd.f32 0.0, %v3602
    %v3604 = vpop.f32.mrb[0].mxu0
    %v3605 = vpop.f32.mrb[0].mxu0
    %v3606 = vadd.f32 0.0, %v3605
    %v3607 = vpop.f32.mrb[0].mxu0
    %3608 = vmatprep.mubr.bf16.mxu0 0
    %3609 = vmatmul.mubr.bf16.gmra.mrb[0].mxu0 %v3533
    %v3610 = vpop.f32.mrb[0].mxu0
    %v3611 = vadd.f32 0.0, %v3610
    %v3612 = vpop.f32.mrb[0].mxu0
    %v3613 = vpop.f32.mrb[0].mxu0
    %v3614 = vadd.f32 0.0, %v3613
    %v3615 = vpop.f32.mrb[0].mxu0
    %3616 = vmatprep.mubr.bf16.mxu0 0
    %3617 = vmatmul.mubr.bf16.gmra.mrb[0].mxu0 %v3536
    %v3618 = vpop.f32.mrb[0].mxu0
    %v3619 = vadd.f32 0.0, %v3618
    %v3620 = vpop.f32.mrb[0].mxu0
    %v3621 = vpop.f32.mrb[0].mxu0
    %v3622 = vadd.f32 0.0, %v3621
    %v3623 = vpop.f32.mrb[0].mxu0
    %3624 = vmatprep.mubr.bf16.mxu0 0
    %3625 = vmatmul.mubr.bf16.gmra.mrb[0].mxu0 %v3539
    %v3626 = vpop.f32.mrb[0].mxu0
    %v3627 = vadd.f32 0.0, %v3626
    %v3628 = vpop.f32.mrb[0].mxu0
    %v3629 = vpop.f32.mrb[0].mxu0
    %v3630 = vadd.f32 0.0, %v3629
    %v3631 = vpop.f32.mrb[0].mxu0
    %3632 = vmatprep.mubr.bf16.mxu0 0
    %3633 = vmatmul.mubr.bf16.gmra.mrb[0].mxu0 %v3542
    %v3634 = vpop.f32.mrb[0].mxu0
    %v3635 = vadd.f32 0.0, %v3634
    %v3636 = vpop.f32.mrb[0].mxu0
    %v3637 = vpop.f32.mrb[0].mxu0
    %v3638 = vadd.f32 0.0, %v3637
    %v3639 = vpop.f32.mrb[0].mxu0
    %3640 = vdwg.mxu0
    %v3641 = vadd.f32 %v3418, %v3579
    %v3642 = vadd.f32 %v3421, %v3582
    %v3643 = vadd.f32 %v3426, %v3587
    %v3644 = vadd.f32 %v3429, %v3590
    %v3645 = vadd.f32 %v3434, %v3595
    %v3646 = vadd.f32 %v3437, %v3598
    %v3647 = vadd.f32 %v3442, %v3603
    %v3648 = vadd.f32 %v3445, %v3606
    %v3649 = vadd.f32 %v3450, %v3611
    %v3650 = vadd.f32 %v3453, %v3614
    %v3651 = vadd.f32 %v3458, %v3619
    %v3652 = vadd.f32 %v3461, %v3622
    %v3653 = vadd.f32 %v3466, %v3627
    %v3654 = vadd.f32 %v3469, %v3630
    %v3655 = vadd.f32 %v3474, %v3635
    %v3656 = vadd.f32 %v3477, %v3638
    %v3657 = vld [vmem:[%s12] sm:$0x1]
    %v3659 = vlaneseq
    %v3660 = vshrl.u32 %v3659, 7
    %v3661 = vsub.s32 0, %v3660
    %v3662 = vrot.slane %v3657, %v3661
    %v3664 = vadd.f32 %v3641, %v3662
    %v3665 = vadd.f32 %v3642, %v3662
    %v3666 = vadd.f32 %v3643, %v3662
    %v3667 = vadd.f32 %v3644, %v3662
    %v3668 = vadd.f32 %v3645, %v3662
    %v3669 = vadd.f32 %v3646, %v3662
    %v3670 = vadd.f32 %v3647, %v3662
    %v3671 = vadd.f32 %v3648, %v3662
    %v3672 = vadd.f32 %v3649, %v3662
    %v3673 = vadd.f32 %v3650, %v3662
    %v3674 = vadd.f32 %v3651, %v3662
    %v3675 = vadd.f32 %v3652, %v3662
    %v3676 = vadd.f32 %v3653, %v3662
    %v3677 = vadd.f32 %v3654, %v3662
    %v3678 = vadd.f32 %v3655, %v3662
    %v3679 = vadd.f32 %v3656, %v3662
    %v3680 = vpack.c.bf16 %v3665, %v3664
    %v3681 = vpack.c.bf16 %v3667, %v3666
    %v3682 = vpack.c.bf16 %v3669, %v3668
    %v3683 = vpack.c.bf16 %v3671, %v3670
    %v3684 = vpack.c.bf16 %v3673, %v3672
    %v3685 = vpack.c.bf16 %v3675, %v3674
    %v3686 = vpack.c.bf16 %v3677, %v3676
    %v3687 = vpack.c.bf16 %v3679, %v3678
    %v3688 = vld [vmem:[%s14] sm:$0xf]
    %v3689 = vld [vmem:[%s14 + $0x4] sm:$0xf]
    %v3690 = vld [vmem:[%s14 + $0x8] sm:$0xf]
    %v3691 = vld [vmem:[%s14 + $0xc] sm:$0xf]
    %v3692 = vld [vmem:[%s15] sm:$0x1]
    %v3694 = vlaneseq
    %v3695 = vshrl.u32 %v3694, 7
    %v3696 = vsub.s32 0, %v3695
    %v3697 = vrot.slane %v3692, %v3696
    %v3703 = vunpack.c.l.b16 %v3688
    %v3704 = vunpack.c.l.b16 %v3689
    %v3705 = vunpack.c.l.b16 %v3690
    %v3706 = vunpack.c.l.b16 %v3691
    %v3707 = vpack.c.b16 %v3704, %v3703
    %v3708 = vpack.c.b16 %v3706, %v3705
    %v3712 = vsel %vm350, %v3680, 0
    %v3715 = vsel %vm350, %v3681, 0
    %v3718 = vsel %vm350, %v3682, 0
    %v3721 = vsel %vm350, %v3683, 0
    %v3724 = vsel %vm350, %v3684, 0
    %v3727 = vsel %vm350, %v3685, 0
    %v3730 = vsel %vm350, %v3686, 0
    %v3733 = vsel %vm350, %v3687, 0
    %3735 = vmatprep.subr.bf16.mxu0 0
    %3736 = vmatpush1.bf16.msra.mxu0 %v3707
    %3737 = vmatprep.subr.bf16.mxu0 0
    %3738 = vmatpush1.bf16.msra.mxu0 %v3708
    %3739 = vmatprep.subr.bf16.mxu0 0
    %3740 = vmatpush1.bf16.msra.mxu0 0
    %3741 = vmatprep.subr.bf16.mxu0 0
    %3742 = vmatpush1.bf16.msra.mxu0 0
    %3743 = vmatprep.subr.bf16.mxu0 0
    %3744 = vmatpush1.bf16.msra.mxu0 0
    %3745 = vmatprep.subr.bf16.mxu0 0
    %3746 = vmatpush1.bf16.msra.mxu0 0
    %3747 = vmatprep.subr.bf16.mxu0 0
    %3748 = vmatpush1.bf16.msra.mxu0 0
    %3749 = vmatprep.subr.bf16.mxu0 0
    %3750 = vmatpush1.bf16.msra.mxu0 0
    %3751 = vmatprep.subr.bf16.mxu0 0
    %3752 = vmatpush1.bf16.msra.mxu0 0
    %3753 = vmatprep.subr.bf16.mxu0 0
    %3754 = vmatpush1.bf16.msra.mxu0 0
    %3755 = vmatprep.subr.bf16.mxu0 0
    %3756 = vmatpush1.bf16.msra.mxu0 0
    %3757 = vmatprep.subr.bf16.mxu0 0
    %3758 = vmatpush1.bf16.msra.mxu0 0
    %3759 = vmatprep.subr.bf16.mxu0 0
    %3760 = vmatpush1.bf16.msra.mxu0 0
    %3761 = vmatprep.subr.bf16.mxu0 0
    %3762 = vmatpush1.bf16.msra.mxu0 0
    %3763 = vmatprep.subr.bf16.mxu0 0
    %3764 = vmatpush1.bf16.msra.mxu0 0
    %3765 = vmatprep.subr.bf16.mxu0 0
    %3766 = vmatpush1.bf16.msra.mxu0 0
    %3767 = vmatprep.mubr.bf16.mxu0 0
    %3768 = vmatmul.mubr.bf16.gmra.mrb[0].mxu0 %v3712
    %v3769 = vpop.f32.mrb[0].mxu0
    %v3770 = vadd.f32 %v3697, %v3769
    %v3771 = vpop.f32.mrb[0].mxu0
    %v3772 = vpop.f32.mrb[0].mxu0
    %v3773 = vadd.f32 %v3697, %v3772
    %v3774 = vpop.f32.mrb[0].mxu0
    %3775 = vmatprep.mubr.bf16.mxu0 0
    %3776 = vmatmul.mubr.bf16.gmra.mrb[0].mxu0 %v3715
    %v3777 = vpop.f32.mrb[0].mxu0
    %v3778 = vadd.f32 %v3697, %v3777
    %v3779 = vpop.f32.mrb[0].mxu0
    %v3780 = vpop.f32.mrb[0].mxu0
    %v3781 = vadd.f32 %v3697, %v3780
    %v3782 = vpop.f32.mrb[0].mxu0
    %3783 = vmatprep.mubr.bf16.mxu0 0
    %3784 = vmatmul.mubr.bf16.gmra.mrb[0].mxu0 %v3718
    %v3785 = vpop.f32.mrb[0].mxu0
    %v3786 = vadd.f32 %v3697, %v3785
    %v3787 = vpop.f32.mrb[0].mxu0
    %v3788 = vpop.f32.mrb[0].mxu0
    %v3789 = vadd.f32 %v3697, %v3788
    %v3790 = vpop.f32.mrb[0].mxu0
    %3791 = vmatprep.mubr.bf16.mxu0 0
    %3792 = vmatmul.mubr.bf16.gmra.mrb[0].mxu0 %v3721
    %v3793 = vpop.f32.mrb[0].mxu0
    %v3794 = vadd.f32 %v3697, %v3793
    %v3795 = vpop.f32.mrb[0].mxu0
    %v3796 = vpop.f32.mrb[0].mxu0
    %v3797 = vadd.f32 %v3697, %v3796
    %v3798 = vpop.f32.mrb[0].mxu0
    %3799 = vmatprep.mubr.bf16.mxu0 0
    %3800 = vmatmul.mubr.bf16.gmra.mrb[0].mxu0 %v3724
    %v3801 = vpop.f32.mrb[0].mxu0
    %v3802 = vadd.f32 %v3697, %v3801
    %v3803 = vpop.f32.mrb[0].mxu0
    %v3804 = vpop.f32.mrb[0].mxu0
    %v3805 = vadd.f32 %v3697, %v3804
    %v3806 = vpop.f32.mrb[0].mxu0
    %3807 = vmatprep.mubr.bf16.mxu0 0
    %3808 = vmatmul.mubr.bf16.gmra.mrb[0].mxu0 %v3727
    %v3809 = vpop.f32.mrb[0].mxu0
    %v3810 = vadd.f32 %v3697, %v3809
    %v3811 = vpop.f32.mrb[0].mxu0
    %v3812 = vpop.f32.mrb[0].mxu0
    %v3813 = vadd.f32 %v3697, %v3812
    %v3814 = vpop.f32.mrb[0].mxu0
    %3815 = vmatprep.mubr.bf16.mxu0 0
    %3816 = vmatmul.mubr.bf16.gmra.mrb[0].mxu0 %v3730
    %v3817 = vpop.f32.mrb[0].mxu0
    %v3818 = vadd.f32 %v3697, %v3817
    %v3819 = vpop.f32.mrb[0].mxu0
    %v3820 = vpop.f32.mrb[0].mxu0
    %v3821 = vadd.f32 %v3697, %v3820
    %v3822 = vpop.f32.mrb[0].mxu0
    %3823 = vmatprep.mubr.bf16.mxu0 0
    %3824 = vmatmul.mubr.bf16.gmra.mrb[0].mxu0 %v3733
    %v3825 = vpop.f32.mrb[0].mxu0
    %v3826 = vadd.f32 %v3697, %v3825
    %v3827 = vpop.f32.mrb[0].mxu0
    %v3828 = vpop.f32.mrb[0].mxu0
    %v3829 = vadd.f32 %v3697, %v3828
    %v3830 = vpop.f32.mrb[0].mxu0
    %3831 = vdwg.mxu0
    %v3832 = vpack.c.bf16 %v3773, %v3770
    %v3833 = vpack.c.bf16 %v3781, %v3778
    %v3834 = vpack.c.bf16 %v3789, %v3786
    %v3835 = vpack.c.bf16 %v3797, %v3794
    %v3836 = vpack.c.bf16 %v3805, %v3802
    %v3837 = vpack.c.bf16 %v3813, %v3810
    %v3838 = vpack.c.bf16 %v3821, %v3818
    %v3839 = vpack.c.bf16 %v3829, %v3826
    %3844 = vrot.lane.b32.xlu0 %v3832, 96
    %v3845 = vpop.permute.xlu0 %3844
    %3846 = vrot.lane.b32.xlu0 %v3833, 96
    %v3847 = vpop.permute.xlu0 %3846
    %3848 = vrot.lane.b32.xlu0 %v3834, 96
    %v3849 = vpop.permute.xlu0 %3848
    %3850 = vrot.lane.b32.xlu0 %v3835, 96
    %v3851 = vpop.permute.xlu0 %3850
    %v3853 = vsel %vm350, %v3832, 0
    %v3856 = vsel %vm350, %v3833, 0
    %v3859 = vsel %vm350, %v3834, 0
    %v3862 = vsel %vm350, %v3835, 0
    %v3865 = vsel %vm350, %v3845, 0
    %v3868 = vsel %vm350, %v3847, 0
    %v3871 = vsel %vm350, %v3849, 0
    %v3874 = vsel %vm350, %v3851, 0
    %3876 = vmatprep.subr.bf16.mxu0 0
    %3877 = vmatpush1.bf16.xpose.msra.mxu0 %v3865
    %3878 = vmatprep.subr.bf16.mxu0 0
    %3879 = vmatpush1.bf16.xpose.msra.mxu0 %v3868
    %3880 = vmatprep.subr.bf16.mxu0 0
    %3881 = vmatpush1.bf16.xpose.msra.mxu0 %v3871
    %3882 = vmatprep.subr.bf16.mxu0 0
    %3883 = vmatpush1.bf16.xpose.msra.mxu0 %v3874
    %3884 = vmatprep.subr.bf16.mxu0 0
    %3885 = vmatpush1.bf16.xpose.msra.mxu0 0
    %3886 = vmatprep.subr.bf16.mxu0 0
    %3887 = vmatpush1.bf16.xpose.msra.mxu0 0
    %3888 = vmatprep.subr.bf16.mxu0 0
    %3889 = vmatpush1.bf16.xpose.msra.mxu0 0
    %3890 = vmatprep.subr.bf16.mxu0 0
    %3891 = vmatpush1.bf16.xpose.msra.mxu0 0
    %3892 = vmatprep.subr.bf16.mxu0 0
    %3893 = vmatpush1.bf16.xpose.msra.mxu0 0
    %3894 = vmatprep.subr.bf16.mxu0 0
    %3895 = vmatpush1.bf16.xpose.msra.mxu0 0
    %3896 = vmatprep.subr.bf16.mxu0 0
    %3897 = vmatpush1.bf16.xpose.msra.mxu0 0
    %3898 = vmatprep.subr.bf16.mxu0 0
    %3899 = vmatpush1.bf16.xpose.msra.mxu0 0
    %3900 = vmatprep.subr.bf16.mxu0 0
    %3901 = vmatpush1.bf16.xpose.msra.mxu0 0
    %3902 = vmatprep.subr.bf16.mxu0 0
    %3903 = vmatpush1.bf16.xpose.msra.mxu0 0
    %3904 = vmatprep.subr.bf16.mxu0 0
    %3905 = vmatpush1.bf16.xpose.msra.mxu0 0
    %3906 = vmatprep.subr.bf16.mxu0 0
    %3907 = vmatpush1.bf16.xpose.msra.mxu0 0
    %3908 = vmatprep.mubr.bf16.mxu0 0
    %3909 = vmatmul.mubr.bf16.gmra.mrb[0].mxu0 %v3853
    %v3910 = vpop.f32.mrb[0].mxu0
    %v3911 = vadd.f32 0.0, %v3910
    %v3912 = vpop.f32.mrb[0].mxu0
    %v3913 = vpop.f32.mrb[0].mxu0
    %v3914 = vadd.f32 0.0, %v3913
    %v3915 = vpop.f32.mrb[0].mxu0
    %3916 = vmatprep.mubr.bf16.mxu0 0
    %3917 = vmatmul.mubr.bf16.gmra.mrb[0].mxu0 %v3856
    %v3918 = vpop.f32.mrb[0].mxu0
    %v3919 = vadd.f32 0.0, %v3918
    %v3920 = vpop.f32.mrb[0].mxu0
    %v3921 = vpop.f32.mrb[0].mxu0
    %v3922 = vadd.f32 0.0, %v3921
    %v3923 = vpop.f32.mrb[0].mxu0
    %3924 = vmatprep.mubr.bf16.mxu0 0
    %3925 = vmatmul.mubr.bf16.gmra.mrb[0].mxu0 %v3859
    %v3926 = vpop.f32.mrb[0].mxu0
    %v3927 = vadd.f32 0.0, %v3926
    %v3928 = vpop.f32.mrb[0].mxu0
    %v3929 = vpop.f32.mrb[0].mxu0
    %v3930 = vadd.f32 0.0, %v3929
    %v3931 = vpop.f32.mrb[0].mxu0
    %3932 = vmatprep.mubr.bf16.mxu0 0
    %3933 = vmatmul.mubr.bf16.gmra.mrb[0].mxu0 %v3862
    %v3934 = vpop.f32.mrb[0].mxu0
    %v3935 = vadd.f32 0.0, %v3934
    %v3936 = vpop.f32.mrb[0].mxu0
    %v3937 = vpop.f32.mrb[0].mxu0
    %v3938 = vadd.f32 0.0, %v3937
    %v3939 = vpop.f32.mrb[0].mxu0
    %3940 = vdwg.mxu0
    %3945 = vrot.lane.b32.xlu0 %v3836, 96
    %v3946 = vpop.permute.xlu0 %3945
    %3947 = vrot.lane.b32.xlu0 %v3837, 96
    %v3948 = vpop.permute.xlu0 %3947
    %3949 = vrot.lane.b32.xlu0 %v3838, 96
    %v3950 = vpop.permute.xlu0 %3949
    %3951 = vrot.lane.b32.xlu0 %v3839, 96
    %v3952 = vpop.permute.xlu0 %3951
    %v3954 = vsel %vm350, %v3836, 0
    %v3957 = vsel %vm350, %v3837, 0
    %v3960 = vsel %vm350, %v3838, 0
    %v3963 = vsel %vm350, %v3839, 0
    %v3966 = vsel %vm350, %v3946, 0
    %v3969 = vsel %vm350, %v3948, 0
    %v3972 = vsel %vm350, %v3950, 0
    %v3975 = vsel %vm350, %v3952, 0
    %3977 = vmatprep.subr.bf16.mxu0 0
    %3978 = vmatpush1.bf16.xpose.msra.mxu0 %v3966
    %3979 = vmatprep.subr.bf16.mxu0 0
    %3980 = vmatpush1.bf16.xpose.msra.mxu0 %v3969
    %3981 = vmatprep.subr.bf16.mxu0 0
    %3982 = vmatpush1.bf16.xpose.msra.mxu0 %v3972
    %3983 = vmatprep.subr.bf16.mxu0 0
    %3984 = vmatpush1.bf16.xpose.msra.mxu0 %v3975
    %3985 = vmatprep.subr.bf16.mxu0 0
    %3986 = vmatpush1.bf16.xpose.msra.mxu0 0
    %3987 = vmatprep.subr.bf16.mxu0 0
    %3988 = vmatpush1.bf16.xpose.msra.mxu0 0
    %3989 = vmatprep.subr.bf16.mxu0 0
    %3990 = vmatpush1.bf16.xpose.msra.mxu0 0
    %3991 = vmatprep.subr.bf16.mxu0 0
    %3992 = vmatpush1.bf16.xpose.msra.mxu0 0
    %3993 = vmatprep.subr.bf16.mxu0 0
    %3994 = vmatpush1.bf16.xpose.msra.mxu0 0
    %3995 = vmatprep.subr.bf16.mxu0 0
    %3996 = vmatpush1.bf16.xpose.msra.mxu0 0
    %3997 = vmatprep.subr.bf16.mxu0 0
    %3998 = vmatpush1.bf16.xpose.msra.mxu0 0
    %3999 = vmatprep.subr.bf16.mxu0 0
    %4000 = vmatpush1.bf16.xpose.msra.mxu0 0
    %4001 = vmatprep.subr.bf16.mxu0 0
    %4002 = vmatpush1.bf16.xpose.msra.mxu0 0
    %4003 = vmatprep.subr.bf16.mxu0 0
    %4004 = vmatpush1.bf16.xpose.msra.mxu0 0
    %4005 = vmatprep.subr.bf16.mxu0 0
    %4006 = vmatpush1.bf16.xpose.msra.mxu0 0
    %4007 = vmatprep.subr.bf16.mxu0 0
    %4008 = vmatpush1.bf16.xpose.msra.mxu0 0
    %4009 = vmatprep.mubr.bf16.mxu0 0
    %4010 = vmatmul.mubr.bf16.gmra.mrb[0].mxu0 %v3954
    %v4011 = vpop.f32.mrb[0].mxu0
    %v4012 = vadd.f32 0.0, %v4011
    %v4013 = vpop.f32.mrb[0].mxu0
    %v4014 = vpop.f32.mrb[0].mxu0
    %v4015 = vadd.f32 0.0, %v4014
    %v4016 = vpop.f32.mrb[0].mxu0
    %4017 = vmatprep.mubr.bf16.mxu0 0
    %4018 = vmatmul.mubr.bf16.gmra.mrb[0].mxu0 %v3957
    %v4019 = vpop.f32.mrb[0].mxu0
    %v4020 = vadd.f32 0.0, %v4019
    %v4021 = vpop.f32.mrb[0].mxu0
    %v4022 = vpop.f32.mrb[0].mxu0
    %v4023 = vadd.f32 0.0, %v4022
    %v4024 = vpop.f32.mrb[0].mxu0
    %4025 = vmatprep.mubr.bf16.mxu0 0
    %4026 = vmatmul.mubr.bf16.gmra.mrb[0].mxu0 %v3960
    %v4027 = vpop.f32.mrb[0].mxu0
    %v4028 = vadd.f32 0.0, %v4027
    %v4029 = vpop.f32.mrb[0].mxu0
    %v4030 = vpop.f32.mrb[0].mxu0
    %v4031 = vadd.f32 0.0, %v4030
    %v4032 = vpop.f32.mrb[0].mxu0
    %4033 = vmatprep.mubr.bf16.mxu0 0
    %4034 = vmatmul.mubr.bf16.gmra.mrb[0].mxu0 %v3963
    %v4035 = vpop.f32.mrb[0].mxu0
    %v4036 = vadd.f32 0.0, %v4035
    %v4037 = vpop.f32.mrb[0].mxu0
    %v4038 = vpop.f32.mrb[0].mxu0
    %v4039 = vadd.f32 0.0, %v4038
    %v4040 = vpop.f32.mrb[0].mxu0
    %4041 = vdwg.mxu0
    %v4042 = vmul.f32 %v3911, 0.17677669
    %v4043 = vmul.f32 %v3914, 0.17677669
    %v4044 = vmul.f32 %v3919, 0.17677669
    %v4045 = vmul.f32 %v3922, 0.17677669
    %v4046 = vmul.f32 %v3927, 0.17677669
    %v4047 = vmul.f32 %v3930, 0.17677669
    %v4048 = vmul.f32 %v3935, 0.17677669
    %v4049 = vmul.f32 %v3938, 0.17677669
    %v4050 = vmul.f32 %v4012, 0.17677669
    %v4051 = vmul.f32 %v4015, 0.17677669
    %v4052 = vmul.f32 %v4020, 0.17677669
    %v4053 = vmul.f32 %v4023, 0.17677669
    %v4054 = vmul.f32 %v4028, 0.17677669
    %v4055 = vmul.f32 %v4031, 0.17677669
    %v4056 = vmul.f32 %v4036, 0.17677669
    %v4057 = vmul.f32 %v4039, 0.17677669
    %v4058 = vsel %vm91, %v4042, -inf
    %v4059 = vsel %vm91, %v4043, -inf
    %v4060 = vsel %vm91, %v4044, -inf
    %v4061 = vmax.f32 %v4058, %v4060
    %v4062 = vsel %vm91, %v4045, -inf
    %v4063 = vmax.f32 %v4059, %v4062
    %v4064 = vsel %vm91, %v4046, -inf
    %v4065 = vmax.f32 %v4061, %v4064
    %v4066 = vsel %vm91, %v4047, -inf
    %v4067 = vmax.f32 %v4063, %v4066
    %v4068 = vsel %vm91, %v4048, -inf
    %v4069 = vmax.f32 %v4065, %v4068
    %v4070 = vsel %vm91, %v4049, -inf
    %v4071 = vmax.f32 %v4067, %v4070
    %v4072 = vmax.f32 %v4069, %v4071
    %v4073 = vrot.slane %v4072, 4
    %v4074 = vmax.f32 %v4072, %v4073
    %v4075 = vrot.slane %v4074, 2
    %v4076 = vmax.f32 %v4074, %v4075
    %v4077 = vrot.slane %v4076, 1
    %v4078 = vmax.f32 %v4076, %v4077
    %v4079 = vsel %vm91, %v4050, -inf
    %v4080 = vsel %vm91, %v4051, -inf
    %v4081 = vsel %vm91, %v4052, -inf
    %v4082 = vmax.f32 %v4079, %v4081
    %v4083 = vsel %vm91, %v4053, -inf
    %v4084 = vmax.f32 %v4080, %v4083
    %v4085 = vsel %vm91, %v4054, -inf
    %v4086 = vmax.f32 %v4082, %v4085
    %v4087 = vsel %vm91, %v4055, -inf
    %v4088 = vmax.f32 %v4084, %v4087
    %v4089 = vsel %vm91, %v4056, -inf
    %v4090 = vmax.f32 %v4086, %v4089
    %v4091 = vsel %vm91, %v4057, -inf
    %v4092 = vmax.f32 %v4088, %v4091
    %v4093 = vmax.f32 %v4090, %v4092
    %v4094 = vrot.slane %v4093, 4
    %v4095 = vmax.f32 %v4093, %v4094
    %v4096 = vrot.slane %v4095, 2
    %v4097 = vmax.f32 %v4095, %v4096
    %v4098 = vrot.slane %v4097, 1
    %v4099 = vmax.f32 %v4097, %v4098
    %v4100 = vsub.f32 %v4042, %v4078
    %v4101 = vsub.f32 %v4043, %v4078
    %v4102 = vsub.f32 %v4044, %v4078
    %v4103 = vsub.f32 %v4045, %v4078
    %v4104 = vsub.f32 %v4046, %v4078
    %v4105 = vsub.f32 %v4047, %v4078
    %v4106 = vsub.f32 %v4048, %v4078
    %v4107 = vsub.f32 %v4049, %v4078
    %v4108 = vsub.f32 %v4050, %v4099
    %v4109 = vsub.f32 %v4051, %v4099
    %v4110 = vsub.f32 %v4052, %v4099
    %v4111 = vsub.f32 %v4053, %v4099
    %v4112 = vsub.f32 %v4054, %v4099
    %v4113 = vsub.f32 %v4055, %v4099
    %v4114 = vsub.f32 %v4056, %v4099
    %v4115 = vsub.f32 %v4057, %v4099
    %v4116 = vmul.f32 %v4100, 1.442695
    %v4117 = vpow.pop %v4116
    %v4118 = vmul.f32 %v4101, 1.442695
    %v4119 = vpow.pop %v4118
    %v4120 = vmul.f32 %v4102, 1.442695
    %v4121 = vpow.pop %v4120
    %v4122 = vmul.f32 %v4103, 1.442695
    %v4123 = vpow.pop %v4122
    %v4124 = vmul.f32 %v4104, 1.442695
    %v4125 = vpow.pop %v4124
    %v4126 = vmul.f32 %v4105, 1.442695
    %v4127 = vpow.pop %v4126
    %v4128 = vmul.f32 %v4106, 1.442695
    %v4129 = vpow.pop %v4128
    %v4130 = vmul.f32 %v4107, 1.442695
    %v4131 = vpow.pop %v4130
    %v4132 = vmul.f32 %v4108, 1.442695
    %v4133 = vpow.pop %v4132
    %v4134 = vmul.f32 %v4109, 1.442695
    %v4135 = vpow.pop %v4134
    %v4136 = vmul.f32 %v4110, 1.442695
    %v4137 = vpow.pop %v4136
    %v4138 = vmul.f32 %v4111, 1.442695
    %v4139 = vpow.pop %v4138
    %v4140 = vmul.f32 %v4112, 1.442695
    %v4141 = vpow.pop %v4140
    %v4142 = vmul.f32 %v4113, 1.442695
    %v4143 = vpow.pop %v4142
    %v4144 = vmul.f32 %v4114, 1.442695
    %v4145 = vpow.pop %v4144
    %v4146 = vmul.f32 %v4115, 1.442695
    %v4147 = vpow.pop %v4146
    %v4148 = vsel %vm91, %v4117, 0.0
    %v4149 = vsel %vm91, %v4119, 0.0
    %v4150 = vadd.f32 %v4148, %v4149
    %v4151 = vsel %vm91, %v4121, 0.0
    %v4152 = vadd.f32 %v4150, %v4151
    %v4153 = vsel %vm91, %v4123, 0.0
    %v4154 = vadd.f32 %v4152, %v4153
    %v4155 = vsel %vm91, %v4125, 0.0
    %v4156 = vadd.f32 %v4154, %v4155
    %v4157 = vsel %vm91, %v4127, 0.0
    %v4158 = vadd.f32 %v4156, %v4157
    %v4159 = vsel %vm91, %v4129, 0.0
    %v4160 = vadd.f32 %v4158, %v4159
    %v4161 = vsel %vm91, %v4131, 0.0
    %v4162 = vadd.f32 %v4160, %v4161
    %v4163 = vrot.slane %v4162, 4
    %v4164 = vadd.f32 %v4162, %v4163
    %v4165 = vrot.slane %v4164, 2
    %v4166 = vadd.f32 %v4164, %v4165
    %v4167 = vrot.slane %v4166, 1
    %v4168 = vadd.f32 %v4166, %v4167
    %v4169 = vsel %vm91, %v4133, 0.0
    %v4170 = vsel %vm91, %v4135, 0.0
    %v4171 = vadd.f32 %v4169, %v4170
    %v4172 = vsel %vm91, %v4137, 0.0
    %v4173 = vadd.f32 %v4171, %v4172
    %v4174 = vsel %vm91, %v4139, 0.0
    %v4175 = vadd.f32 %v4173, %v4174
    %v4176 = vsel %vm91, %v4141, 0.0
    %v4177 = vadd.f32 %v4175, %v4176
    %v4178 = vsel %vm91, %v4143, 0.0
    %v4179 = vadd.f32 %v4177, %v4178
    %v4180 = vsel %vm91, %v4145, 0.0
    %v4181 = vadd.f32 %v4179, %v4180
    %v4182 = vsel %vm91, %v4147, 0.0
    %v4183 = vadd.f32 %v4181, %v4182
    %v4184 = vrot.slane %v4183, 4
    %v4185 = vadd.f32 %v4183, %v4184
    %v4186 = vrot.slane %v4185, 2
    %v4187 = vadd.f32 %v4185, %v4186
    %v4188 = vrot.slane %v4187, 1
    %v4189 = vadd.f32 %v4187, %v4188
    %v4190 = vrcp.pop %v4168
    %v4191 = vrcp.pop %v4189
    %v4192 = vmul.f32 %v4117, %v4190
    %v4193 = vmul.f32 %v4119, %v4190
    %v4194 = vmul.f32 %v4121, %v4190
    %v4195 = vmul.f32 %v4123, %v4190
    %v4196 = vmul.f32 %v4125, %v4190
    %v4197 = vmul.f32 %v4127, %v4190
    %v4198 = vmul.f32 %v4129, %v4190
    %v4199 = vmul.f32 %v4131, %v4190
    %v4200 = vmul.f32 %v4133, %v4191
    %v4201 = vmul.f32 %v4135, %v4191
    %v4202 = vmul.f32 %v4137, %v4191
    %v4203 = vmul.f32 %v4139, %v4191
    %v4204 = vmul.f32 %v4141, %v4191
    %v4205 = vmul.f32 %v4143, %v4191
    %v4206 = vmul.f32 %v4145, %v4191
    %v4207 = vmul.f32 %v4147, %v4191
    %v4208 = vpack.c.bf16 %v4193, %v4192
    %v4209 = vpack.c.bf16 %v4195, %v4194
    %v4210 = vpack.c.bf16 %v4197, %v4196
    %v4211 = vpack.c.bf16 %v4199, %v4198
    %v4212 = vpack.c.bf16 %v4201, %v4200
    %v4213 = vpack.c.bf16 %v4203, %v4202
    %v4214 = vpack.c.bf16 %v4205, %v4204
    %v4215 = vpack.c.bf16 %v4207, %v4206
    %4216 = vrot.lane.b32.xlu0 %v3832, 64
    %v4217 = vpop.permute.xlu0 %4216
    %4218 = vrot.lane.b32.xlu0 %v3833, 64
    %v4219 = vpop.permute.xlu0 %4218
    %4220 = vrot.lane.b32.xlu0 %v3834, 64
    %v4221 = vpop.permute.xlu0 %4220
    %4222 = vrot.lane.b32.xlu0 %v3835, 64
    %v4223 = vpop.permute.xlu0 %4222
    %v4229 = vsel %vm91, %v4208, 0
    %v4232 = vsel %vm91, %v4209, 0
    %v4235 = vsel %vm91, %v4210, 0
    %v4238 = vsel %vm91, %v4211, 0
    %4240 = vmatprep.subr.bf16.mxu0 0
    %4241 = vmatpush1.bf16.msra.mxu0 %v4217
    %4242 = vmatprep.subr.bf16.mxu0 0
    %4243 = vmatpush1.bf16.msra.mxu0 %v4219
    %4244 = vmatprep.subr.bf16.mxu0 0
    %4245 = vmatpush1.bf16.msra.mxu0 %v4221
    %4246 = vmatprep.subr.bf16.mxu0 0
    %4247 = vmatpush1.bf16.msra.mxu0 %v4223
    %4248 = vmatprep.subr.bf16.mxu0 0
    %4249 = vmatpush1.bf16.msra.mxu0 0
    %4250 = vmatprep.subr.bf16.mxu0 0
    %4251 = vmatpush1.bf16.msra.mxu0 0
    %4252 = vmatprep.subr.bf16.mxu0 0
    %4253 = vmatpush1.bf16.msra.mxu0 0
    %4254 = vmatprep.subr.bf16.mxu0 0
    %4255 = vmatpush1.bf16.msra.mxu0 0
    %4256 = vmatprep.subr.bf16.mxu0 0
    %4257 = vmatpush1.bf16.msra.mxu0 0
    %4258 = vmatprep.subr.bf16.mxu0 0
    %4259 = vmatpush1.bf16.msra.mxu0 0
    %4260 = vmatprep.subr.bf16.mxu0 0
    %4261 = vmatpush1.bf16.msra.mxu0 0
    %4262 = vmatprep.subr.bf16.mxu0 0
    %4263 = vmatpush1.bf16.msra.mxu0 0
    %4264 = vmatprep.subr.bf16.mxu0 0
    %4265 = vmatpush1.bf16.msra.mxu0 0
    %4266 = vmatprep.subr.bf16.mxu0 0
    %4267 = vmatpush1.bf16.msra.mxu0 0
    %4268 = vmatprep.subr.bf16.mxu0 0
    %4269 = vmatpush1.bf16.msra.mxu0 0
    %4270 = vmatprep.subr.bf16.mxu0 0
    %4271 = vmatpush1.bf16.msra.mxu0 0
    %4272 = vmatprep.mubr.bf16.mxu0 0
    %4273 = vmatmul.mubr.bf16.gmra.mrb[0].mxu0 %v4229
    %v4274 = vpop.f32.mrb[0].mxu0
    %v4275 = vadd.f32 0.0, %v4274
    %v4276 = vpop.f32.mrb[0].mxu0
    %v4277 = vpop.f32.mrb[0].mxu0
    %v4278 = vadd.f32 0.0, %v4277
    %v4279 = vpop.f32.mrb[0].mxu0
    %4280 = vmatprep.mubr.bf16.mxu0 0
    %4281 = vmatmul.mubr.bf16.gmra.mrb[0].mxu0 %v4232
    %v4282 = vpop.f32.mrb[0].mxu0
    %v4283 = vadd.f32 0.0, %v4282
    %v4284 = vpop.f32.mrb[0].mxu0
    %v4285 = vpop.f32.mrb[0].mxu0
    %v4286 = vadd.f32 0.0, %v4285
    %v4287 = vpop.f32.mrb[0].mxu0
    %4288 = vmatprep.mubr.bf16.mxu0 0
    %4289 = vmatmul.mubr.bf16.gmra.mrb[0].mxu0 %v4235
    %v4290 = vpop.f32.mrb[0].mxu0
    %v4291 = vadd.f32 0.0, %v4290
    %v4292 = vpop.f32.mrb[0].mxu0
    %v4293 = vpop.f32.mrb[0].mxu0
    %v4294 = vadd.f32 0.0, %v4293
    %v4295 = vpop.f32.mrb[0].mxu0
    %4296 = vmatprep.mubr.bf16.mxu0 0
    %4297 = vmatmul.mubr.bf16.gmra.mrb[0].mxu0 %v4238
    %v4298 = vpop.f32.mrb[0].mxu0
    %v4299 = vadd.f32 0.0, %v4298
    %v4300 = vpop.f32.mrb[0].mxu0
    %v4301 = vpop.f32.mrb[0].mxu0
    %v4302 = vadd.f32 0.0, %v4301
    %v4303 = vpop.f32.mrb[0].mxu0
    %4304 = vdwg.mxu0
    %4305 = vrot.lane.b32.xlu0 %v3836, 64
    %v4306 = vpop.permute.xlu0 %4305
    %4307 = vrot.lane.b32.xlu0 %v3837, 64
    %v4308 = vpop.permute.xlu0 %4307
    %4309 = vrot.lane.b32.xlu0 %v3838, 64
    %v4310 = vpop.permute.xlu0 %4309
    %4311 = vrot.lane.b32.xlu0 %v3839, 64
    %v4312 = vpop.permute.xlu0 %4311
    %v4318 = vsel %vm91, %v4212, 0
    %v4321 = vsel %vm91, %v4213, 0
    %v4324 = vsel %vm91, %v4214, 0
    %v4327 = vsel %vm91, %v4215, 0
    %4329 = vmatprep.subr.bf16.mxu0 0
    %4330 = vmatpush1.bf16.msra.mxu0 %v4306
    %4331 = vmatprep.subr.bf16.mxu0 0
    %4332 = vmatpush1.bf16.msra.mxu0 %v4308
    %4333 = vmatprep.subr.bf16.mxu0 0
    %4334 = vmatpush1.bf16.msra.mxu0 %v4310
    %4335 = vmatprep.subr.bf16.mxu0 0
    %4336 = vmatpush1.bf16.msra.mxu0 %v4312
    %4337 = vmatprep.subr.bf16.mxu0 0
    %4338 = vmatpush1.bf16.msra.mxu0 0
    %4339 = vmatprep.subr.bf16.mxu0 0
    %4340 = vmatpush1.bf16.msra.mxu0 0
    %4341 = vmatprep.subr.bf16.mxu0 0
    %4342 = vmatpush1.bf16.msra.mxu0 0
    %4343 = vmatprep.subr.bf16.mxu0 0
    %4344 = vmatpush1.bf16.msra.mxu0 0
    %4345 = vmatprep.subr.bf16.mxu0 0
    %4346 = vmatpush1.bf16.msra.mxu0 0
    %4347 = vmatprep.subr.bf16.mxu0 0
    %4348 = vmatpush1.bf16.msra.mxu0 0
    %4349 = vmatprep.subr.bf16.mxu0 0
    %4350 = vmatpush1.bf16.msra.mxu0 0
    %4351 = vmatprep.subr.bf16.mxu0 0
    %4352 = vmatpush1.bf16.msra.mxu0 0
    %4353 = vmatprep.subr.bf16.mxu0 0
    %4354 = vmatpush1.bf16.msra.mxu0 0
    %4355 = vmatprep.subr.bf16.mxu0 0
    %4356 = vmatpush1.bf16.msra.mxu0 0
    %4357 = vmatprep.subr.bf16.mxu0 0
    %4358 = vmatpush1.bf16.msra.mxu0 0
    %4359 = vmatprep.subr.bf16.mxu0 0
    %4360 = vmatpush1.bf16.msra.mxu0 0
    %4361 = vmatprep.mubr.bf16.mxu0 0
    %4362 = vmatmul.mubr.bf16.gmra.mrb[0].mxu0 %v4318
    %v4363 = vpop.f32.mrb[0].mxu0
    %v4364 = vadd.f32 0.0, %v4363
    %v4365 = vpop.f32.mrb[0].mxu0
    %v4366 = vpop.f32.mrb[0].mxu0
    %v4367 = vadd.f32 0.0, %v4366
    %v4368 = vpop.f32.mrb[0].mxu0
    %4369 = vmatprep.mubr.bf16.mxu0 0
    %4370 = vmatmul.mubr.bf16.gmra.mrb[0].mxu0 %v4321
    %v4371 = vpop.f32.mrb[0].mxu0
    %v4372 = vadd.f32 0.0, %v4371
    %v4373 = vpop.f32.mrb[0].mxu0
    %v4374 = vpop.f32.mrb[0].mxu0
    %v4375 = vadd.f32 0.0, %v4374
    %v4376 = vpop.f32.mrb[0].mxu0
    %4377 = vmatprep.mubr.bf16.mxu0 0
    %4378 = vmatmul.mubr.bf16.gmra.mrb[0].mxu0 %v4324
    %v4379 = vpop.f32.mrb[0].mxu0
    %v4380 = vadd.f32 0.0, %v4379
    %v4381 = vpop.f32.mrb[0].mxu0
    %v4382 = vpop.f32.mrb[0].mxu0
    %v4383 = vadd.f32 0.0, %v4382
    %v4384 = vpop.f32.mrb[0].mxu0
    %4385 = vmatprep.mubr.bf16.mxu0 0
    %4386 = vmatmul.mubr.bf16.gmra.mrb[0].mxu0 %v4327
    %v4387 = vpop.f32.mrb[0].mxu0
    %v4388 = vadd.f32 0.0, %v4387
    %v4389 = vpop.f32.mrb[0].mxu0
    %v4390 = vpop.f32.mrb[0].mxu0
    %v4391 = vadd.f32 0.0, %v4390
    %v4392 = vpop.f32.mrb[0].mxu0
    %4393 = vdwg.mxu0
    %v4394 = vpack.c.bf16 %v4278, %v4275
    %v4395 = vpack.c.bf16 %v4286, %v4283
    %v4396 = vpack.c.bf16 %v4294, %v4291
    %v4397 = vpack.c.bf16 %v4302, %v4299
    %v4398 = vpack.c.bf16 %v4367, %v4364
    %v4399 = vpack.c.bf16 %v4375, %v4372
    %v4400 = vpack.c.bf16 %v4383, %v4380
    %v4401 = vpack.c.bf16 %v4391, %v4388
    %v4402 = vld [vmem:[%s16] sm:$0xf]
    %v4403 = vld [vmem:[%s16 + $0x4] sm:$0xf]
    %v4404 = vld [vmem:[%s16 + $0x8] sm:$0xf]
    %v4405 = vld [vmem:[%s16 + $0xc] sm:$0xf]
    %v4406 = vld [vmem:[%s17] sm:$0x1]
    %v4408 = vlaneseq
    %v4409 = vshrl.u32 %v4408, 7
    %v4410 = vsub.s32 0, %v4409
    %v4411 = vrot.slane %v4406, %v4410
    %v4417 = vunpack.c.l.b16 %v4402
    %v4418 = vunpack.c.l.b16 %v4403
    %v4419 = vunpack.c.l.b16 %v4404
    %v4420 = vunpack.c.l.b16 %v4405
    %v4421 = vpack.c.b16 %v4418, %v4417
    %v4422 = vpack.c.b16 %v4420, %v4419
    %v4426 = vsel %vm350, %v4394, 0
    %v4429 = vsel %vm350, %v4395, 0
    %v4432 = vsel %vm350, %v4396, 0
    %v4435 = vsel %vm350, %v4397, 0
    %v4438 = vsel %vm350, %v4398, 0
    %v4441 = vsel %vm350, %v4399, 0
    %v4444 = vsel %vm350, %v4400, 0
    %v4447 = vsel %vm350, %v4401, 0
    %4449 = vmatprep.subr.bf16.mxu0 0
    %4450 = vmatpush1.bf16.msra.mxu0 %v4421
    %4451 = vmatprep.subr.bf16.mxu0 0
    %4452 = vmatpush1.bf16.msra.mxu0 %v4422
    %4453 = vmatprep.subr.bf16.mxu0 0
    %4454 = vmatpush1.bf16.msra.mxu0 0
    %4455 = vmatprep.subr.bf16.mxu0 0
    %4456 = vmatpush1.bf16.msra.mxu0 0
    %4457 = vmatprep.subr.bf16.mxu0 0
    %4458 = vmatpush1.bf16.msra.mxu0 0
    %4459 = vmatprep.subr.bf16.mxu0 0
    %4460 = vmatpush1.bf16.msra.mxu0 0
    %4461 = vmatprep.subr.bf16.mxu0 0
    %4462 = vmatpush1.bf16.msra.mxu0 0
    %4463 = vmatprep.subr.bf16.mxu0 0
    %4464 = vmatpush1.bf16.msra.mxu0 0
    %4465 = vmatprep.subr.bf16.mxu0 0
    %4466 = vmatpush1.bf16.msra.mxu0 0
    %4467 = vmatprep.subr.bf16.mxu0 0
    %4468 = vmatpush1.bf16.msra.mxu0 0
    %4469 = vmatprep.subr.bf16.mxu0 0
    %4470 = vmatpush1.bf16.msra.mxu0 0
    %4471 = vmatprep.subr.bf16.mxu0 0
    %4472 = vmatpush1.bf16.msra.mxu0 0
    %4473 = vmatprep.subr.bf16.mxu0 0
    %4474 = vmatpush1.bf16.msra.mxu0 0
    %4475 = vmatprep.subr.bf16.mxu0 0
    %4476 = vmatpush1.bf16.msra.mxu0 0
    %4477 = vmatprep.subr.bf16.mxu0 0
    %4478 = vmatpush1.bf16.msra.mxu0 0
    %4479 = vmatprep.subr.bf16.mxu0 0
    %4480 = vmatpush1.bf16.msra.mxu0 0
    %4481 = vmatprep.mubr.bf16.mxu0 0
    %4482 = vmatmul.mubr.bf16.gmra.mrb[0].mxu0 %v4426
    %v4483 = vpop.f32.mrb[0].mxu0
    %v4484 = vadd.f32 %v4411, %v4483
    %v4485 = vpop.f32.mrb[0].mxu0
    %v4486 = vpop.f32.mrb[0].mxu0
    %v4487 = vadd.f32 %v4411, %v4486
    %v4488 = vpop.f32.mrb[0].mxu0
    %4489 = vmatprep.mubr.bf16.mxu0 0
    %4490 = vmatmul.mubr.bf16.gmra.mrb[0].mxu0 %v4429
    %v4491 = vpop.f32.mrb[0].mxu0
    %v4492 = vadd.f32 %v4411, %v4491
    %v4493 = vpop.f32.mrb[0].mxu0
    %v4494 = vpop.f32.mrb[0].mxu0
    %v4495 = vadd.f32 %v4411, %v4494
    %v4496 = vpop.f32.mrb[0].mxu0
    %4497 = vmatprep.mubr.bf16.mxu0 0
    %4498 = vmatmul.mubr.bf16.gmra.mrb[0].mxu0 %v4432
    %v4499 = vpop.f32.mrb[0].mxu0
    %v4500 = vadd.f32 %v4411, %v4499
    %v4501 = vpop.f32.mrb[0].mxu0
    %v4502 = vpop.f32.mrb[0].mxu0
    %v4503 = vadd.f32 %v4411, %v4502
    %v4504 = vpop.f32.mrb[0].mxu0
    %4505 = vmatprep.mubr.bf16.mxu0 0
    %4506 = vmatmul.mubr.bf16.gmra.mrb[0].mxu0 %v4435
    %v4507 = vpop.f32.mrb[0].mxu0
    %v4508 = vadd.f32 %v4411, %v4507
    %v4509 = vpop.f32.mrb[0].mxu0
    %v4510 = vpop.f32.mrb[0].mxu0
    %v4511 = vadd.f32 %v4411, %v4510
    %v4512 = vpop.f32.mrb[0].mxu0
    %4513 = vmatprep.mubr.bf16.mxu0 0
    %4514 = vmatmul.mubr.bf16.gmra.mrb[0].mxu0 %v4438
    %v4515 = vpop.f32.mrb[0].mxu0
    %v4516 = vadd.f32 %v4411, %v4515
    %v4517 = vpop.f32.mrb[0].mxu0
    %v4518 = vpop.f32.mrb[0].mxu0
    %v4519 = vadd.f32 %v4411, %v4518
    %v4520 = vpop.f32.mrb[0].mxu0
    %4521 = vmatprep.mubr.bf16.mxu0 0
    %4522 = vmatmul.mubr.bf16.gmra.mrb[0].mxu0 %v4441
    %v4523 = vpop.f32.mrb[0].mxu0
    %v4524 = vadd.f32 %v4411, %v4523
    %v4525 = vpop.f32.mrb[0].mxu0
    %v4526 = vpop.f32.mrb[0].mxu0
    %v4527 = vadd.f32 %v4411, %v4526
    %v4528 = vpop.f32.mrb[0].mxu0
    %4529 = vmatprep.mubr.bf16.mxu0 0
    %4530 = vmatmul.mubr.bf16.gmra.mrb[0].mxu0 %v4444
    %v4531 = vpop.f32.mrb[0].mxu0
    %v4532 = vadd.f32 %v4411, %v4531
    %v4533 = vpop.f32.mrb[0].mxu0
    %v4534 = vpop.f32.mrb[0].mxu0
    %v4535 = vadd.f32 %v4411, %v4534
    %v4536 = vpop.f32.mrb[0].mxu0
    %4537 = vmatprep.mubr.bf16.mxu0 0
    %4538 = vmatmul.mubr.bf16.gmra.mrb[0].mxu0 %v4447
    %v4539 = vpop.f32.mrb[0].mxu0
    %v4540 = vadd.f32 %v4411, %v4539
    %v4541 = vpop.f32.mrb[0].mxu0
    %v4542 = vpop.f32.mrb[0].mxu0
    %v4543 = vadd.f32 %v4411, %v4542
    %v4544 = vpop.f32.mrb[0].mxu0
    %4545 = vdwg.mxu0
    %v4546 = vadd.f32 %v4484, %v3664
    %v4547 = vadd.f32 %v4487, %v3665
    %v4548 = vadd.f32 %v4492, %v3666
    %v4549 = vadd.f32 %v4495, %v3667
    %v4550 = vadd.f32 %v4500, %v3668
    %v4551 = vadd.f32 %v4503, %v3669
    %v4552 = vadd.f32 %v4508, %v3670
    %v4553 = vadd.f32 %v4511, %v3671
    %v4554 = vadd.f32 %v4516, %v3672
    %v4555 = vadd.f32 %v4519, %v3673
    %v4556 = vadd.f32 %v4524, %v3674
    %v4557 = vadd.f32 %v4527, %v3675
    %v4558 = vadd.f32 %v4532, %v3676
    %v4559 = vadd.f32 %v4535, %v3677
    %v4560 = vadd.f32 %v4540, %v3678
    %v4561 = vadd.f32 %v4543, %v3679
    %4562 = vst.msk [vmem:[#allocation4] sm:$0xff] %vm350, %v4546
    %4563 = vst.msk [vmem:[#allocation4 + $0x8] sm:$0xff] %vm350, %v4547
    %4564 = vst.msk [vmem:[#allocation4 + $0x10] sm:$0xff] %vm350, %v4548
    %4565 = vst.msk [vmem:[#allocation4 + $0x18] sm:$0xff] %vm350, %v4549
    %4566 = vst.msk [vmem:[#allocation4 + $0x20] sm:$0xff] %vm350, %v4550
    %4567 = vst.msk [vmem:[#allocation4 + $0x28] sm:$0xff] %vm350, %v4551
    %4568 = vst.msk [vmem:[#allocation4 + $0x30] sm:$0xff] %vm350, %v4552
    %4569 = vst.msk [vmem:[#allocation4 + $0x38] sm:$0xff] %vm350, %v4553
    %4570 = vst.msk [vmem:[#allocation4 + $0x40] sm:$0xff] %vm350, %v4554
    %4571 = vst.msk [vmem:[#allocation4 + $0x48] sm:$0xff] %vm350, %v4555
    %4572 = vst.msk [vmem:[#allocation4 + $0x50] sm:$0xff] %vm350, %v4556
    %4573 = vst.msk [vmem:[#allocation4 + $0x58] sm:$0xff] %vm350, %v4557
    %4574 = vst.msk [vmem:[#allocation4 + $0x60] sm:$0xff] %vm350, %v4558
    %4575 = vst.msk [vmem:[#allocation4 + $0x68] sm:$0xff] %vm350, %v4559
    %4576 = vst.msk [vmem:[#allocation4 + $0x70] sm:$0xff] %vm350, %v4560
    %4577 = vst.msk [vmem:[#allocation4 + $0x78] sm:$0xff] %vm350, %v4561
    // Predicated region
    $region74: #{upblock_pallas.1} parent=1 // pred_check
      _
    $region75: #{upblock_pallas.1} parent=1 // pred_check_branch
      %4579 = sbr.rel (0) target = $region77
    $region76: #{upblock_pallas.1} parent=1 // pred_region
      %s4581 = ssub.s32 2048, 2048
      %4582 = vsyncadd [#allocation5], %s4581
      %s4583 = sshll.u32 [#allocation4], 4
      %s4584 = int_to_ptr.vmem [resolvable:$true] %s4583
      %4589 = dma.vmem_to_hbm [thread:$0]  %s4584, 2048, %s18, [#allocation5], 128, 128, 8
    $region77: #{upblock_pallas.1} parent=1 // pred_fallthru
      _
    // Predicated region
    $region78: #{upblock_pallas.1} parent=1 // pred_check
      _
    $region79: #{upblock_pallas.1} parent=1 // pred_check_branch
      %4591 = sbr.rel (0) target = $region81
    $region80: #{upblock_pallas.1} parent=1 // pred_region
      %4592 = dma.done [#allocation5], 2048
    $region81: #{upblock_pallas.1} parent=1 // pred_fallthru
      _
    %4593 = vsyncpa [#allocation5], 1

</llo_original>
